<compile_context>
chip_gen: v5e
topology: v5e:2x2
jax: 0.10.0
libtpu: 0.0.40
codegen_flags: <defaults>
</compile_context>

<pallas_src>
import functools

import jax
import jax.numpy as jnp
from jax.experimental import pallas as pl
from jax.experimental.pallas import tpu as pltpu

LANES = 128  # TPU lane width; all packed lane dims are zero-padded to this.


# ----------------------------- Pallas kernels -------------------------------


def _make_step_kernel(apply_relu: bool, finalize: bool, num_classes: int):
    """One ARMA propagation step, tiled over (row panels, A-column panels)."""

    def kernel(a_ref, hin_ref, xr_ref, wt_ref, wr_ref, b_ref, *rest):
        if finalize:
            avg_ref, out_ref, acc_ref = rest
        else:
            out_ref, acc_ref = rest

        k = pl.program_id(1)

        @pl.when(k == 0)
        def _():
            acc_ref[...] = jnp.zeros_like(acc_ref)

        # Transform this column panel of Hin on the fly (tiny matmul on the MXU),
        # then accumulate the bf16 A @ Ht product in f32.
        ht = jnp.dot(hin_ref[...], wt_ref[...],
                     preferred_element_type=jnp.float32)
        acc_ref[...] += jnp.dot(a_ref[...], ht.astype(jnp.bfloat16),
                                preferred_element_type=jnp.float32)

        @pl.when(k == pl.num_programs(1) - 1)
        def _():
            root = jnp.dot(xr_ref[...], wr_ref[...],
                           preferred_element_type=jnp.float32) + b_ref[...]
            h = acc_ref[...] + root
            if apply_relu:
                h = jnp.maximum(h, 0.0)
            if finalize:
                # K-stack mean as one matmul vs the constant averaging matrix,
                # then lane-masked log_softmax (pad lanes excluded).
                z = jnp.dot(h, avg_ref[...], preferred_element_type=jnp.float32)
                lane = jax.lax.broadcasted_iota(jnp.int32, z.shape, 1)
                valid = lane < num_classes
                zm = jnp.where(valid, z, -jnp.inf)
                m = jnp.max(zm, axis=1, keepdims=True)
                e = jnp.exp(zm - m)                      # exp(-inf) = 0 on pad lanes
                lse = jnp.log(jnp.sum(e, axis=1, keepdims=True)) + m
                out_ref[...] = jnp.where(valid, z - lse, 0.0)
            else:
                out_ref[...] = h

    return kernel


def _step_cost(n, tm, f_hin, f_xr, finalize):
    n_row = n // tm
    flops = (2 * n * n * LANES                     # A @ Ht
             + n_row * 2 * n * f_hin * LANES       # Hin @ Wt (recomputed per row panel)
             + 2 * n * f_xr * LANES)               # Xroot @ Wr
    if finalize:
        flops += 2 * n * LANES * LANES
    transcendentals = n * LANES if finalize else 0
    bytes_accessed = (2 * n * n + 4 * n_row * n * f_hin + 4 * n * f_xr
                      + 4 * (f_hin + f_xr + 1) * LANES + 4 * n * LANES)
    return pl.CostEstimate(flops=flops, transcendentals=transcendentals,
                           bytes_accessed=bytes_accessed)


def arma_step(a_bf16, hin, xroot, wt, wr, b, *, apply_relu,
              avg=None, num_classes=0, tm=None, tk=None):
    """out = act(A @ (Hin @ Wt) + Xroot @ Wr + b), optionally fused mean+log_softmax."""
    n = a_bf16.shape[0]
    # 128-aligned panels work on every generation (v5e 4x128^2 MXU, v6e/v7x
    # 2x256^2); fall back to full extent for tiny graphs.
    tm = tm or (128 if n % 128 == 0 else n)
    tk = tk or (128 if n % 128 == 0 else n)
    assert n % tm == 0 and n % tk == 0
    f_hin = hin.shape[1]
    f_xr = xroot.shape[1]
    finalize = avg is not None

    in_specs = [
        pl.BlockSpec((tm, tk), lambda i, k: (i, k)),       # A_hat panel (bf16)
        pl.BlockSpec((tk, f_hin), lambda i, k: (k, 0)),    # Hin column panel
        pl.BlockSpec((tm, f_xr), lambda i, k: (i, 0)),     # layer-input row panel
        pl.BlockSpec(wt.shape, lambda i, k: (0, 0)),
        pl.BlockSpec(wr.shape, lambda i, k: (0, 0)),
        pl.BlockSpec(b.shape, lambda i, k: (0, 0)),
    ]
    args = [a_bf16, hin, xroot, wt, wr, b]
    if finalize:
        in_specs.append(pl.BlockSpec(avg.shape, lambda i, k: (0, 0)))
        args.append(avg)

    kernel = _make_step_kernel(apply_relu, finalize, num_classes)
    return pl.pallas_call(
        kernel,
        out_shape=jax.ShapeDtypeStruct((n, LANES), jnp.float32),
        grid=(n // tm, n // tk),
        in_specs=in_specs,
        out_specs=pl.BlockSpec((tm, LANES), lambda i, k: (i, 0)),
        scratch_shapes=[pltpu.VMEM((tm, LANES), jnp.float32)],
        compiler_params=pltpu.CompilerParams(
            dimension_semantics=("parallel", "arbitrary"),
            vmem_limit_bytes=32 * 1024 * 1024),
        cost_estimate=_step_cost(n, tm, f_hin, f_xr, finalize),
    )(*args)


# ----------------------------- weight packing --------------------------------


def _pack_stacks(w):                      # [K, Fi, Fo] -> [Fi, K*Fo] (stack-major lanes)
    k, fi, fo = w.shape
    return jnp.transpose(w, (1, 0, 2)).reshape(fi, k * fo)


def _pad_lanes(a, width=LANES):
    return jnp.pad(a, ((0, 0), (0, width - a.shape[1])))


def _pad_rows(a, height=LANES):
    return jnp.pad(a, ((0, height - a.shape[0]), (0, 0)))


def _block_diag_padded(w_hid):            # [K, F, F] -> [128, 128] block-diagonal
    k, f, _ = w_hid.shape
    bd = jnp.zeros((LANES, LANES), w_hid.dtype)
    for s in range(k):
        bd = bd.at[s * f:(s + 1) * f, s * f:(s + 1) * f].set(w_hid[s])
    return bd


def pack_net_params(p1, p2, num_stacks, hidden, num_classes):
    K = num_stacks
    # conv1: lane-pack the K stacks, zero-pad lane dims to 128.
    wi1 = _pad_lanes(_pack_stacks(p1["w_init"]))
    wr1 = _pad_lanes(_pack_stacks(p1["w_root"]))
    wh1 = _block_diag_padded(p1["w_hid"])
    b1 = _pad_lanes(p1["bias"].reshape(1, K * hidden))
    # conv2: fold conv1's 1/K stack-mean into the input dim of W_init/W_root
    # (K stacked copies scaled by 1/K) so the lane-packed conv1 output feeds
    # conv2 with no cross-lane slicing.
    wi2 = _pack_stacks(p2["w_init"])
    wr2 = _pack_stacks(p2["w_root"])
    wi2f = _pad_rows(_pad_lanes(jnp.tile(wi2, (K, 1)) / K))
    wr2f = _pad_rows(_pad_lanes(jnp.tile(wr2, (K, 1)) / K))
    wh2 = _block_diag_padded(p2["w_hid"])
    b2 = _pad_lanes(p2["bias"].reshape(1, K * num_classes))
    # Constant averaging matrix: conv2's K-stack mean as one matmul.
    avg = jnp.zeros((LANES, LANES), jnp.float32)
    eye = jnp.eye(num_classes, dtype=jnp.float32) / K
    for s in range(K):
        avg = avg.at[s * num_classes:(s + 1) * num_classes, :num_classes].set(eye)
    return dict(wi1=wi1, wr1=wr1, wh1=wh1, b1=b1,
                wi2f=wi2f, wr2f=wr2f, wh2=wh2, b2=b2, avg=avg)


# ------------------------------- forward pass --------------------------------


@functools.partial(jax.jit, static_argnames=("num_stacks", "hidden", "num_classes"))
def net_forward(x, a_hat, p1, p2, *, num_stacks, hidden, num_classes):
    # TODO(synk): training-mode dropout (input + ARMA root term) omitted (eval mode).
    a_bf16 = a_hat.astype(jnp.bfloat16)   # halves A_hat bytes; f32 accumulation in-kernel
    pk = pack_net_params(p1, p2, num_stacks, hidden, num_classes)
    # conv1 (act=ReLU per stack; outer F.relu is idempotent on a ReLU output)
    h = arma_step(a_bf16, x, x, pk["wi1"], pk["wr1"], pk["b1"], apply_relu=True)
    h1 = arma_step(a_bf16, h, x, pk["wh1"], pk["wr1"], pk["b1"], apply_relu=True)
    # conv2 (act=identity); conv1 stack-mean folded into wi2f / wr2f.
    g = arma_step(a_bf16, h1, h1, pk["wi2f"], pk["wr2f"], pk["b2"], apply_relu=False)
    outp = arma_step(a_bf16, g, h1, pk["wh2"], pk["wr2f"], pk["b2"], apply_relu=False,
                     avg=pk["avg"], num_classes=num_classes)
    return outp[:, :num_classes]


# ------------------------------- glue (JAX) ----------------------------------


def dense_gcn_norm(edge_index, num_nodes):
    """Dense normalized adjacency, gcn_norm with add_self_loops=False."""
    src, dst = edge_index[0], edge_index[1]
    a = jnp.zeros((num_nodes, num_nodes), jnp.float32)
    a = a.at[dst, src].add(1.0)                 # A[target, source]
    deg = jnp.sum(a, axis=1)
    dinv = jnp.where(deg > 0, 1.0 / jnp.sqrt(jnp.maximum(deg, 1e-12)), 0.0)
    return dinv[:, None] * a * dinv[None, :]


def glorot(key, shape):
    fan_in, fan_out = shape[-2], shape[-1]
    lim = jnp.sqrt(6.0 / (fan_in + fan_out))
    return jax.random.uniform(key, shape, jnp.float32, -lim, lim)


def init_arma_params(key, f_in, f_out, num_stacks=3):
    k1, k2, k3 = jax.random.split(key, 3)
    return dict(
        w_init=glorot(k1, (num_stacks, f_in, f_out)),
        w_hid=glorot(k2, (num_stacks, f_out, f_out)),
        w_root=glorot(k3, (num_stacks, f_in, f_out)),
        bias=jnp.zeros((num_stacks, f_out), jnp.float32),
    )


# ---------------------------- pure-JAX references ----------------------------


def _arma_conv_ref(x, a, w_init, w_hid, w_root, bias, apply_relu, num_layers=2):
    K = w_init.shape[0]
    hp = jax.lax.Precision.HIGHEST
    outs = []
    for s in range(K):
        root = jnp.dot(x, w_root[s], precision=hp) + bias[s][None, :]
        h = jnp.dot(a, jnp.dot(x, w_init[s], precision=hp), precision=hp) + root
        if apply_relu:
            h = jnp.maximum(h, 0.0)
        for _ in range(num_layers - 1):
            h = jnp.dot(a, jnp.dot(h, w_hid[s], precision=hp), precision=hp) + root
            if apply_relu:
                h = jnp.maximum(h, 0.0)
        outs.append(h)
    return sum(outs) / K


def net_forward_ref(x, a_hat, p1, p2):
    h = _arma_conv_ref(x, a_hat, p1["w_init"], p1["w_hid"], p1["w_root"],
                       p1["bias"], apply_relu=True)
    h = jnp.maximum(h, 0.0)
    z = _arma_conv_ref(h, a_hat, p2["w_init"], p2["w_hid"], p2["w_root"],
                       p2["bias"], apply_relu=False)
    return jax.nn.log_softmax(z, axis=1)


def _step_ref(a_bf16, hin, xroot, wt, wr, b, apply_relu, avg=None, num_classes=0):
    """Pure-JAX mirror of the kernel's math (bf16 A@Ht, f32 accumulation)."""
    hp = jax.lax.Precision.HIGHEST
    ht = jnp.dot(hin, wt, precision=hp)
    prop = jnp.dot(a_bf16, ht.astype(jnp.bfloat16),
                   preferred_element_type=jnp.float32)
    h = prop + jnp.dot(xroot, wr, precision=hp) + b
    if apply_relu:
        h = jnp.maximum(h, 0.0)
    if avg is None:
        return h
    z = jnp.dot(h, avg, precision=hp)
    valid = jnp.arange(LANES)[None, :] < num_classes
    zm = jnp.where(valid, z, -jnp.inf)
    m = jnp.max(zm, axis=1, keepdims=True)
    lse = jnp.log(jnp.sum(jnp.exp(zm - m), axis=1, keepdims=True)) + m
    return jnp.where(valid, z - lse, 0.0)


def net_forward_packed_ref(x, a_hat, p1, p2, *, num_stacks, hidden, num_classes):
    a_bf16 = a_hat.astype(jnp.bfloat16)
    pk = pack_net_params(p1, p2, num_stacks, hidden, num_classes)
    h = _step_ref(a_bf16, x, x, pk["wi1"], pk["wr1"], pk["b1"], True)
    h1 = _step_ref(a_bf16, h, x, pk["wh1"], pk["wr1"], pk["b1"], True)
    g = _step_ref(a_bf16, h1, h1, pk["wi2f"], pk["wr2f"], pk["b2"], False)
    outp = _step_ref(a_bf16, g, h1, pk["wh2"], pk["wr2f"], pk["b2"], False,
                     avg=pk["avg"], num_classes=num_classes)
    return outp[:, :num_classes]


# ----------------------------------- main ------------------------------------


if __name__ == "__main__":
    key = jax.random.PRNGKey(0)
    kx, kp1, kp2 = jax.random.split(key, 3)

    num_nodes = 256          # divisible by 128 -> grid (2, 2) per step
    num_features = 16
    hidden = 16
    num_classes = 4
    num_stacks = 3

    x = jax.random.normal(kx, (num_nodes, num_features), jnp.float32)

    # Deterministic graph: undirected ring + one chord per node (degree 4).
    idx = jnp.arange(num_nodes)
    nbr1 = (idx + 1) % num_nodes
    nbr2 = (idx + 7) % num_nodes
    src = jnp.concatenate([idx, nbr1, idx, nbr2])
    dst = jnp.concatenate([nbr1, idx, nbr2, idx])
    edge_index = jnp.stack([src, dst], axis=0)
    a_hat = dense_gcn_norm(edge_index, num_nodes)

    params1 = init_arma_params(kp1, num_features, hidden, num_stacks=num_stacks)
    params2 = init_arma_params(kp2, hidden, num_classes, num_stacks=num_stacks)

    out = net_forward(x, a_hat, params1, params2,
                      num_stacks=num_stacks, hidden=hidden,
                      num_classes=num_classes)
    jax.block_until_ready(out)

    assert out.shape == (num_nodes, num_classes)
    # rows of log_softmax should exp-sum to 1
    assert jnp.allclose(jnp.sum(jnp.exp(out), axis=1), 1.0, atol=1e-3)
    # tight check vs a pure-JAX mirror of the kernel's precision policy (bf16 A@Ht)
    ref_bf16 = net_forward_packed_ref(x, a_hat, params1, params2,
                                      num_stacks=num_stacks, hidden=hidden,
                                      num_classes=num_classes)
    assert jnp.allclose(out, ref_bf16, atol=1e-2, rtol=1e-2)
    # sanity check vs the full-f32 per-stack ARMAConv spec (bf16 A@H tolerance)
    ref_f32 = net_forward_ref(x, a_hat, params1, params2)
    assert jnp.allclose(out, ref_f32, atol=5e-2, rtol=5e-2)
    print("KERNEL_OK")
</pallas_src>

<mosaic_0001>
module attributes {stable_mosaic.version = 11 : i64} {
  func.func @kernel(%arg0: i32, %arg1: i32, %arg2: memref<128x128xbf16, #tpu.memory_space<vmem>>, %arg3: memref<128x16xf32, #tpu.memory_space<vmem>>, %arg4: memref<128x16xf32, #tpu.memory_space<vmem>>, %arg5: memref<16x128xf32, #tpu.memory_space<vmem>>, %arg6: memref<16x128xf32, #tpu.memory_space<vmem>>, %arg7: memref<1x128xf32, #tpu.memory_space<vmem>>, %arg8: memref<128x128xf32, #tpu.memory_space<vmem>>, %arg9: memref<128x128xf32, #tpu.memory_space<vmem>>) attributes {dimension_semantics = [#tpu.dimension_semantics<parallel>, #tpu.dimension_semantics<arbitrary>], iteration_bounds = array<i64: 2, 2>, scalar_prefetch = 0 : i64, scratch_operands = 1 : i64, tpu.core_type = #tpu.core_type<tc>, window_params = [{transform_indices = @transform_0, window_bounds = array<i64: 128, 128>}, {transform_indices = @transform_1, window_bounds = array<i64: 128, 16>}, {transform_indices = @transform_2, window_bounds = array<i64: 128, 16>}, {pipeline_mode = #tpu.pipeline_mode<synchronous>, transform_indices = @transform_3, window_bounds = array<i64: 16, 128>}, {pipeline_mode = #tpu.pipeline_mode<synchronous>, transform_indices = @transform_4, window_bounds = array<i64: 16, 128>}, {pipeline_mode = #tpu.pipeline_mode<synchronous>, transform_indices = @transform_5, window_bounds = array<i64: 1, 128>}, {transform_indices = @transform_6, window_bounds = array<i64: 128, 128>}]} {
    %c0_i32 = arith.constant 0 : i32
    %0 = arith.cmpi eq, %arg1, %c0_i32 : i32
    %1 = arith.extui %0 : i1 to i32
    %c0_i32_0 = arith.constant 0 : i32
    %2 = arith.cmpi ne, %1, %c0_i32_0 : i32
    scf.if %2 {
      %cst_12 = arith.constant 0.000000e+00 : f32
      %15 = vector.broadcast %cst_12 : f32 to vector<128x128xf32>
      %c0_13 = arith.constant 0 : index
      %c0_14 = arith.constant 0 : index
      %16 = vector.load %arg9[%c0_13, %c0_14] : memref<128x128xf32, #tpu.memory_space<vmem>>, vector<128x128xf32>
      tpu.vector_store %arg9[%c0_13, %c0_14], %15 {strides = array<i32>} : memref<128x128xf32, #tpu.memory_space<vmem>>, vector<128x128xf32>,
    } else {
    }
    %c0 = arith.constant 0 : index
    %c0_1 = arith.constant 0 : index
    %3 = vector.load %arg3[%c0, %c0_1] : memref<128x16xf32, #tpu.memory_space<vmem>>, vector<128x16xf32>
    %c0_2 = arith.constant 0 : index
    %c0_3 = arith.constant 0 : index
    %4 = vector.load %arg5[%c0_2, %c0_3] : memref<16x128xf32, #tpu.memory_space<vmem>>, vector<16x128xf32>
    %cst = arith.constant dense<0.000000e+00> : vector<128x128xf32>
    %5 = tpu.matmul %3, %4, %cst {dimension_numbers = #tpu.dot_dimension_numbers<[1], [0], [0], [1], [0, 0, 1, 1], [], []>} : vector<128x16xf32>, vector<16x128xf32>, vector<128x128xf32> -> vector<128x128xf32>
    %c0_4 = arith.constant 0 : index
    %c0_5 = arith.constant 0 : index
    %6 = vector.load %arg9[%c0_4, %c0_5] : memref<128x128xf32, #tpu.memory_space<vmem>>, vector<128x128xf32>
    %c0_6 = arith.constant 0 : index
    %c0_7 = arith.constant 0 : index
    %7 = vector.load %arg2[%c0_6, %c0_7] : memref<128x128xbf16, #tpu.memory_space<vmem>>, vector<128x128xbf16>
    %8 = arith.truncf %5 : vector<128x128xf32> to vector<128x128xbf16>
    %cst_8 = arith.constant dense<0.000000e+00> : vector<128x128xf32>
    %9 = tpu.matmul %7, %8, %cst_8 {dimension_numbers = #tpu.dot_dimension_numbers<[1], [0], [0], [1], [0, 0, 1, 1], [], []>} : vector<128x128xbf16>, vector<128x128xbf16>, vector<128x128xf32> -> vector<128x128xf32>
    %10 = arith.addf %6, %9 : vector<128x128xf32>
    %c0_9 = arith.constant 0 : index
    %c0_10 = arith.constant 0 : index
    %11 = vector.load %arg9[%c0_9, %c0_10] : memref<128x128xf32, #tpu.memory_space<vmem>>, vector<128x128xf32>
    tpu.vector_store %arg9[%c0_9, %c0_10], %10 {strides = array<i32>} : memref<128x128xf32, #tpu.memory_space<vmem>>, vector<128x128xf32>,
    %c1_i32 = arith.constant 1 : i32
    %12 = arith.cmpi eq, %arg1, %c1_i32 : i32
    %13 = arith.extui %12 : i1 to i32
    %c0_i32_11 = arith.constant 0 : i32
    %14 = arith.cmpi ne, %13, %c0_i32_11 : i32
    scf.if %14 {
      %c0_12 = arith.constant 0 : index
      %c0_13 = arith.constant 0 : index
      %15 = vector.load %arg4[%c0_12, %c0_13] : memref<128x16xf32, #tpu.memory_space<vmem>>, vector<128x16xf32>
      %c0_14 = arith.constant 0 : index
      %c0_15 = arith.constant 0 : index
      %16 = vector.load %arg6[%c0_14, %c0_15] : memref<16x128xf32, #tpu.memory_space<vmem>>, vector<16x128xf32>
      %cst_16 = arith.constant dense<0.000000e+00> : vector<128x128xf32>
      %17 = tpu.matmul %15, %16, %cst_16 {dimension_numbers = #tpu.dot_dimension_numbers<[1], [0], [0], [1], [0, 0, 1, 1], [], []>} : vector<128x16xf32>, vector<16x128xf32>, vector<128x128xf32> -> vector<128x128xf32>
      %c0_17 = arith.constant 0 : index
      %c0_18 = arith.constant 0 : index
      %18 = vector.load %arg7[%c0_17, %c0_18] : memref<1x128xf32, #tpu.memory_space<vmem>>, vector<1x128xf32>
      %19 = vector.broadcast %18 : vector<1x128xf32> to vector<128x128xf32>
      %20 = arith.addf %17, %19 : vector<128x128xf32>
      %c0_19 = arith.constant 0 : index
      %c0_20 = arith.constant 0 : index
      %21 = vector.load %arg9[%c0_19, %c0_20] : memref<128x128xf32, #tpu.memory_space<vmem>>, vector<128x128xf32>
      %22 = arith.addf %21, %20 : vector<128x128xf32>
      %cst_21 = arith.constant 0.000000e+00 : f32
      %23 = vector.broadcast %cst_21 : f32 to vector<128x128xf32>
      %24 = arith.maximumf %22, %23 : vector<128x128xf32>
      %c0_22 = arith.constant 0 : index
      %c0_23 = arith.constant 0 : index
      %25 = vector.load %arg8[%c0_22, %c0_23] : memref<128x128xf32, #tpu.memory_space<vmem>>, vector<128x128xf32>
      tpu.vector_store %arg8[%c0_22, %c0_23], %24 {strides = array<i32>} : memref<128x128xf32, #tpu.memory_space<vmem>>, vector<128x128xf32>,
    } else {
    }
    return
  }
  func.func @transform_0(%arg0: i32, %arg1: i32) -> (i32, i32) {
    %c0_i32 = arith.constant 0 : i32
    return %arg0, %arg1 : i32, i32
  }
  func.func @transform_1(%arg0: i32, %arg1: i32) -> (i32, i32) {
    %c0_i32 = arith.constant 0 : i32
    %c0_i32_0 = arith.constant 0 : i32
    return %arg1, %c0_i32 : i32, i32
  }
  func.func @transform_2(%arg0: i32, %arg1: i32) -> (i32, i32) {
    %c0_i32 = arith.constant 0 : i32
    %c0_i32_0 = arith.constant 0 : i32
    return %arg0, %c0_i32 : i32, i32
  }
  func.func @transform_3(%arg0: i32, %arg1: i32) -> (i32, i32) {
    %c0_i32 = arith.constant 0 : i32
    %c0_i32_0 = arith.constant 0 : i32
    %c0_i32_1 = arith.constant 0 : i32
    return %c0_i32, %c0_i32_0 : i32, i32
  }
  func.func @transform_4(%arg0: i32, %arg1: i32) -> (i32, i32) {
    %c0_i32 = arith.constant 0 : i32
    %c0_i32_0 = arith.constant 0 : i32
    %c0_i32_1 = arith.constant 0 : i32
    return %c0_i32, %c0_i32_0 : i32, i32
  }
  func.func @transform_5(%arg0: i32, %arg1: i32) -> (i32, i32) {
    %c0_i32 = arith.constant 0 : i32
    %c0_i32_0 = arith.constant 0 : i32
    %c0_i32_1 = arith.constant 0 : i32
    return %c0_i32, %c0_i32_0 : i32, i32
  }
  func.func @transform_6(%arg0: i32, %arg1: i32) -> (i32, i32) {
    %c0_i32 = arith.constant 0 : i32
    %c0_i32_0 = arith.constant 0 : i32
    return %arg0, %c0_i32 : i32, i32
  }
}

module attributes {stable_mosaic.version = 11 : i64} {
  func.func @kernel(%arg0: i32, %arg1: i32, %arg2: memref<128x128xbf16, #tpu.memory_space<vmem>>, %arg3: memref<128x128xf32, #tpu.memory_space<vmem>>, %arg4: memref<128x16xf32, #tpu.memory_space<vmem>>, %arg5: memref<128x128xf32, #tpu.memory_space<vmem>>, %arg6: memref<16x128xf32, #tpu.memory_space<vmem>>, %arg7: memref<1x128xf32, #tpu.memory_space<vmem>>, %arg8: memref<128x128xf32, #tpu.memory_space<vmem>>, %arg9: memref<128x128xf32, #tpu.memory_space<vmem>>) attributes {dimension_semantics = [#tpu.dimension_semantics<parallel>, #tpu.dimension_semantics<arbitrary>], iteration_bounds = array<i64: 2, 2>, scalar_prefetch = 0 : i64, scratch_operands = 1 : i64, tpu.core_type = #tpu.core_type<tc>, window_params = [{transform_indices = @transform_0, window_bounds = array<i64: 128, 128>}, {transform_indices = @transform_1, window_bounds = array<i64: 128, 128>}, {transform_indices = @transform_2, window_bounds = array<i64: 128, 16>}, {pipeline_mode = #tpu.pipeline_mode<synchronous>, transform_indices = @transform_3, window_bounds = array<i64: 128, 128>}, {pipeline_mode = #tpu.pipeline_mode<synchronous>, transform_indices = @transform_4, window_bounds = array<i64: 16, 128>}, {pipeline_mode = #tpu.pipeline_mode<synchronous>, transform_indices = @transform_5, window_bounds = array<i64: 1, 128>}, {transform_indices = @transform_6, window_bounds = array<i64: 128, 128>}]} {
    %c0_i32 = arith.constant 0 : i32
    %0 = arith.cmpi eq, %arg1, %c0_i32 : i32
    %1 = arith.extui %0 : i1 to i32
    %c0_i32_0 = arith.constant 0 : i32
    %2 = arith.cmpi ne, %1, %c0_i32_0 : i32
    scf.if %2 {
      %cst_12 = arith.constant 0.000000e+00 : f32
      %15 = vector.broadcast %cst_12 : f32 to vector<128x128xf32>
      %c0_13 = arith.constant 0 : index
      %c0_14 = arith.constant 0 : index
      %16 = vector.load %arg9[%c0_13, %c0_14] : memref<128x128xf32, #tpu.memory_space<vmem>>, vector<128x128xf32>
      tpu.vector_store %arg9[%c0_13, %c0_14], %15 {strides = array<i32>} : memref<128x128xf32, #tpu.memory_space<vmem>>, vector<128x128xf32>,
    } else {
    }
    %c0 = arith.constant 0 : index
    %c0_1 = arith.constant 0 : index
    %3 = vector.load %arg3[%c0, %c0_1] : memref<128x128xf32, #tpu.memory_space<vmem>>, vector<128x128xf32>
    %c0_2 = arith.constant 0 : index
    %c0_3 = arith.constant 0 : index
    %4 = vector.load %arg5[%c0_2, %c0_3] : memref<128x128xf32, #tpu.memory_space<vmem>>, vector<128x128xf32>
    %cst = arith.constant dense<0.000000e+00> : vector<128x128xf32>
    %5 = tpu.matmul %3, %4, %cst {dimension_numbers = #tpu.dot_dimension_numbers<[1], [0], [0], [1], [0, 0, 1, 1], [], []>} : vector<128x128xf32>, vector<128x128xf32>, vector<128x128xf32> -> vector<128x128xf32>
    %c0_4 = arith.constant 0 : index
    %c0_5 = arith.constant 0 : index
    %6 = vector.load %arg9[%c0_4, %c0_5] : memref<128x128xf32, #tpu.memory_space<vmem>>, vector<128x128xf32>
    %c0_6 = arith.constant 0 : index
    %c0_7 = arith.constant 0 : index
    %7 = vector.load %arg2[%c0_6, %c0_7] : memref<128x128xbf16, #tpu.memory_space<vmem>>, vector<128x128xbf16>
    %8 = arith.truncf %5 : vector<128x128xf32> to vector<128x128xbf16>
    %cst_8 = arith.constant dense<0.000000e+00> : vector<128x128xf32>
    %9 = tpu.matmul %7, %8, %cst_8 {dimension_numbers = #tpu.dot_dimension_numbers<[1], [0], [0], [1], [0, 0, 1, 1], [], []>} : vector<128x128xbf16>, vector<128x128xbf16>, vector<128x128xf32> -> vector<128x128xf32>
    %10 = arith.addf %6, %9 : vector<128x128xf32>
    %c0_9 = arith.constant 0 : index
    %c0_10 = arith.constant 0 : index
    %11 = vector.load %arg9[%c0_9, %c0_10] : memref<128x128xf32, #tpu.memory_space<vmem>>, vector<128x128xf32>
    tpu.vector_store %arg9[%c0_9, %c0_10], %10 {strides = array<i32>} : memref<128x128xf32, #tpu.memory_space<vmem>>, vector<128x128xf32>,
    %c1_i32 = arith.constant 1 : i32
    %12 = arith.cmpi eq, %arg1, %c1_i32 : i32
    %13 = arith.extui %12 : i1 to i32
    %c0_i32_11 = arith.constant 0 : i32
    %14 = arith.cmpi ne, %13, %c0_i32_11 : i32
    scf.if %14 {
      %c0_12 = arith.constant 0 : index
      %c0_13 = arith.constant 0 : index
      %15 = vector.load %arg4[%c0_12, %c0_13] : memref<128x16xf32, #tpu.memory_space<vmem>>, vector<128x16xf32>
      %c0_14 = arith.constant 0 : index
      %c0_15 = arith.constant 0 : index
      %16 = vector.load %arg6[%c0_14, %c0_15] : memref<16x128xf32, #tpu.memory_space<vmem>>, vector<16x128xf32>
      %cst_16 = arith.constant dense<0.000000e+00> : vector<128x128xf32>
      %17 = tpu.matmul %15, %16, %cst_16 {dimension_numbers = #tpu.dot_dimension_numbers<[1], [0], [0], [1], [0, 0, 1, 1], [], []>} : vector<128x16xf32>, vector<16x128xf32>, vector<128x128xf32> -> vector<128x128xf32>
      %c0_17 = arith.constant 0 : index
      %c0_18 = arith.constant 0 : index
      %18 = vector.load %arg7[%c0_17, %c0_18] : memref<1x128xf32, #tpu.memory_space<vmem>>, vector<1x128xf32>
      %19 = vector.broadcast %18 : vector<1x128xf32> to vector<128x128xf32>
      %20 = arith.addf %17, %19 : vector<128x128xf32>
      %c0_19 = arith.constant 0 : index
      %c0_20 = arith.constant 0 : index
      %21 = vector.load %arg9[%c0_19, %c0_20] : memref<128x128xf32, #tpu.memory_space<vmem>>, vector<128x128xf32>
      %22 = arith.addf %21, %20 : vector<128x128xf32>
      %cst_21 = arith.constant 0.000000e+00 : f32
      %23 = vector.broadcast %cst_21 : f32 to vector<128x128xf32>
      %24 = arith.maximumf %22, %23 : vector<128x128xf32>
      %c0_22 = arith.constant 0 : index
      %c0_23 = arith.constant 0 : index
      %25 = vector.load %arg8[%c0_22, %c0_23] : memref<128x128xf32, #tpu.memory_space<vmem>>, vector<128x128xf32>
      tpu.vector_store %arg8[%c0_22, %c0_23], %24 {strides = array<i32>} : memref<128x128xf32, #tpu.memory_space<vmem>>, vector<128x128xf32>,
    } else {
    }
    return
  }
  func.func @transform_0(%arg0: i32, %arg1: i32) -> (i32, i32) {
    %c0_i32 = arith.constant 0 : i32
    return %arg0, %arg1 : i32, i32
  }
  func.func @transform_1(%arg0: i32, %arg1: i32) -> (i32, i32) {
    %c0_i32 = arith.constant 0 : i32
    %c0_i32_0 = arith.constant 0 : i32
    return %arg1, %c0_i32 : i32, i32
  }
  func.func @transform_2(%arg0: i32, %arg1: i32) -> (i32, i32) {
    %c0_i32 = arith.constant 0 : i32
    %c0_i32_0 = arith.constant 0 : i32
    return %arg0, %c0_i32 : i32, i32
  }
  func.func @transform_3(%arg0: i32, %arg1: i32) -> (i32, i32) {
    %c0_i32 = arith.constant 0 : i32
    %c0_i32_0 = arith.constant 0 : i32
    %c0_i32_1 = arith.constant 0 : i32
    return %c0_i32, %c0_i32_0 : i32, i32
  }
  func.func @transform_4(%arg0: i32, %arg1: i32) -> (i32, i32) {
    %c0_i32 = arith.constant 0 : i32
    %c0_i32_0 = arith.constant 0 : i32
    %c0_i32_1 = arith.constant 0 : i32
    return %c0_i32, %c0_i32_0 : i32, i32
  }
  func.func @transform_5(%arg0: i32, %arg1: i32) -> (i32, i32) {
    %c0_i32 = arith.constant 0 : i32
    %c0_i32_0 = arith.constant 0 : i32
    %c0_i32_1 = arith.constant 0 : i32
    return %c0_i32, %c0_i32_0 : i32, i32
  }
  func.func @transform_6(%arg0: i32, %arg1: i32) -> (i32, i32) {
    %c0_i32 = arith.constant 0 : i32
    %c0_i32_0 = arith.constant 0 : i32
    return %arg0, %c0_i32 : i32, i32
  }
}

module attributes {stable_mosaic.version = 11 : i64} {
  func.func @kernel(%arg0: i32, %arg1: i32, %arg2: memref<128x128xbf16, #tpu.memory_space<vmem>>, %arg3: memref<128x128xf32, #tpu.memory_space<vmem>>, %arg4: memref<128x128xf32, #tpu.memory_space<vmem>>, %arg5: memref<128x128xf32, #tpu.memory_space<vmem>>, %arg6: memref<128x128xf32, #tpu.memory_space<vmem>>, %arg7: memref<1x128xf32, #tpu.memory_space<vmem>>, %arg8: memref<128x128xf32, #tpu.memory_space<vmem>>, %arg9: memref<128x128xf32, #tpu.memory_space<vmem>>) attributes {dimension_semantics = [#tpu.dimension_semantics<parallel>, #tpu.dimension_semantics<arbitrary>], iteration_bounds = array<i64: 2, 2>, scalar_prefetch = 0 : i64, scratch_operands = 1 : i64, tpu.core_type = #tpu.core_type<tc>, window_params = [{transform_indices = @transform_0, window_bounds = array<i64: 128, 128>}, {transform_indices = @transform_1, window_bounds = array<i64: 128, 128>}, {transform_indices = @transform_2, window_bounds = array<i64: 128, 128>}, {pipeline_mode = #tpu.pipeline_mode<synchronous>, transform_indices = @transform_3, window_bounds = array<i64: 128, 128>}, {pipeline_mode = #tpu.pipeline_mode<synchronous>, transform_indices = @transform_4, window_bounds = array<i64: 128, 128>}, {pipeline_mode = #tpu.pipeline_mode<synchronous>, transform_indices = @transform_5, window_bounds = array<i64: 1, 128>}, {transform_indices = @transform_6, window_bounds = array<i64: 128, 128>}]} {
    %c0_i32 = arith.constant 0 : i32
    %0 = arith.cmpi eq, %arg1, %c0_i32 : i32
    %1 = arith.extui %0 : i1 to i32
    %c0_i32_0 = arith.constant 0 : i32
    %2 = arith.cmpi ne, %1, %c0_i32_0 : i32
    scf.if %2 {
      %cst_12 = arith.constant 0.000000e+00 : f32
      %15 = vector.broadcast %cst_12 : f32 to vector<128x128xf32>
      %c0_13 = arith.constant 0 : index
      %c0_14 = arith.constant 0 : index
      %16 = vector.load %arg9[%c0_13, %c0_14] : memref<128x128xf32, #tpu.memory_space<vmem>>, vector<128x128xf32>
      tpu.vector_store %arg9[%c0_13, %c0_14], %15 {strides = array<i32>} : memref<128x128xf32, #tpu.memory_space<vmem>>, vector<128x128xf32>,
    } else {
    }
    %c0 = arith.constant 0 : index
    %c0_1 = arith.constant 0 : index
    %3 = vector.load %arg3[%c0, %c0_1] : memref<128x128xf32, #tpu.memory_space<vmem>>, vector<128x128xf32>
    %c0_2 = arith.constant 0 : index
    %c0_3 = arith.constant 0 : index
    %4 = vector.load %arg5[%c0_2, %c0_3] : memref<128x128xf32, #tpu.memory_space<vmem>>, vector<128x128xf32>
    %cst = arith.constant dense<0.000000e+00> : vector<128x128xf32>
    %5 = tpu.matmul %3, %4, %cst {dimension_numbers = #tpu.dot_dimension_numbers<[1], [0], [0], [1], [0, 0, 1, 1], [], []>} : vector<128x128xf32>, vector<128x128xf32>, vector<128x128xf32> -> vector<128x128xf32>
    %c0_4 = arith.constant 0 : index
    %c0_5 = arith.constant 0 : index
    %6 = vector.load %arg9[%c0_4, %c0_5] : memref<128x128xf32, #tpu.memory_space<vmem>>, vector<128x128xf32>
    %c0_6 = arith.constant 0 : index
    %c0_7 = arith.constant 0 : index
    %7 = vector.load %arg2[%c0_6, %c0_7] : memref<128x128xbf16, #tpu.memory_space<vmem>>, vector<128x128xbf16>
    %8 = arith.truncf %5 : vector<128x128xf32> to vector<128x128xbf16>
    %cst_8 = arith.constant dense<0.000000e+00> : vector<128x128xf32>
    %9 = tpu.matmul %7, %8, %cst_8 {dimension_numbers = #tpu.dot_dimension_numbers<[1], [0], [0], [1], [0, 0, 1, 1], [], []>} : vector<128x128xbf16>, vector<128x128xbf16>, vector<128x128xf32> -> vector<128x128xf32>
    %10 = arith.addf %6, %9 : vector<128x128xf32>
    %c0_9 = arith.constant 0 : index
    %c0_10 = arith.constant 0 : index
    %11 = vector.load %arg9[%c0_9, %c0_10] : memref<128x128xf32, #tpu.memory_space<vmem>>, vector<128x128xf32>
    tpu.vector_store %arg9[%c0_9, %c0_10], %10 {strides = array<i32>} : memref<128x128xf32, #tpu.memory_space<vmem>>, vector<128x128xf32>,
    %c1_i32 = arith.constant 1 : i32
    %12 = arith.cmpi eq, %arg1, %c1_i32 : i32
    %13 = arith.extui %12 : i1 to i32
    %c0_i32_11 = arith.constant 0 : i32
    %14 = arith.cmpi ne, %13, %c0_i32_11 : i32
    scf.if %14 {
      %c0_12 = arith.constant 0 : index
      %c0_13 = arith.constant 0 : index
      %15 = vector.load %arg4[%c0_12, %c0_13] : memref<128x128xf32, #tpu.memory_space<vmem>>, vector<128x128xf32>
      %c0_14 = arith.constant 0 : index
      %c0_15 = arith.constant 0 : index
      %16 = vector.load %arg6[%c0_14, %c0_15] : memref<128x128xf32, #tpu.memory_space<vmem>>, vector<128x128xf32>
      %cst_16 = arith.constant dense<0.000000e+00> : vector<128x128xf32>
      %17 = tpu.matmul %15, %16, %cst_16 {dimension_numbers = #tpu.dot_dimension_numbers<[1], [0], [0], [1], [0, 0, 1, 1], [], []>} : vector<128x128xf32>, vector<128x128xf32>, vector<128x128xf32> -> vector<128x128xf32>
      %c0_17 = arith.constant 0 : index
      %c0_18 = arith.constant 0 : index
      %18 = vector.load %arg7[%c0_17, %c0_18] : memref<1x128xf32, #tpu.memory_space<vmem>>, vector<1x128xf32>
      %19 = vector.broadcast %18 : vector<1x128xf32> to vector<128x128xf32>
      %20 = arith.addf %17, %19 : vector<128x128xf32>
      %c0_19 = arith.constant 0 : index
      %c0_20 = arith.constant 0 : index
      %21 = vector.load %arg9[%c0_19, %c0_20] : memref<128x128xf32, #tpu.memory_space<vmem>>, vector<128x128xf32>
      %22 = arith.addf %21, %20 : vector<128x128xf32>
      %c0_21 = arith.constant 0 : index
      %c0_22 = arith.constant 0 : index
      %23 = vector.load %arg8[%c0_21, %c0_22] : memref<128x128xf32, #tpu.memory_space<vmem>>, vector<128x128xf32>
      tpu.vector_store %arg8[%c0_21, %c0_22], %22 {strides = array<i32>} : memref<128x128xf32, #tpu.memory_space<vmem>>, vector<128x128xf32>,
    } else {
    }
    return
  }
  func.func @transform_0(%arg0: i32, %arg1: i32) -> (i32, i32) {
    %c0_i32 = arith.constant 0 : i32
    return %arg0, %arg1 : i32, i32
  }
  func.func @transform_1(%arg0: i32, %arg1: i32) -> (i32, i32) {
    %c0_i32 = arith.constant 0 : i32
    %c0_i32_0 = arith.constant 0 : i32
    return %arg1, %c0_i32 : i32, i32
  }
  func.func @transform_2(%arg0: i32, %arg1: i32) -> (i32, i32) {
    %c0_i32 = arith.constant 0 : i32
    %c0_i32_0 = arith.constant 0 : i32
    return %arg0, %c0_i32 : i32, i32
  }
  func.func @transform_3(%arg0: i32, %arg1: i32) -> (i32, i32) {
    %c0_i32 = arith.constant 0 : i32
    %c0_i32_0 = arith.constant 0 : i32
    %c0_i32_1 = arith.constant 0 : i32
    return %c0_i32, %c0_i32_0 : i32, i32
  }
  func.func @transform_4(%arg0: i32, %arg1: i32) -> (i32, i32) {
    %c0_i32 = arith.constant 0 : i32
    %c0_i32_0 = arith.constant 0 : i32
    %c0_i32_1 = arith.constant 0 : i32
    return %c0_i32, %c0_i32_0 : i32, i32
  }
  func.func @transform_5(%arg0: i32, %arg1: i32) -> (i32, i32) {
    %c0_i32 = arith.constant 0 : i32
    %c0_i32_0 = arith.constant 0 : i32
    %c0_i32_1 = arith.constant 0 : i32
    return %c0_i32, %c0_i32_0 : i32, i32
  }
  func.func @transform_6(%arg0: i32, %arg1: i32) -> (i32, i32) {
    %c0_i32 = arith.constant 0 : i32
    %c0_i32_0 = arith.constant 0 : i32
    return %arg0, %c0_i32 : i32, i32
  }
}

module attributes {stable_mosaic.version = 11 : i64} {
  func.func @kernel(%arg0: i32, %arg1: i32, %arg2: memref<128x128xbf16, #tpu.memory_space<vmem>>, %arg3: memref<128x128xf32, #tpu.memory_space<vmem>>, %arg4: memref<128x128xf32, #tpu.memory_space<vmem>>, %arg5: memref<128x128xf32, #tpu.memory_space<vmem>>, %arg6: memref<128x128xf32, #tpu.memory_space<vmem>>, %arg7: memref<1x128xf32, #tpu.memory_space<vmem>>, %arg8: memref<128x128xf32, #tpu.memory_space<vmem>>, %arg9: memref<128x128xf32, #tpu.memory_space<vmem>>, %arg10: memref<128x128xf32, #tpu.memory_space<vmem>>) attributes {dimension_semantics = [#tpu.dimension_semantics<parallel>, #tpu.dimension_semantics<arbitrary>], iteration_bounds = array<i64: 2, 2>, scalar_prefetch = 0 : i64, scratch_operands = 1 : i64, tpu.core_type = #tpu.core_type<tc>, window_params = [{transform_indices = @transform_0, window_bounds = array<i64: 128, 128>}, {transform_indices = @transform_1, window_bounds = array<i64: 128, 128>}, {transform_indices = @transform_2, window_bounds = array<i64: 128, 128>}, {pipeline_mode = #tpu.pipeline_mode<synchronous>, transform_indices = @transform_3, window_bounds = array<i64: 128, 128>}, {pipeline_mode = #tpu.pipeline_mode<synchronous>, transform_indices = @transform_4, window_bounds = array<i64: 128, 128>}, {pipeline_mode = #tpu.pipeline_mode<synchronous>, transform_indices = @transform_5, window_bounds = array<i64: 1, 128>}, {pipeline_mode = #tpu.pipeline_mode<synchronous>, transform_indices = @transform_6, window_bounds = array<i64: 128, 128>}, {transform_indices = @transform_7, window_bounds = array<i64: 128, 128>}]} {
    %c0_i32 = arith.constant 0 : i32
    %0 = arith.cmpi eq, %arg1, %c0_i32 : i32
    %1 = arith.extui %0 : i1 to i32
    %c0_i32_0 = arith.constant 0 : i32
    %2 = arith.cmpi ne, %1, %c0_i32_0 : i32
    scf.if %2 {
      %cst_12 = arith.constant 0.000000e+00 : f32
      %15 = vector.broadcast %cst_12 : f32 to vector<128x128xf32>
      %c0_13 = arith.constant 0 : index
      %c0_14 = arith.constant 0 : index
      %16 = vector.load %arg10[%c0_13, %c0_14] : memref<128x128xf32, #tpu.memory_space<vmem>>, vector<128x128xf32>
      tpu.vector_store %arg10[%c0_13, %c0_14], %15 {strides = array<i32>} : memref<128x128xf32, #tpu.memory_space<vmem>>, vector<128x128xf32>,
    } else {
    }
    %c0 = arith.constant 0 : index
    %c0_1 = arith.constant 0 : index
    %3 = vector.load %arg3[%c0, %c0_1] : memref<128x128xf32, #tpu.memory_space<vmem>>, vector<128x128xf32>
    %c0_2 = arith.constant 0 : index
    %c0_3 = arith.constant 0 : index
    %4 = vector.load %arg5[%c0_2, %c0_3] : memref<128x128xf32, #tpu.memory_space<vmem>>, vector<128x128xf32>
    %cst = arith.constant dense<0.000000e+00> : vector<128x128xf32>
    %5 = tpu.matmul %3, %4, %cst {dimension_numbers = #tpu.dot_dimension_numbers<[1], [0], [0], [1], [0, 0, 1, 1], [], []>} : vector<128x128xf32>, vector<128x128xf32>, vector<128x128xf32> -> vector<128x128xf32>
    %c0_4 = arith.constant 0 : index
    %c0_5 = arith.constant 0 : index
    %6 = vector.load %arg10[%c0_4, %c0_5] : memref<128x128xf32, #tpu.memory_space<vmem>>, vector<128x128xf32>
    %c0_6 = arith.constant 0 : index
    %c0_7 = arith.constant 0 : index
    %7 = vector.load %arg2[%c0_6, %c0_7] : memref<128x128xbf16, #tpu.memory_space<vmem>>, vector<128x128xbf16>
    %8 = arith.truncf %5 : vector<128x128xf32> to vector<128x128xbf16>
    %cst_8 = arith.constant dense<0.000000e+00> : vector<128x128xf32>
    %9 = tpu.matmul %7, %8, %cst_8 {dimension_numbers = #tpu.dot_dimension_numbers<[1], [0], [0], [1], [0, 0, 1, 1], [], []>} : vector<128x128xbf16>, vector<128x128xbf16>, vector<128x128xf32> -> vector<128x128xf32>
    %10 = arith.addf %6, %9 : vector<128x128xf32>
    %c0_9 = arith.constant 0 : index
    %c0_10 = arith.constant 0 : index
    %11 = vector.load %arg10[%c0_9, %c0_10] : memref<128x128xf32, #tpu.memory_space<vmem>>, vector<128x128xf32>
    tpu.vector_store %arg10[%c0_9, %c0_10], %10 {strides = array<i32>} : memref<128x128xf32, #tpu.memory_space<vmem>>, vector<128x128xf32>,
    %c1_i32 = arith.constant 1 : i32
    %12 = arith.cmpi eq, %arg1, %c1_i32 : i32
    %13 = arith.extui %12 : i1 to i32
    %c0_i32_11 = arith.constant 0 : i32
    %14 = arith.cmpi ne, %13, %c0_i32_11 : i32
    scf.if %14 {
      %c0_12 = arith.constant 0 : index
      %c0_13 = arith.constant 0 : index
      %15 = vector.load %arg4[%c0_12, %c0_13] : memref<128x128xf32, #tpu.memory_space<vmem>>, vector<128x128xf32>
      %c0_14 = arith.constant 0 : index
      %c0_15 = arith.constant 0 : index
      %16 = vector.load %arg6[%c0_14, %c0_15] : memref<128x128xf32, #tpu.memory_space<vmem>>, vector<128x128xf32>
      %cst_16 = arith.constant dense<0.000000e+00> : vector<128x128xf32>
      %17 = tpu.matmul %15, %16, %cst_16 {dimension_numbers = #tpu.dot_dimension_numbers<[1], [0], [0], [1], [0, 0, 1, 1], [], []>} : vector<128x128xf32>, vector<128x128xf32>, vector<128x128xf32> -> vector<128x128xf32>
      %c0_17 = arith.constant 0 : index
      %c0_18 = arith.constant 0 : index
      %18 = vector.load %arg7[%c0_17, %c0_18] : memref<1x128xf32, #tpu.memory_space<vmem>>, vector<1x128xf32>
      %19 = vector.broadcast %18 : vector<1x128xf32> to vector<128x128xf32>
      %20 = arith.addf %17, %19 : vector<128x128xf32>
      %c0_19 = arith.constant 0 : index
      %c0_20 = arith.constant 0 : index
      %21 = vector.load %arg10[%c0_19, %c0_20] : memref<128x128xf32, #tpu.memory_space<vmem>>, vector<128x128xf32>
      %22 = arith.addf %21, %20 : vector<128x128xf32>
      %c0_21 = arith.constant 0 : index
      %c0_22 = arith.constant 0 : index
      %23 = vector.load %arg8[%c0_21, %c0_22] : memref<128x128xf32, #tpu.memory_space<vmem>>, vector<128x128xf32>
      %cst_23 = arith.constant dense<0.000000e+00> : vector<128x128xf32>
      %24 = tpu.matmul %22, %23, %cst_23 {dimension_numbers = #tpu.dot_dimension_numbers<[1], [0], [0], [1], [0, 0, 1, 1], [], []>} : vector<128x128xf32>, vector<128x128xf32>, vector<128x128xf32> -> vector<128x128xf32>
      %25 = tpu.iota {dimensions = array<i32: 1>} : vector<128x128xi32>
      %c4_i32 = arith.constant 4 : i32
      %26 = vector.broadcast %c4_i32 : i32 to vector<128x128xi32>
      %27 = arith.cmpi slt, %25, %26 : vector<128x128xi32>
      %cst_24 = arith.constant 0xFF800000 : f32
      %28 = vector.broadcast %cst_24 : f32 to vector<128x128xf32>
      %29 = arith.select %27, %24, %28 : vector<128x128xi1>, vector<128x128xf32>
      %cst_25 = arith.constant dense<0xFF800000> : vector<128xf32>
      %30 = vector.multi_reduction <maximumf>, %29, %cst_25 [1] : vector<128x128xf32> to vector<128xf32>
      %31 = vector.shape_cast %30 : vector<128xf32> to vector<128x1xf32>
      %32 = vector.broadcast %31 : vector<128x1xf32> to vector<128x128xf32>
      %33 = arith.subf %29, %32 : vector<128x128xf32>
      %34 = math.exp %33 : vector<128x128xf32>
      %cst_26 = arith.constant dense<0.000000e+00> : vector<128xf32>
      %35 = vector.multi_reduction <add>, %34, %cst_26 [1] : vector<128x128xf32> to vector<128xf32>
      %36 = vector.shape_cast %35 : vector<128xf32> to vector<128x1xf32>
      %37 = math.log %36 : vector<128x1xf32>
      %38 = arith.addf %37, %31 : vector<128x1xf32>
      %39 = vector.broadcast %38 : vector<128x1xf32> to vector<128x128xf32>
      %40 = arith.subf %24, %39 : vector<128x128xf32>
      %cst_27 = arith.constant 0.000000e+00 : f32
      %41 = vector.broadcast %cst_27 : f32 to vector<128x128xf32>
      %42 = arith.select %27, %40, %41 : vector<128x128xi1>, vector<128x128xf32>
      %c0_28 = arith.constant 0 : index
      %c0_29 = arith.constant 0 : index
      %43 = vector.load %arg9[%c0_28, %c0_29] : memref<128x128xf32, #tpu.memory_space<vmem>>, vector<128x128xf32>
      tpu.vector_store %arg9[%c0_28, %c0_29], %42 {strides = array<i32>} : memref<128x128xf32, #tpu.memory_space<vmem>>, vector<128x128xf32>,
    } else {
    }
    return
  }
  func.func @transform_0(%arg0: i32, %arg1: i32) -> (i32, i32) {
    %c0_i32 = arith.constant 0 : i32
    return %arg0, %arg1 : i32, i32
  }
  func.func @transform_1(%arg0: i32, %arg1: i32) -> (i32, i32) {
    %c0_i32 = arith.constant 0 : i32
    %c0_i32_0 = arith.constant 0 : i32
    return %arg1, %c0_i32 : i32, i32
  }
  func.func @transform_2(%arg0: i32, %arg1: i32) -> (i32, i32) {
    %c0_i32 = arith.constant 0 : i32
    %c0_i32_0 = arith.constant 0 : i32
    return %arg0, %c0_i32 : i32, i32
  }
  func.func @transform_3(%arg0: i32, %arg1: i32) -> (i32, i32) {
    %c0_i32 = arith.constant 0 : i32
    %c0_i32_0 = arith.constant 0 : i32
    %c0_i32_1 = arith.constant 0 : i32
    return %c0_i32, %c0_i32_0 : i32, i32
  }
  func.func @transform_4(%arg0: i32, %arg1: i32) -> (i32, i32) {
    %c0_i32 = arith.constant 0 : i32
    %c0_i32_0 = arith.constant 0 : i32
    %c0_i32_1 = arith.constant 0 : i32
    return %c0_i32, %c0_i32_0 : i32, i32
  }
  func.func @transform_5(%arg0: i32, %arg1: i32) -> (i32, i32) {
    %c0_i32 = arith.constant 0 : i32
    %c0_i32_0 = arith.constant 0 : i32
    %c0_i32_1 = arith.constant 0 : i32
    return %c0_i32, %c0_i32_0 : i32, i32
  }
  func.func @transform_6(%arg0: i32, %arg1: i32) -> (i32, i32) {
    %c0_i32 = arith.constant 0 : i32
    %c0_i32_0 = arith.constant 0 : i32
    %c0_i32_1 = arith.constant 0 : i32
    return %c0_i32, %c0_i32_0 : i32, i32
  }
  func.func @transform_7(%arg0: i32, %arg1: i32) -> (i32, i32) {
    %c0_i32 = arith.constant 0 : i32
    %c0_i32_0 = arith.constant 0 : i32
    return %arg0, %c0_i32 : i32, i32
  }
}

</mosaic_0001>

<llo_original>
// kernel: net_forward.4
$region0: #{net_forward.4}
  #allocation0 [shape = 'u32[]', space=smem, size = 0x4, offset = 0x4, fixed_abs, tag = 'smem constant byte address 0x4 - core index']
  #allocation1 [shape = 'u32[72,128]{1,0:T(1,128)}', space=vmem, size = 0x9000, scoped, tag = 'internal scratch']
  #allocation2 [shape = 'f32[128,128]{1,0:T(8,128)}', space=vmem, size = 0x10000, scoped, tag = 'scratch operand']
  %s0 = inlined_call_operand.vmem [shape: bf16[256,256], index: 0, kind: input, shape index: {}]
  %s1 = inlined_call_operand.vmem [shape: f32[256,16], index: 1, kind: input, shape index: {}, may-alias: {1,2}]
  %s2 = inlined_call_operand.vmem [shape: f32[256,16], index: 2, kind: input, shape index: {}, may-alias: {1,2}]
  %s3 = inlined_call_operand.vmem [shape: f32[16,128], index: 3, kind: input, shape index: {}]
  %s4 = inlined_call_operand.vmem [shape: f32[16,128], index: 4, kind: input, shape index: {}]
  %s5 = inlined_call_operand.vmem [shape: f32[1,128], index: 5, kind: input, shape index: {}]
  %s6 = inlined_call_operand.vmem [shape: f32[256,128], index: 6, kind: output, shape index: {}]
  %s7 = sld [smem:[#allocation0]]
  $region106: #{net_forward.4} parent=0
    _
  %s9 = ssub.s32 1, %s7
  %s10 = scalar_select 0, %s9, %s7
  $region1: #{net_forward.4} parent=0
    #allocation3 [shape = 'u8[65536]{0}', space=vmem, size = 0x10000, scoped, tag = 'input window, operand 0']
    loop: start=0, step=1, limit=6
    $region2: #{net_forward.4} parent=1 // loop_pre_header
      _
    $region3: #{net_forward.4} parent=1 // loop_header
      %s12 = sphi 0, %s16
      %p13 = scmp.ge.s32.totalorder %s12, 6
      %s19 = sphi 0, %s31
      %s20 = sphi 0, %s27
      %s21 = sphi 0, %s19
      %s22 = sphi 0, %s20
      %s23 = sphi 0, %s21
      %s24 = sphi 0, %s22
      %s36 = sphi 0, %s38
      %s39 = sphi 0, %s36
      %s40 = sphi 0, %s39
      %s56 = sphi 0, %s40
      %s62 = sphi 0, %s64
      %s65 = sphi 0, %s62
      %s66 = sphi 0, %s65
      %s82 = sphi 0, %s66
      %s88 = sphi 0, %s90
      %s91 = sphi 0, %s88
      %s92 = sphi 0, %s91
      %s108 = sphi 0, %s92
      %s112 = sphi 0, %s112
      %s114 = sphi 0, %s112
      %s115 = sphi 0, %s114
      %s129 = sphi 0, %s115
      %s133 = sphi 0, %s133
      %s135 = sphi 0, %s133
      %s136 = sphi 0, %s135
      %s150 = sphi 0, %s136
      %s154 = sphi 0, %s154
      %s156 = sphi 0, %s154
      %s157 = sphi 0, %s156
      %s171 = sphi 0, %s157
      %s177 = sphi 0, %s179
      %s180 = sphi 0, %s177
      %s181 = sphi 0, %s180
      %s197 = sphi 0, %s181
    $region4: #{net_forward.4} parent=1 // loop_header_branch
      %15 = sbr.rel (%p13) target = $region8
    $region5: #{net_forward.4} parent=1 // loop_body
      %s17 = ssub.s32 %s12, 1
      %s18 = ssub.s32 %s12, 2
      %s25 = sadd.s32 1, %s20
      %p26 = scmp.ge.s32.totalorder %s25, 2
      %s27 = scalar_select %p26, 0, %s25
      %s28 = sadd.s32 1, %s19
      %s29 = scalar_select %p26, %s28, %s19
      %p30 = scmp.ge.s32.totalorder %s29, 2
      %s31 = scalar_select %p30, 0, %s29
      %s32 = ssub.s32 %s19, %s31
      %s33 = ssub.s32 %s20, %s27
      %s34 = sor.u32 %s32, %s33
      %p35 = scmp.eq.s32.totalorder %s34, 0
      %s37 = sadd.s32 %s36, 1
      %s38 = scalar_select %p35, %s36, %s37
      %p41 = pneg %p35
      %p42 = scmp.eq.s32.totalorder %s12, 3
      %p43 = por %p41, %p42
      %p44 = scmp.ne.s32.totalorder %s36, %s39
      %p45 = scmp.eq.s32.totalorder %s12, 0
      %p46 = por %p44, %p45
      %p47 = scmp.ne.s32.totalorder %s36, %s39
      %p48 = scmp.eq.s32.totalorder %s17, 3
      %p49 = por %p47, %p48
      %p50 = scmp.ne.s32.totalorder %s39, %s40
      %p51 = scmp.eq.s32.totalorder %s17, 0
      %p52 = por %p50, %p51
      %p53 = scmp.ne.s32.totalorder %s39, %s40
      %p54 = scmp.eq.s32.totalorder %s18, 3
      %p55 = por %p53, %p54
      %p57 = scmp.ne.s32.totalorder %s40, %s56
      %p58 = scmp.eq.s32.totalorder %s18, 0
      %p59 = por %p57, %p58
      %s60 = ssub.s32 %s20, %s27
      %p61 = scmp.eq.s32.totalorder %s60, 0
      %s63 = sadd.s32 %s62, 1
      %s64 = scalar_select %p61, %s62, %s63
      %p67 = pneg %p61
      %p68 = scmp.eq.s32.totalorder %s12, 3
      %p69 = por %p67, %p68
      %p70 = scmp.ne.s32.totalorder %s62, %s65
      %p71 = scmp.eq.s32.totalorder %s12, 0
      %p72 = por %p70, %p71
      %p73 = scmp.ne.s32.totalorder %s62, %s65
      %p74 = scmp.eq.s32.totalorder %s17, 3
      %p75 = por %p73, %p74
      %p76 = scmp.ne.s32.totalorder %s65, %s66
      %p77 = scmp.eq.s32.totalorder %s17, 0
      %p78 = por %p76, %p77
      %p79 = scmp.ne.s32.totalorder %s65, %s66
      %p80 = scmp.eq.s32.totalorder %s18, 3
      %p81 = por %p79, %p80
      %p83 = scmp.ne.s32.totalorder %s66, %s82
      %p84 = scmp.eq.s32.totalorder %s18, 0
      %p85 = por %p83, %p84
      %s86 = ssub.s32 %s19, %s31
      %p87 = scmp.eq.s32.totalorder %s86, 0
      %s89 = sadd.s32 %s88, 1
      %s90 = scalar_select %p87, %s88, %s89
      %p93 = pneg %p87
      %p94 = scmp.eq.s32.totalorder %s12, 3
      %p95 = por %p93, %p94
      %p96 = scmp.ne.s32.totalorder %s88, %s91
      %p97 = scmp.eq.s32.totalorder %s12, 0
      %p98 = por %p96, %p97
      %p99 = scmp.ne.s32.totalorder %s88, %s91
      %p100 = scmp.eq.s32.totalorder %s17, 3
      %p101 = por %p99, %p100
      %p102 = scmp.ne.s32.totalorder %s91, %s92
      %p103 = scmp.eq.s32.totalorder %s17, 0
      %p104 = por %p102, %p103
      %p105 = scmp.ne.s32.totalorder %s91, %s92
      %p106 = scmp.eq.s32.totalorder %s18, 3
      %p107 = por %p105, %p106
      %p109 = scmp.ne.s32.totalorder %s92, %s108
      %p110 = scmp.eq.s32.totalorder %s18, 0
      %p111 = por %p109, %p110
      %s113 = sadd.s32 %s112, 1
      %p116 = scmp.eq.s32.totalorder %s12, 3
      %p117 = scmp.ne.s32.totalorder %s112, %s114
      %p118 = scmp.eq.s32.totalorder %s12, 0
      %p119 = por %p117, %p118
      %p120 = scmp.ne.s32.totalorder %s112, %s114
      %p121 = scmp.eq.s32.totalorder %s17, 3
      %p122 = por %p120, %p121
      %p123 = scmp.ne.s32.totalorder %s114, %s115
      %p124 = scmp.eq.s32.totalorder %s17, 0
      %p125 = por %p123, %p124
      %p126 = scmp.ne.s32.totalorder %s114, %s115
      %p127 = scmp.eq.s32.totalorder %s18, 3
      %p128 = por %p126, %p127
      %p130 = scmp.ne.s32.totalorder %s115, %s129
      %p131 = scmp.eq.s32.totalorder %s18, 0
      %p132 = por %p130, %p131
      %s134 = sadd.s32 %s133, 1
      %p137 = scmp.eq.s32.totalorder %s12, 3
      %p138 = scmp.ne.s32.totalorder %s133, %s135
      %p139 = scmp.eq.s32.totalorder %s12, 0
      %p140 = por %p138, %p139
      %p141 = scmp.ne.s32.totalorder %s133, %s135
      %p142 = scmp.eq.s32.totalorder %s17, 3
      %p143 = por %p141, %p142
      %p144 = scmp.ne.s32.totalorder %s135, %s136
      %p145 = scmp.eq.s32.totalorder %s17, 0
      %p146 = por %p144, %p145
      %p147 = scmp.ne.s32.totalorder %s135, %s136
      %p148 = scmp.eq.s32.totalorder %s18, 3
      %p149 = por %p147, %p148
      %p151 = scmp.ne.s32.totalorder %s136, %s150
      %p152 = scmp.eq.s32.totalorder %s18, 0
      %p153 = por %p151, %p152
      %s155 = sadd.s32 %s154, 1
      %p158 = scmp.eq.s32.totalorder %s12, 3
      %p159 = scmp.ne.s32.totalorder %s154, %s156
      %p160 = scmp.eq.s32.totalorder %s12, 0
      %p161 = por %p159, %p160
      %p162 = scmp.ne.s32.totalorder %s154, %s156
      %p163 = scmp.eq.s32.totalorder %s17, 3
      %p164 = por %p162, %p163
      %p165 = scmp.ne.s32.totalorder %s156, %s157
      %p166 = scmp.eq.s32.totalorder %s17, 0
      %p167 = por %p165, %p166
      %p168 = scmp.ne.s32.totalorder %s156, %s157
      %p169 = scmp.eq.s32.totalorder %s18, 3
      %p170 = por %p168, %p169
      %p172 = scmp.ne.s32.totalorder %s157, %s171
      %p173 = scmp.eq.s32.totalorder %s18, 0
      %p174 = por %p172, %p173
      %s175 = ssub.s32 %s19, %s31
      %p176 = scmp.eq.s32.totalorder %s175, 0
      %s178 = sadd.s32 %s177, 1
      %s179 = scalar_select %p176, %s177, %s178
      %p182 = pneg %p176
      %p183 = scmp.eq.s32.totalorder %s12, 3
      %p184 = por %p182, %p183
      %p185 = scmp.ne.s32.totalorder %s177, %s180
      %p186 = scmp.eq.s32.totalorder %s12, 0
      %p187 = por %p185, %p186
      %p188 = scmp.ne.s32.totalorder %s177, %s180
      %p189 = scmp.eq.s32.totalorder %s17, 3
      %p190 = por %p188, %p189
      %p191 = scmp.ne.s32.totalorder %s180, %s181
      %p192 = scmp.eq.s32.totalorder %s17, 0
      %p193 = por %p191, %p192
      %p194 = scmp.ne.s32.totalorder %s180, %s181
      %p195 = scmp.eq.s32.totalorder %s18, 3
      %p196 = por %p194, %p195
      %p198 = scmp.ne.s32.totalorder %s181, %s197
      %p199 = scmp.eq.s32.totalorder %s18, 0
      %p200 = por %p198, %p199
      %p201 = scmp.le.s32.totalorder 1, %s12
      %p202 = scmp.lt.s32.totalorder %s12, 5
      %p203 = pnand %p201, %p202
      %p204 = pneg %p203
      // Predicated region
      $region9: #{net_forward.4} parent=5 // pred_check
        _
      $region10: #{net_forward.4} parent=5 // pred_check_branch
        %206 = sbr.rel (%p203) target = $region12
      $region11: #{net_forward.4} parent=5 // pred_region
        %s207 = ssub.s32 %s12, 1
        // Predicated region
        $region13: #{net_forward.4} parent=11 // pred_check
          %p208 = pneg %p125
        $region14: #{net_forward.4} parent=11 // pred_check_branch
          %210 = sbr.rel (%p208) target = $region16
        $region15: #{net_forward.4} parent=11 // pred_region
          _
        $region16: #{net_forward.4} parent=11 // pred_fallthru
          _
        // Predicated region
        $region17: #{net_forward.4} parent=11 // pred_check
          %p211 = pneg %p146
        $region18: #{net_forward.4} parent=11 // pred_check_branch
          %213 = sbr.rel (%p211) target = $region20
        $region19: #{net_forward.4} parent=11 // pred_region
          _
        $region20: #{net_forward.4} parent=11 // pred_fallthru
          _
        // Predicated region
        $region21: #{net_forward.4} parent=11 // pred_check
          %p214 = pneg %p167
        $region22: #{net_forward.4} parent=11 // pred_check_branch
          %216 = sbr.rel (%p214) target = $region24
        $region23: #{net_forward.4} parent=11 // pred_region
          _
        $region24: #{net_forward.4} parent=11 // pred_fallthru
          _
      $region12: #{net_forward.4} parent=5 // pred_fallthru
        _
      %p217 = scmp.lt.s32.totalorder %s12, 4
      // Predicated region
      $region25: #{net_forward.4} parent=5 // pred_check
        %p218 = pneg %p217
      $region26: #{net_forward.4} parent=5 // pred_check_branch
        %220 = sbr.rel (%p218) target = $region28
      $region27: #{net_forward.4} parent=5 // pred_region
        // Predicated region
        $region29: #{net_forward.4} parent=27 // pred_check
          %p221 = pneg %p46
        $region30: #{net_forward.4} parent=27 // pred_check_branch
          %223 = sbr.rel (%p221) target = $region32
        $region31: #{net_forward.4} parent=27 // pred_region
          %s224 = sand.u32 %s36, 1
          %s225 = sand.u32 %s36, 1
          %s226 = smul.addr %s225, 64
          %s227 = scalar_lea.vmem [#allocation3], %s226
          %s228 = smul.u32 16, %s19
          %s229 = smul.addr %s228, 2
          %s230 = sadd.s32 %s20, %s229
          %s231 = smul.addr %s230, 4
          %s232 = scalar_lea.vmem %s0, %s231
          // Predicated region
          $region33: #{net_forward.4} parent=31 // pred_check
            _
          $region34: #{net_forward.4} parent=31 // pred_check_branch
            %234 = sbr.rel (0) target = $region36
          $region35: #{net_forward.4} parent=31 // pred_region
            // Predicated region
            $region37: #{net_forward.4} parent=35 // pred_check
              _
            $region38: #{net_forward.4} parent=35 // pred_check_branch
              %236 = sbr.rel target = $region40
            $region39: #{net_forward.4} parent=35 // pred_region
              // Predicated region
              $region52: #{net_forward.4} parent=39 // pred_check
                _
              $region53: #{net_forward.4} parent=39 // pred_check_branch
                %282 = sbr.rel (0) target = $region55
              $region54: #{net_forward.4} parent=39 // pred_region
                loop: start=0, step=1, limit=1
                $region56: #{net_forward.4} parent=54 // loop_pre_header
                  _
                $region57: #{net_forward.4} parent=54 // loop_header
                  %s284 = sphi 0, %s288
                  %p285 = scmp.ge.s32.totalorder %s284, 1
                  %s289 = sphi %s232, %s232
                  %s290 = sphi %s227, %s227
                $region58: #{net_forward.4} parent=54 // loop_header_branch
                  %287 = sbr.rel (%p285) target = $region62
                $region59: #{net_forward.4} parent=54 // loop_body
                  _
                $region60: #{net_forward.4} parent=54 // loop_footer
                  %s288 = sadd.s32 1, %s284
                $region61: #{net_forward.4} parent=54 // loop_footer_branch
                  %283 = sbr.rel target = $region57
                $region62: #{net_forward.4} parent=54 // loop_exit
                  _
                %s292 = ssub.s32 16, 1
                loop: start=0, step=1, limit=1
                $region63: #{net_forward.4} parent=54 // loop_pre_header
                  _
                $region64: #{net_forward.4} parent=54 // loop_header
                  %s294 = sphi 0, %s298
                  %p295 = scmp.ge.s32.totalorder %s294, 1
                  %s299 = sphi %s232, %s232
                  %s300 = sphi %s227, %s227
                $region65: #{net_forward.4} parent=54 // loop_header_branch
                  %297 = sbr.rel (%p295) target = $region69
                $region66: #{net_forward.4} parent=54 // loop_body
                  %v301 = vld [vmem:[%s299] sm:%s292]
                  %302 = vst [vmem:[%s300] sm:%s292] %v301
                  %v303 = vld [vmem:[%s299 + $0x8] sm:%s292]
                  %304 = vst [vmem:[%s300 + $0x4] sm:%s292] %v303
                  %v305 = vld [vmem:[%s299 + $0x10] sm:%s292]
                  %306 = vst [vmem:[%s300 + $0x8] sm:%s292] %v305
                  %v307 = vld [vmem:[%s299 + $0x18] sm:%s292]
                  %308 = vst [vmem:[%s300 + $0xc] sm:%s292] %v307
                  %v309 = vld [vmem:[%s299 + $0x20] sm:%s292]
                  %310 = vst [vmem:[%s300 + $0x10] sm:%s292] %v309
                  %v311 = vld [vmem:[%s299 + $0x28] sm:%s292]
                  %312 = vst [vmem:[%s300 + $0x14] sm:%s292] %v311
                  %v313 = vld [vmem:[%s299 + $0x30] sm:%s292]
                  %314 = vst [vmem:[%s300 + $0x18] sm:%s292] %v313
                  %v315 = vld [vmem:[%s299 + $0x38] sm:%s292]
                  %316 = vst [vmem:[%s300 + $0x1c] sm:%s292] %v315
                  %v317 = vld [vmem:[%s299 + $0x40] sm:%s292]
                  %318 = vst [vmem:[%s300 + $0x20] sm:%s292] %v317
                  %v319 = vld [vmem:[%s299 + $0x48] sm:%s292]
                  %320 = vst [vmem:[%s300 + $0x24] sm:%s292] %v319
                  %v321 = vld [vmem:[%s299 + $0x50] sm:%s292]
                  %322 = vst [vmem:[%s300 + $0x28] sm:%s292] %v321
                  %v323 = vld [vmem:[%s299 + $0x58] sm:%s292]
                  %324 = vst [vmem:[%s300 + $0x2c] sm:%s292] %v323
                  %v325 = vld [vmem:[%s299 + $0x60] sm:%s292]
                  %326 = vst [vmem:[%s300 + $0x30] sm:%s292] %v325
                  %v327 = vld [vmem:[%s299 + $0x68] sm:%s292]
                  %328 = vst [vmem:[%s300 + $0x34] sm:%s292] %v327
                  %v329 = vld [vmem:[%s299 + $0x70] sm:%s292]
                  %330 = vst [vmem:[%s300 + $0x38] sm:%s292] %v329
                  %v331 = vld [vmem:[%s299 + $0x78] sm:%s292]
                  %332 = vst [vmem:[%s300 + $0x3c] sm:%s292] %v331
                $region67: #{net_forward.4} parent=54 // loop_footer
                  %s298 = sadd.s32 1, %s294
                $region68: #{net_forward.4} parent=54 // loop_footer_branch
                  %293 = sbr.rel target = $region64
                $region69: #{net_forward.4} parent=54 // loop_exit
                  _
              $region55: #{net_forward.4} parent=39 // pred_fallthru
                _
            $region40: #{net_forward.4} parent=35 // pred_fallthru
              _
            // Predicated region
            $region41: #{net_forward.4} parent=35 // pred_check
              _
            $region42: #{net_forward.4} parent=35 // pred_check_branch
              %238 = sbr.rel (0) target = $region44
            $region43: #{net_forward.4} parent=35 // pred_region
              %s240 = ssub.s32 16, 1
              loop: start=0, step=1, limit=1
              $region45: #{net_forward.4} parent=43 // loop_pre_header
                _
              $region46: #{net_forward.4} parent=43 // loop_header
                %s242 = sphi 0, %s246
                %p243 = scmp.ge.s32.totalorder %s242, 1
                %s247 = sphi %s232, %s232
                %s248 = sphi %s227, %s227
              $region47: #{net_forward.4} parent=43 // loop_header_branch
                %245 = sbr.rel (%p243) target = $region51
              $region48: #{net_forward.4} parent=43 // loop_body
                %v249 = vld [vmem:[%s247] sm:%s240]
                %250 = vst [vmem:[%s248] sm:%s240] %v249
                %v251 = vld [vmem:[%s247 + $0x8] sm:%s240]
                %252 = vst [vmem:[%s248 + $0x4] sm:%s240] %v251
                %v253 = vld [vmem:[%s247 + $0x10] sm:%s240]
                %254 = vst [vmem:[%s248 + $0x8] sm:%s240] %v253
                %v255 = vld [vmem:[%s247 + $0x18] sm:%s240]
                %256 = vst [vmem:[%s248 + $0xc] sm:%s240] %v255
                %v257 = vld [vmem:[%s247 + $0x20] sm:%s240]
                %258 = vst [vmem:[%s248 + $0x10] sm:%s240] %v257
                %v259 = vld [vmem:[%s247 + $0x28] sm:%s240]
                %260 = vst [vmem:[%s248 + $0x14] sm:%s240] %v259
                %v261 = vld [vmem:[%s247 + $0x30] sm:%s240]
                %262 = vst [vmem:[%s248 + $0x18] sm:%s240] %v261
                %v263 = vld [vmem:[%s247 + $0x38] sm:%s240]
                %264 = vst [vmem:[%s248 + $0x1c] sm:%s240] %v263
                %v265 = vld [vmem:[%s247 + $0x40] sm:%s240]
                %266 = vst [vmem:[%s248 + $0x20] sm:%s240] %v265
                %v267 = vld [vmem:[%s247 + $0x48] sm:%s240]
                %268 = vst [vmem:[%s248 + $0x24] sm:%s240] %v267
                %v269 = vld [vmem:[%s247 + $0x50] sm:%s240]
                %270 = vst [vmem:[%s248 + $0x28] sm:%s240] %v269
                %v271 = vld [vmem:[%s247 + $0x58] sm:%s240]
                %272 = vst [vmem:[%s248 + $0x2c] sm:%s240] %v271
                %v273 = vld [vmem:[%s247 + $0x60] sm:%s240]
                %274 = vst [vmem:[%s248 + $0x30] sm:%s240] %v273
                %v275 = vld [vmem:[%s247 + $0x68] sm:%s240]
                %276 = vst [vmem:[%s248 + $0x34] sm:%s240] %v275
                %v277 = vld [vmem:[%s247 + $0x70] sm:%s240]
                %278 = vst [vmem:[%s248 + $0x38] sm:%s240] %v277
                %v279 = vld [vmem:[%s247 + $0x78] sm:%s240]
                %280 = vst [vmem:[%s248 + $0x3c] sm:%s240] %v279
              $region49: #{net_forward.4} parent=43 // loop_footer
                %s246 = sadd.s32 1, %s242
              $region50: #{net_forward.4} parent=43 // loop_footer_branch
                %241 = sbr.rel target = $region46
              $region51: #{net_forward.4} parent=43 // loop_exit
                _
            $region44: #{net_forward.4} parent=35 // pred_fallthru
              _
          $region36: #{net_forward.4} parent=31 // pred_fallthru
            _
          %333 = vnop
        $region32: #{net_forward.4} parent=27 // pred_fallthru
          _
        // Predicated region
        $region70: #{net_forward.4} parent=27 // pred_check
          %p334 = pneg %p72
        $region71: #{net_forward.4} parent=27 // pred_check_branch
          %336 = sbr.rel (%p334) target = $region73
        $region72: #{net_forward.4} parent=27 // pred_region
          %s337 = smul.u32 16, %s20
          %p338 = scmp.lt.s32.totalorder %s337, 31
          %s339 = scalar_select %p338, %s337, 31
          %s340 = smul.addr %s339, 8
          %s341 = scalar_lea.vmem %s1, %s340
          %s342 = smul.u32 16, %s20
        $region73: #{net_forward.4} parent=27 // pred_fallthru
          _
        // Predicated region
        $region74: #{net_forward.4} parent=27 // pred_check
          %p343 = pneg %p98
        $region75: #{net_forward.4} parent=27 // pred_check_branch
          %345 = sbr.rel (%p343) target = $region77
        $region76: #{net_forward.4} parent=27 // pred_region
          %s346 = smul.u32 16, %s19
          %p347 = scmp.lt.s32.totalorder %s346, 31
          %s348 = scalar_select %p347, %s346, 31
          %s349 = smul.addr %s348, 8
          %s350 = scalar_lea.vmem %s2, %s349
          %s351 = smul.u32 16, %s19
        $region77: #{net_forward.4} parent=27 // pred_fallthru
          _
      $region28: #{net_forward.4} parent=5 // pred_fallthru
        _
      %p352 = scmp.le.s32.totalorder 1, %s12
      %p353 = scmp.lt.s32.totalorder %s12, 5
      %p354 = pnand %p352, %p353
      %p355 = pneg %p354
      // Predicated region
      $region78: #{net_forward.4} parent=5 // pred_check
        _
      $region79: #{net_forward.4} parent=5 // pred_check_branch
        %357 = sbr.rel (%p354) target = $region81
      $region80: #{net_forward.4} parent=5 // pred_region
        %s358 = ssub.s32 %s12, 1
        %s359 = sand.u32 %s39, 1
        %s360 = sand.u32 %s39, 1
        %s361 = smul.addr %s360, 64
        %s362 = scalar_lea.vmem [#allocation3], %s361
        // Predicated region
        $region82: #{net_forward.4} parent=80 // pred_check
          %p363 = pneg %p52
        $region83: #{net_forward.4} parent=80 // pred_check_branch
          %365 = sbr.rel (%p363) target = $region85
        $region84: #{net_forward.4} parent=80 // pred_region
          _
        $region85: #{net_forward.4} parent=80 // pred_fallthru
          _
        %s366 = sand.u32 %s39, 1
        %s367 = sand.u32 %s39, 1
        %s368 = smul.addr %s367, 64
        %s369 = scalar_lea.vmem [#allocation3], %s368
        %p370 = pneg %p52
        %p371 = pneg %p49
        %s372 = smul.u32 16, %s22
        %p373 = scmp.lt.s32.totalorder %s372, 31
        %s374 = scalar_select %p373, %s372, 31
        %s375 = smul.addr %s374, 8
        %s376 = scalar_lea.vmem %s1, %s375
        %p377 = pneg %p78
        %p378 = pneg %p75
        %s379 = smul.u32 16, %s21
        %p380 = scmp.lt.s32.totalorder %s379, 31
        %s381 = scalar_select %p380, %s379, 31
        %s382 = smul.addr %s381, 8
        %s383 = scalar_lea.vmem %s2, %s382
        %p384 = pneg %p104
        %p385 = pneg %p101
        %p386 = pneg %p125
        %p387 = pneg %p122
        %p388 = pneg %p146
        %p389 = pneg %p143
        %p390 = pneg %p167
        %p391 = pneg %p164
        %p392 = pneg %p193
        %p393 = pneg %p190
        %s394 = smul.u32 16, %s21
        %p395 = scmp.lt.s32.totalorder %s394, 31
        %s396 = scalar_select %p395, %s394, 31
        %s397 = smul.addr %s396, 8
        %s398 = scalar_lea.vmem %s6, %s397
        %s399 = smul.u32 16, %s21
        %s400 = smul.u32 16, %s22
        %p401 = scmp.lt.s32.totalorder %s400, 31
        %s402 = scalar_select %p401, %s400, 31
        %s403 = smul.addr %s402, 8
        %s404 = scalar_lea.vmem %s1, %s403
        %s405 = smul.u32 16, %s22
        %s406 = smul.u32 16, %s21
        %p407 = scmp.lt.s32.totalorder %s406, 31
        %s408 = scalar_select %p407, %s406, 31
        %s409 = smul.addr %s408, 8
        %s410 = scalar_lea.vmem %s2, %s409
        %s411 = smul.u32 16, %s21
        %s412 = smul.u32 16, %s21
        %p413 = scmp.lt.s32.totalorder %s412, 31
        %s414 = scalar_select %p413, %s412, 31
        %s415 = smul.addr %s414, 8
        %s416 = scalar_lea.vmem %s6, %s415
        %s417 = smul.u32 16, %s21
        %p418 = scmp.eq.s32.totalorder %s22, 0
        // Predicated region
        $region86: #{net_forward.4} parent=80 // pred_check
          %p419 = pneg %p418
        $region87: #{net_forward.4} parent=80 // pred_check_branch
          %421 = sbr.rel (%p419) target = $region89
        $region88: #{net_forward.4} parent=80 // pred_region
          %422 = vst [vmem:[#allocation2] sm:$0xff] 0.0
          %423 = vst [vmem:[#allocation2 + $0x8] sm:$0xff] 0.0
          %424 = vst [vmem:[#allocation2 + $0x10] sm:$0xff] 0.0
          %425 = vst [vmem:[#allocation2 + $0x18] sm:$0xff] 0.0
          %426 = vst [vmem:[#allocation2 + $0x20] sm:$0xff] 0.0
          %427 = vst [vmem:[#allocation2 + $0x28] sm:$0xff] 0.0
          %428 = vst [vmem:[#allocation2 + $0x30] sm:$0xff] 0.0
          %429 = vst [vmem:[#allocation2 + $0x38] sm:$0xff] 0.0
          %430 = vst [vmem:[#allocation2 + $0x40] sm:$0xff] 0.0
          %431 = vst [vmem:[#allocation2 + $0x48] sm:$0xff] 0.0
          %432 = vst [vmem:[#allocation2 + $0x50] sm:$0xff] 0.0
          %433 = vst [vmem:[#allocation2 + $0x58] sm:$0xff] 0.0
          %434 = vst [vmem:[#allocation2 + $0x60] sm:$0xff] 0.0
          %435 = vst [vmem:[#allocation2 + $0x68] sm:$0xff] 0.0
          %436 = vst [vmem:[#allocation2 + $0x70] sm:$0xff] 0.0
          %437 = vst [vmem:[#allocation2 + $0x78] sm:$0xff] 0.0
        $region89: #{net_forward.4} parent=80 // pred_fallthru
          _
        %v438 = vld [vmem:[%s404] sm:$0xff]
        %v439 = vld [vmem:[%s404 + $0x8] sm:$0xff]
        %v440 = vld [vmem:[%s404 + $0x10] sm:$0xff]
        %v441 = vld [vmem:[%s404 + $0x18] sm:$0xff]
        %v442 = vld [vmem:[%s404 + $0x20] sm:$0xff]
        %v443 = vld [vmem:[%s404 + $0x28] sm:$0xff]
        %v444 = vld [vmem:[%s404 + $0x30] sm:$0xff]
        %v445 = vld [vmem:[%s404 + $0x38] sm:$0xff]
        %v446 = vld [vmem:[%s404 + $0x40] sm:$0xff]
        %v447 = vld [vmem:[%s404 + $0x48] sm:$0xff]
        %v448 = vld [vmem:[%s404 + $0x50] sm:$0xff]
        %v449 = vld [vmem:[%s404 + $0x58] sm:$0xff]
        %v450 = vld [vmem:[%s404 + $0x60] sm:$0xff]
        %v451 = vld [vmem:[%s404 + $0x68] sm:$0xff]
        %v452 = vld [vmem:[%s404 + $0x70] sm:$0xff]
        %v453 = vld [vmem:[%s404 + $0x78] sm:$0xff]
        %v454 = vld [vmem:[%s3] sm:$0xff]
        %v455 = vld [vmem:[%s3 + $0x8] sm:$0xff]
        %vm456 = vcmask 130048
        %v458 = vsel %vm456, %v438, 0
        %v461 = vsel %vm456, %v439, 0
        %v464 = vsel %vm456, %v440, 0
        %v467 = vsel %vm456, %v441, 0
        %v470 = vsel %vm456, %v442, 0
        %v473 = vsel %vm456, %v443, 0
        %v476 = vsel %vm456, %v444, 0
        %v479 = vsel %vm456, %v445, 0
        %v482 = vsel %vm456, %v446, 0
        %v485 = vsel %vm456, %v447, 0
        %v488 = vsel %vm456, %v448, 0
        %v491 = vsel %vm456, %v449, 0
        %v494 = vsel %vm456, %v450, 0
        %v497 = vsel %vm456, %v451, 0
        %v500 = vsel %vm456, %v452, 0
        %v503 = vsel %vm456, %v453, 0
        %505 = vmatpush.msra.mxu0 0.0
        %506 = vmatpush.msra.mxu0 0.0
        %507 = vmatpush.msra.mxu0 0.0
        %508 = vmatpush.msra.mxu0 0.0
        %509 = vmatpush.msra.mxu0 0.0
        %510 = vmatpush.msra.mxu0 0.0
        %511 = vmatpush.msra.mxu0 0.0
        %512 = vmatpush.msra.mxu0 0.0
        %513 = vmatpush.msra.mxu0 0.0
        %514 = vmatpush.msra.mxu0 0.0
        %515 = vmatpush.msra.mxu0 0.0
        %516 = vmatpush.msra.mxu0 0.0
        %517 = vmatpush.msra.mxu0 0.0
        %518 = vmatpush.msra.mxu0 0.0
        %519 = vmatpush.msra.mxu0 %v455
        %520 = vmatpush.msra.mxu0 %v454
        %521 = vmatmul.f32.gmra.mxu0 %v458
        %v522 = vpop.f32.mrf.mxu0
        %v523 = vadd.f32 0.0, %v522
        %524 = vmatmul.f32.gmra.mxu0 %v461
        %v525 = vpop.f32.mrf.mxu0
        %v526 = vadd.f32 0.0, %v525
        %527 = vmatmul.f32.gmra.mxu0 %v464
        %v528 = vpop.f32.mrf.mxu0
        %v529 = vadd.f32 0.0, %v528
        %530 = vmatmul.f32.gmra.mxu0 %v467
        %v531 = vpop.f32.mrf.mxu0
        %v532 = vadd.f32 0.0, %v531
        %533 = vmatmul.f32.gmra.mxu0 %v470
        %v534 = vpop.f32.mrf.mxu0
        %v535 = vadd.f32 0.0, %v534
        %536 = vmatmul.f32.gmra.mxu0 %v473
        %v537 = vpop.f32.mrf.mxu0
        %v538 = vadd.f32 0.0, %v537
        %539 = vmatmul.f32.gmra.mxu0 %v476
        %v540 = vpop.f32.mrf.mxu0
        %v541 = vadd.f32 0.0, %v540
        %542 = vmatmul.f32.gmra.mxu0 %v479
        %v543 = vpop.f32.mrf.mxu0
        %v544 = vadd.f32 0.0, %v543
        %545 = vmatmul.f32.gmra.mxu0 %v482
        %v546 = vpop.f32.mrf.mxu0
        %v547 = vadd.f32 0.0, %v546
        %548 = vmatmul.f32.gmra.mxu0 %v485
        %v549 = vpop.f32.mrf.mxu0
        %v550 = vadd.f32 0.0, %v549
        %551 = vmatmul.f32.gmra.mxu0 %v488
        %v552 = vpop.f32.mrf.mxu0
        %v553 = vadd.f32 0.0, %v552
        %554 = vmatmul.f32.gmra.mxu0 %v491
        %v555 = vpop.f32.mrf.mxu0
        %v556 = vadd.f32 0.0, %v555
        %557 = vmatmul.f32.gmra.mxu0 %v494
        %v558 = vpop.f32.mrf.mxu0
        %v559 = vadd.f32 0.0, %v558
        %560 = vmatmul.f32.gmra.mxu0 %v497
        %v561 = vpop.f32.mrf.mxu0
        %v562 = vadd.f32 0.0, %v561
        %563 = vmatmul.f32.gmra.mxu0 %v500
        %v564 = vpop.f32.mrf.mxu0
        %v565 = vadd.f32 0.0, %v564
        %566 = vmatmul.f32.gmra.mxu0 %v503
        %v567 = vpop.f32.mrf.mxu0
        %v568 = vadd.f32 0.0, %v567
        %569 = vdwg.mxu0
        %v570 = vld [vmem:[#allocation2] sm:$0xff]
        %v571 = vld [vmem:[#allocation2 + $0x8] sm:$0xff]
        %v572 = vld [vmem:[#allocation2 + $0x10] sm:$0xff]
        %v573 = vld [vmem:[#allocation2 + $0x18] sm:$0xff]
        %v574 = vld [vmem:[#allocation2 + $0x20] sm:$0xff]
        %v575 = vld [vmem:[#allocation2 + $0x28] sm:$0xff]
        %v576 = vld [vmem:[#allocation2 + $0x30] sm:$0xff]
        %v577 = vld [vmem:[#allocation2 + $0x38] sm:$0xff]
        %v578 = vld [vmem:[#allocation2 + $0x40] sm:$0xff]
        %v579 = vld [vmem:[#allocation2 + $0x48] sm:$0xff]
        %v580 = vld [vmem:[#allocation2 + $0x50] sm:$0xff]
        %v581 = vld [vmem:[#allocation2 + $0x58] sm:$0xff]
        %v582 = vld [vmem:[#allocation2 + $0x60] sm:$0xff]
        %v583 = vld [vmem:[#allocation2 + $0x68] sm:$0xff]
        %v584 = vld [vmem:[#allocation2 + $0x70] sm:$0xff]
        %v585 = vld [vmem:[#allocation2 + $0x78] sm:$0xff]
        %v586 = vld [vmem:[%s362] sm:$0xf]
        %v587 = vld [vmem:[%s362 + $0x4] sm:$0xf]
        %v588 = vld [vmem:[%s362 + $0x8] sm:$0xf]
        %v589 = vld [vmem:[%s362 + $0xc] sm:$0xf]
        %v590 = vld [vmem:[%s362 + $0x10] sm:$0xf]
        %v591 = vld [vmem:[%s362 + $0x14] sm:$0xf]
        %v592 = vld [vmem:[%s362 + $0x18] sm:$0xf]
        %v593 = vld [vmem:[%s362 + $0x1c] sm:$0xf]
        %v594 = vld [vmem:[%s362 + $0x20] sm:$0xf]
        %v595 = vld [vmem:[%s362 + $0x24] sm:$0xf]
        %v596 = vld [vmem:[%s362 + $0x28] sm:$0xf]
        %v597 = vld [vmem:[%s362 + $0x2c] sm:$0xf]
        %v598 = vld [vmem:[%s362 + $0x30] sm:$0xf]
        %v599 = vld [vmem:[%s362 + $0x34] sm:$0xf]
        %v600 = vld [vmem:[%s362 + $0x38] sm:$0xf]
        %v601 = vld [vmem:[%s362 + $0x3c] sm:$0xf]
        %v602 = vpack.c.bf16 %v526, %v523
        %v603 = vpack.c.bf16 %v532, %v529
        %v604 = vpack.c.bf16 %v538, %v535
        %v605 = vpack.c.bf16 %v544, %v541
        %v606 = vpack.c.bf16 %v550, %v547
        %v607 = vpack.c.bf16 %v556, %v553
        %v608 = vpack.c.bf16 %v562, %v559
        %v609 = vpack.c.bf16 %v568, %v565
        %v626 = vunpack.c.l.b16 %v586
        %v627 = vunpack.c.l.b16 %v587
        %v628 = vunpack.c.l.b16 %v588
        %v629 = vunpack.c.l.b16 %v589
        %v630 = vunpack.c.l.b16 %v590
        %v631 = vunpack.c.l.b16 %v591
        %v632 = vunpack.c.l.b16 %v592
        %v633 = vunpack.c.l.b16 %v593
        %v634 = vunpack.c.l.b16 %v594
        %v635 = vunpack.c.l.b16 %v595
        %v636 = vunpack.c.l.b16 %v596
        %v637 = vunpack.c.l.b16 %v597
        %v638 = vunpack.c.l.b16 %v598
        %v639 = vunpack.c.l.b16 %v599
        %v640 = vunpack.c.l.b16 %v600
        %v641 = vunpack.c.l.b16 %v601
        %v642 = vpack.c.b16 %v627, %v626
        %v643 = vpack.c.b16 %v629, %v628
        %v644 = vpack.c.b16 %v631, %v630
        %v645 = vpack.c.b16 %v633, %v632
        %v646 = vpack.c.b16 %v635, %v634
        %v647 = vpack.c.b16 %v637, %v636
        %v648 = vpack.c.b16 %v639, %v638
        %v649 = vpack.c.b16 %v641, %v640
        %658 = vmatpush.bf16.msra.mxu0 %v609
        %659 = vmatpush.bf16.msra.mxu0 %v608
        %660 = vmatpush.bf16.msra.mxu0 %v607
        %661 = vmatpush.bf16.msra.mxu0 %v606
        %662 = vmatpush.bf16.msra.mxu0 %v605
        %663 = vmatpush.bf16.msra.mxu0 %v604
        %664 = vmatpush.bf16.msra.mxu0 %v603
        %665 = vmatpush.bf16.msra.mxu0 %v602
        %666 = vmatmul.bf16.gmra.mxu0 %v642
        %v667 = vpop.f32.mrf.mxu0
        %v668 = vadd.f32 0.0, %v667
        %v669 = vpop.f32.mrf.mxu0
        %v670 = vadd.f32 0.0, %v669
        %671 = vmatmul.bf16.gmra.mxu0 %v643
        %v672 = vpop.f32.mrf.mxu0
        %v673 = vadd.f32 0.0, %v672
        %v674 = vpop.f32.mrf.mxu0
        %v675 = vadd.f32 0.0, %v674
        %676 = vmatmul.bf16.gmra.mxu0 %v644
        %v677 = vpop.f32.mrf.mxu0
        %v678 = vadd.f32 0.0, %v677
        %v679 = vpop.f32.mrf.mxu0
        %v680 = vadd.f32 0.0, %v679
        %681 = vmatmul.bf16.gmra.mxu0 %v645
        %v682 = vpop.f32.mrf.mxu0
        %v683 = vadd.f32 0.0, %v682
        %v684 = vpop.f32.mrf.mxu0
        %v685 = vadd.f32 0.0, %v684
        %686 = vmatmul.bf16.gmra.mxu0 %v646
        %v687 = vpop.f32.mrf.mxu0
        %v688 = vadd.f32 0.0, %v687
        %v689 = vpop.f32.mrf.mxu0
        %v690 = vadd.f32 0.0, %v689
        %691 = vmatmul.bf16.gmra.mxu0 %v647
        %v692 = vpop.f32.mrf.mxu0
        %v693 = vadd.f32 0.0, %v692
        %v694 = vpop.f32.mrf.mxu0
        %v695 = vadd.f32 0.0, %v694
        %696 = vmatmul.bf16.gmra.mxu0 %v648
        %v697 = vpop.f32.mrf.mxu0
        %v698 = vadd.f32 0.0, %v697
        %v699 = vpop.f32.mrf.mxu0
        %v700 = vadd.f32 0.0, %v699
        %701 = vmatmul.bf16.gmra.mxu0 %v649
        %v702 = vpop.f32.mrf.mxu0
        %v703 = vadd.f32 0.0, %v702
        %v704 = vpop.f32.mrf.mxu0
        %v705 = vadd.f32 0.0, %v704
        %706 = vdwg.mxu0
        %v707 = vadd.f32 %v570, %v668
        %v708 = vadd.f32 %v571, %v670
        %v709 = vadd.f32 %v572, %v673
        %v710 = vadd.f32 %v573, %v675
        %v711 = vadd.f32 %v574, %v678
        %v712 = vadd.f32 %v575, %v680
        %v713 = vadd.f32 %v576, %v683
        %v714 = vadd.f32 %v577, %v685
        %v715 = vadd.f32 %v578, %v688
        %v716 = vadd.f32 %v579, %v690
        %v717 = vadd.f32 %v580, %v693
        %v718 = vadd.f32 %v581, %v695
        %v719 = vadd.f32 %v582, %v698
        %v720 = vadd.f32 %v583, %v700
        %v721 = vadd.f32 %v584, %v703
        %v722 = vadd.f32 %v585, %v705
        %723 = vst [vmem:[#allocation2] sm:$0xff] %v707
        %724 = vst [vmem:[#allocation2 + $0x8] sm:$0xff] %v708
        %725 = vst [vmem:[#allocation2 + $0x10] sm:$0xff] %v709
        %726 = vst [vmem:[#allocation2 + $0x18] sm:$0xff] %v710
        %727 = vst [vmem:[#allocation2 + $0x20] sm:$0xff] %v711
        %728 = vst [vmem:[#allocation2 + $0x28] sm:$0xff] %v712
        %729 = vst [vmem:[#allocation2 + $0x30] sm:$0xff] %v713
        %730 = vst [vmem:[#allocation2 + $0x38] sm:$0xff] %v714
        %731 = vst [vmem:[#allocation2 + $0x40] sm:$0xff] %v715
        %732 = vst [vmem:[#allocation2 + $0x48] sm:$0xff] %v716
        %733 = vst [vmem:[#allocation2 + $0x50] sm:$0xff] %v717
        %734 = vst [vmem:[#allocation2 + $0x58] sm:$0xff] %v718
        %735 = vst [vmem:[#allocation2 + $0x60] sm:$0xff] %v719
        %736 = vst [vmem:[#allocation2 + $0x68] sm:$0xff] %v720
        %737 = vst [vmem:[#allocation2 + $0x70] sm:$0xff] %v721
        %738 = vst [vmem:[#allocation2 + $0x78] sm:$0xff] %v722
        %p739 = scmp.eq.s32.totalorder %s22, 1
        // Predicated region
        $region90: #{net_forward.4} parent=80 // pred_check
          %p740 = pneg %p739
        $region91: #{net_forward.4} parent=80 // pred_check_branch
          %742 = sbr.rel (%p740) target = $region93
        $region92: #{net_forward.4} parent=80 // pred_region
          %v743 = vld [vmem:[%s410] sm:$0xff]
          %v744 = vld [vmem:[%s410 + $0x8] sm:$0xff]
          %v745 = vld [vmem:[%s410 + $0x10] sm:$0xff]
          %v746 = vld [vmem:[%s410 + $0x18] sm:$0xff]
          %v747 = vld [vmem:[%s410 + $0x20] sm:$0xff]
          %v748 = vld [vmem:[%s410 + $0x28] sm:$0xff]
          %v749 = vld [vmem:[%s410 + $0x30] sm:$0xff]
          %v750 = vld [vmem:[%s410 + $0x38] sm:$0xff]
          %v751 = vld [vmem:[%s410 + $0x40] sm:$0xff]
          %v752 = vld [vmem:[%s410 + $0x48] sm:$0xff]
          %v753 = vld [vmem:[%s410 + $0x50] sm:$0xff]
          %v754 = vld [vmem:[%s410 + $0x58] sm:$0xff]
          %v755 = vld [vmem:[%s410 + $0x60] sm:$0xff]
          %v756 = vld [vmem:[%s410 + $0x68] sm:$0xff]
          %v757 = vld [vmem:[%s410 + $0x70] sm:$0xff]
          %v758 = vld [vmem:[%s410 + $0x78] sm:$0xff]
          %v759 = vld [vmem:[%s4] sm:$0xff]
          %v760 = vld [vmem:[%s4 + $0x8] sm:$0xff]
          %v761 = vld [vmem:[%s5] sm:$0x1]
          %v763 = vperm.slane %v761, 0
          %v766 = vsel %vm456, %v743, 0
          %v769 = vsel %vm456, %v744, 0
          %v772 = vsel %vm456, %v745, 0
          %v775 = vsel %vm456, %v746, 0
          %v778 = vsel %vm456, %v747, 0
          %v781 = vsel %vm456, %v748, 0
          %v784 = vsel %vm456, %v749, 0
          %v787 = vsel %vm456, %v750, 0
          %v790 = vsel %vm456, %v751, 0
          %v793 = vsel %vm456, %v752, 0
          %v796 = vsel %vm456, %v753, 0
          %v799 = vsel %vm456, %v754, 0
          %v802 = vsel %vm456, %v755, 0
          %v805 = vsel %vm456, %v756, 0
          %v808 = vsel %vm456, %v757, 0
          %v811 = vsel %vm456, %v758, 0
          %813 = vmatpush.msra.mxu0 0.0
          %814 = vmatpush.msra.mxu0 0.0
          %815 = vmatpush.msra.mxu0 0.0
          %816 = vmatpush.msra.mxu0 0.0
          %817 = vmatpush.msra.mxu0 0.0
          %818 = vmatpush.msra.mxu0 0.0
          %819 = vmatpush.msra.mxu0 0.0
          %820 = vmatpush.msra.mxu0 0.0
          %821 = vmatpush.msra.mxu0 0.0
          %822 = vmatpush.msra.mxu0 0.0
          %823 = vmatpush.msra.mxu0 0.0
          %824 = vmatpush.msra.mxu0 0.0
          %825 = vmatpush.msra.mxu0 0.0
          %826 = vmatpush.msra.mxu0 0.0
          %827 = vmatpush.msra.mxu0 %v760
          %828 = vmatpush.msra.mxu0 %v759
          %829 = vmatmul.f32.gmra.mxu0 %v766
          %v830 = vpop.f32.mrf.mxu0
          %v831 = vadd.f32 %v763, %v830
          %832 = vmatmul.f32.gmra.mxu0 %v769
          %v833 = vpop.f32.mrf.mxu0
          %v834 = vadd.f32 %v763, %v833
          %835 = vmatmul.f32.gmra.mxu0 %v772
          %v836 = vpop.f32.mrf.mxu0
          %v837 = vadd.f32 %v763, %v836
          %838 = vmatmul.f32.gmra.mxu0 %v775
          %v839 = vpop.f32.mrf.mxu0
          %v840 = vadd.f32 %v763, %v839
          %841 = vmatmul.f32.gmra.mxu0 %v778
          %v842 = vpop.f32.mrf.mxu0
          %v843 = vadd.f32 %v763, %v842
          %844 = vmatmul.f32.gmra.mxu0 %v781
          %v845 = vpop.f32.mrf.mxu0
          %v846 = vadd.f32 %v763, %v845
          %847 = vmatmul.f32.gmra.mxu0 %v784
          %v848 = vpop.f32.mrf.mxu0
          %v849 = vadd.f32 %v763, %v848
          %850 = vmatmul.f32.gmra.mxu0 %v787
          %v851 = vpop.f32.mrf.mxu0
          %v852 = vadd.f32 %v763, %v851
          %853 = vmatmul.f32.gmra.mxu0 %v790
          %v854 = vpop.f32.mrf.mxu0
          %v855 = vadd.f32 %v763, %v854
          %856 = vmatmul.f32.gmra.mxu0 %v793
          %v857 = vpop.f32.mrf.mxu0
          %v858 = vadd.f32 %v763, %v857
          %859 = vmatmul.f32.gmra.mxu0 %v796
          %v860 = vpop.f32.mrf.mxu0
          %v861 = vadd.f32 %v763, %v860
          %862 = vmatmul.f32.gmra.mxu0 %v799
          %v863 = vpop.f32.mrf.mxu0
          %v864 = vadd.f32 %v763, %v863
          %865 = vmatmul.f32.gmra.mxu0 %v802
          %v866 = vpop.f32.mrf.mxu0
          %v867 = vadd.f32 %v763, %v866
          %868 = vmatmul.f32.gmra.mxu0 %v805
          %v869 = vpop.f32.mrf.mxu0
          %v870 = vadd.f32 %v763, %v869
          %871 = vmatmul.f32.gmra.mxu0 %v808
          %v872 = vpop.f32.mrf.mxu0
          %v873 = vadd.f32 %v763, %v872
          %874 = vmatmul.f32.gmra.mxu0 %v811
          %v875 = vpop.f32.mrf.mxu0
          %v876 = vadd.f32 %v763, %v875
          %877 = vdwg.mxu0
          %v878 = vld [vmem:[#allocation2] sm:$0xff]
          %v879 = vld [vmem:[#allocation2 + $0x8] sm:$0xff]
          %v880 = vld [vmem:[#allocation2 + $0x10] sm:$0xff]
          %v881 = vld [vmem:[#allocation2 + $0x18] sm:$0xff]
          %v882 = vld [vmem:[#allocation2 + $0x20] sm:$0xff]
          %v883 = vld [vmem:[#allocation2 + $0x28] sm:$0xff]
          %v884 = vld [vmem:[#allocation2 + $0x30] sm:$0xff]
          %v885 = vld [vmem:[#allocation2 + $0x38] sm:$0xff]
          %v886 = vld [vmem:[#allocation2 + $0x40] sm:$0xff]
          %v887 = vld [vmem:[#allocation2 + $0x48] sm:$0xff]
          %v888 = vld [vmem:[#allocation2 + $0x50] sm:$0xff]
          %v889 = vld [vmem:[#allocation2 + $0x58] sm:$0xff]
          %v890 = vld [vmem:[#allocation2 + $0x60] sm:$0xff]
          %v891 = vld [vmem:[#allocation2 + $0x68] sm:$0xff]
          %v892 = vld [vmem:[#allocation2 + $0x70] sm:$0xff]
          %v893 = vld [vmem:[#allocation2 + $0x78] sm:$0xff]
          %v894 = vadd.f32 %v878, %v831
          %v895 = vadd.f32 %v879, %v834
          %v896 = vadd.f32 %v880, %v837
          %v897 = vadd.f32 %v881, %v840
          %v898 = vadd.f32 %v882, %v843
          %v899 = vadd.f32 %v883, %v846
          %v900 = vadd.f32 %v884, %v849
          %v901 = vadd.f32 %v885, %v852
          %v902 = vadd.f32 %v886, %v855
          %v903 = vadd.f32 %v887, %v858
          %v904 = vadd.f32 %v888, %v861
          %v905 = vadd.f32 %v889, %v864
          %v906 = vadd.f32 %v890, %v867
          %v907 = vadd.f32 %v891, %v870
          %v908 = vadd.f32 %v892, %v873
          %v909 = vadd.f32 %v893, %v876
          %v910 = vmax.f32 %v894, 0.0
          %v911 = vmax.f32 %v895, 0.0
          %v912 = vmax.f32 %v896, 0.0
          %v913 = vmax.f32 %v897, 0.0
          %v914 = vmax.f32 %v898, 0.0
          %v915 = vmax.f32 %v899, 0.0
          %v916 = vmax.f32 %v900, 0.0
          %v917 = vmax.f32 %v901, 0.0
          %v918 = vmax.f32 %v902, 0.0
          %v919 = vmax.f32 %v903, 0.0
          %v920 = vmax.f32 %v904, 0.0
          %v921 = vmax.f32 %v905, 0.0
          %v922 = vmax.f32 %v906, 0.0
          %v923 = vmax.f32 %v907, 0.0
          %v924 = vmax.f32 %v908, 0.0
          %v925 = vmax.f32 %v909, 0.0
          %926 = vst [vmem:[%s416] sm:$0xff] %v910
          %927 = vst [vmem:[%s416 + $0x8] sm:$0xff] %v911
          %928 = vst [vmem:[%s416 + $0x10] sm:$0xff] %v912
          %929 = vst [vmem:[%s416 + $0x18] sm:$0xff] %v913
          %930 = vst [vmem:[%s416 + $0x20] sm:$0xff] %v914
          %931 = vst [vmem:[%s416 + $0x28] sm:$0xff] %v915
          %932 = vst [vmem:[%s416 + $0x30] sm:$0xff] %v916
          %933 = vst [vmem:[%s416 + $0x38] sm:$0xff] %v917
          %934 = vst [vmem:[%s416 + $0x40] sm:$0xff] %v918
          %935 = vst [vmem:[%s416 + $0x48] sm:$0xff] %v919
          %936 = vst [vmem:[%s416 + $0x50] sm:$0xff] %v920
          %937 = vst [vmem:[%s416 + $0x58] sm:$0xff] %v921
          %938 = vst [vmem:[%s416 + $0x60] sm:$0xff] %v922
          %939 = vst [vmem:[%s416 + $0x68] sm:$0xff] %v923
          %940 = vst [vmem:[%s416 + $0x70] sm:$0xff] %v924
          %941 = vst [vmem:[%s416 + $0x78] sm:$0xff] %v925
        $region93: #{net_forward.4} parent=80 // pred_fallthru
          _
        %s942 = smul.u32 16, %s21
        %p943 = scmp.lt.s32.totalorder %s942, 31
        %s944 = scalar_select %p943, %s942, 31
        %s945 = smul.addr %s944, 8
        %s946 = scalar_lea.vmem %s6, %s945
        // Predicated region
        $region94: #{net_forward.4} parent=80 // pred_check
          %p947 = pneg %p190
        $region95: #{net_forward.4} parent=80 // pred_check_branch
          %949 = sbr.rel (%p947) target = $region97
        $region96: #{net_forward.4} parent=80 // pred_region
          %s950 = smul.u32 16, %s21
        $region97: #{net_forward.4} parent=80 // pred_fallthru
          _
      $region81: #{net_forward.4} parent=5 // pred_fallthru
        _
      %p951 = scmp.le.s32.totalorder 2, %s12
      // Predicated region
      $region98: #{net_forward.4} parent=5 // pred_check
        %p952 = pneg %p951
      $region99: #{net_forward.4} parent=5 // pred_check_branch
        %954 = sbr.rel (%p952) target = $region101
      $region100: #{net_forward.4} parent=5 // pred_region
        %s955 = ssub.s32 %s12, 2
        // Predicated region
        $region102: #{net_forward.4} parent=100 // pred_check
          %p956 = pneg %p196
        $region103: #{net_forward.4} parent=100 // pred_check_branch
          %958 = sbr.rel (%p956) target = $region105
        $region104: #{net_forward.4} parent=100 // pred_region
          %s959 = smul.u32 16, %s23
          %p960 = scmp.lt.s32.totalorder %s959, 31
          %s961 = scalar_select %p960, %s959, 31
          %s962 = smul.addr %s961, 8
          %s963 = scalar_lea.vmem %s6, %s962
        $region105: #{net_forward.4} parent=100 // pred_fallthru
          _
      $region101: #{net_forward.4} parent=5 // pred_fallthru
        _
    $region6: #{net_forward.4} parent=1 // loop_footer
      %s16 = sadd.s32 1, %s12
    $region7: #{net_forward.4} parent=1 // loop_footer_branch
      %11 = sbr.rel target = $region3
    $region8: #{net_forward.4} parent=1 // loop_exit
      _

// kernel: net_forward.5
$region0: #{net_forward.5}
  #allocation0 [shape = 'u32[]', space=smem, size = 0x4, offset = 0x4, fixed_abs, tag = 'smem constant byte address 0x4 - core index']
  #allocation1 [shape = 'u32[72,128]{1,0:T(1,128)}', space=vmem, size = 0x9000, scoped, tag = 'internal scratch']
  #allocation2 [shape = 'f32[128,128]{1,0:T(8,128)}', space=vmem, size = 0x10000, scoped, tag = 'scratch operand']
  %s0 = inlined_call_operand.vmem [shape: bf16[256,256], index: 0, kind: input, shape index: {}]
  %s1 = inlined_call_operand.vmem [shape: f32[256,128], index: 1, kind: input, shape index: {}]
  %s2 = inlined_call_operand.vmem [shape: f32[256,16], index: 2, kind: input, shape index: {}]
  %s3 = inlined_call_operand.vmem [shape: f32[128,128], index: 3, kind: input, shape index: {}]
  %s4 = inlined_call_operand.vmem [shape: f32[16,128], index: 4, kind: input, shape index: {}]
  %s5 = inlined_call_operand.vmem [shape: f32[1,128], index: 5, kind: input, shape index: {}]
  %s6 = inlined_call_operand.vmem [shape: f32[256,128], index: 6, kind: output, shape index: {}]
  %s7 = sld [smem:[#allocation0]]
  $region106: #{net_forward.5} parent=0
    _
  %s9 = ssub.s32 1, %s7
  %s10 = scalar_select 0, %s9, %s7
  $region1: #{net_forward.5} parent=0
    #allocation3 [shape = 'u8[65536]{0}', space=vmem, size = 0x10000, scoped, tag = 'input window, operand 0']
    loop: start=0, step=1, limit=6
    $region2: #{net_forward.5} parent=1 // loop_pre_header
      _
    $region3: #{net_forward.5} parent=1 // loop_header
      %s12 = sphi 0, %s16
      %p13 = scmp.ge.s32.totalorder %s12, 6
      %s19 = sphi 0, %s31
      %s20 = sphi 0, %s27
      %s21 = sphi 0, %s19
      %s22 = sphi 0, %s20
      %s23 = sphi 0, %s21
      %s24 = sphi 0, %s22
      %s36 = sphi 0, %s38
      %s39 = sphi 0, %s36
      %s40 = sphi 0, %s39
      %s56 = sphi 0, %s40
      %s62 = sphi 0, %s64
      %s65 = sphi 0, %s62
      %s66 = sphi 0, %s65
      %s82 = sphi 0, %s66
      %s88 = sphi 0, %s90
      %s91 = sphi 0, %s88
      %s92 = sphi 0, %s91
      %s108 = sphi 0, %s92
      %s112 = sphi 0, %s112
      %s114 = sphi 0, %s112
      %s115 = sphi 0, %s114
      %s129 = sphi 0, %s115
      %s133 = sphi 0, %s133
      %s135 = sphi 0, %s133
      %s136 = sphi 0, %s135
      %s150 = sphi 0, %s136
      %s154 = sphi 0, %s154
      %s156 = sphi 0, %s154
      %s157 = sphi 0, %s156
      %s171 = sphi 0, %s157
      %s177 = sphi 0, %s179
      %s180 = sphi 0, %s177
      %s181 = sphi 0, %s180
      %s197 = sphi 0, %s181
    $region4: #{net_forward.5} parent=1 // loop_header_branch
      %15 = sbr.rel (%p13) target = $region8
    $region5: #{net_forward.5} parent=1 // loop_body
      %s17 = ssub.s32 %s12, 1
      %s18 = ssub.s32 %s12, 2
      %s25 = sadd.s32 1, %s20
      %p26 = scmp.ge.s32.totalorder %s25, 2
      %s27 = scalar_select %p26, 0, %s25
      %s28 = sadd.s32 1, %s19
      %s29 = scalar_select %p26, %s28, %s19
      %p30 = scmp.ge.s32.totalorder %s29, 2
      %s31 = scalar_select %p30, 0, %s29
      %s32 = ssub.s32 %s19, %s31
      %s33 = ssub.s32 %s20, %s27
      %s34 = sor.u32 %s32, %s33
      %p35 = scmp.eq.s32.totalorder %s34, 0
      %s37 = sadd.s32 %s36, 1
      %s38 = scalar_select %p35, %s36, %s37
      %p41 = pneg %p35
      %p42 = scmp.eq.s32.totalorder %s12, 3
      %p43 = por %p41, %p42
      %p44 = scmp.ne.s32.totalorder %s36, %s39
      %p45 = scmp.eq.s32.totalorder %s12, 0
      %p46 = por %p44, %p45
      %p47 = scmp.ne.s32.totalorder %s36, %s39
      %p48 = scmp.eq.s32.totalorder %s17, 3
      %p49 = por %p47, %p48
      %p50 = scmp.ne.s32.totalorder %s39, %s40
      %p51 = scmp.eq.s32.totalorder %s17, 0
      %p52 = por %p50, %p51
      %p53 = scmp.ne.s32.totalorder %s39, %s40
      %p54 = scmp.eq.s32.totalorder %s18, 3
      %p55 = por %p53, %p54
      %p57 = scmp.ne.s32.totalorder %s40, %s56
      %p58 = scmp.eq.s32.totalorder %s18, 0
      %p59 = por %p57, %p58
      %s60 = ssub.s32 %s20, %s27
      %p61 = scmp.eq.s32.totalorder %s60, 0
      %s63 = sadd.s32 %s62, 1
      %s64 = scalar_select %p61, %s62, %s63
      %p67 = pneg %p61
      %p68 = scmp.eq.s32.totalorder %s12, 3
      %p69 = por %p67, %p68
      %p70 = scmp.ne.s32.totalorder %s62, %s65
      %p71 = scmp.eq.s32.totalorder %s12, 0
      %p72 = por %p70, %p71
      %p73 = scmp.ne.s32.totalorder %s62, %s65
      %p74 = scmp.eq.s32.totalorder %s17, 3
      %p75 = por %p73, %p74
      %p76 = scmp.ne.s32.totalorder %s65, %s66
      %p77 = scmp.eq.s32.totalorder %s17, 0
      %p78 = por %p76, %p77
      %p79 = scmp.ne.s32.totalorder %s65, %s66
      %p80 = scmp.eq.s32.totalorder %s18, 3
      %p81 = por %p79, %p80
      %p83 = scmp.ne.s32.totalorder %s66, %s82
      %p84 = scmp.eq.s32.totalorder %s18, 0
      %p85 = por %p83, %p84
      %s86 = ssub.s32 %s19, %s31
      %p87 = scmp.eq.s32.totalorder %s86, 0
      %s89 = sadd.s32 %s88, 1
      %s90 = scalar_select %p87, %s88, %s89
      %p93 = pneg %p87
      %p94 = scmp.eq.s32.totalorder %s12, 3
      %p95 = por %p93, %p94
      %p96 = scmp.ne.s32.totalorder %s88, %s91
      %p97 = scmp.eq.s32.totalorder %s12, 0
      %p98 = por %p96, %p97
      %p99 = scmp.ne.s32.totalorder %s88, %s91
      %p100 = scmp.eq.s32.totalorder %s17, 3
      %p101 = por %p99, %p100
      %p102 = scmp.ne.s32.totalorder %s91, %s92
      %p103 = scmp.eq.s32.totalorder %s17, 0
      %p104 = por %p102, %p103
      %p105 = scmp.ne.s32.totalorder %s91, %s92
      %p106 = scmp.eq.s32.totalorder %s18, 3
      %p107 = por %p105, %p106
      %p109 = scmp.ne.s32.totalorder %s92, %s108
      %p110 = scmp.eq.s32.totalorder %s18, 0
      %p111 = por %p109, %p110
      %s113 = sadd.s32 %s112, 1
      %p116 = scmp.eq.s32.totalorder %s12, 3
      %p117 = scmp.ne.s32.totalorder %s112, %s114
      %p118 = scmp.eq.s32.totalorder %s12, 0
      %p119 = por %p117, %p118
      %p120 = scmp.ne.s32.totalorder %s112, %s114
      %p121 = scmp.eq.s32.totalorder %s17, 3
      %p122 = por %p120, %p121
      %p123 = scmp.ne.s32.totalorder %s114, %s115
      %p124 = scmp.eq.s32.totalorder %s17, 0
      %p125 = por %p123, %p124
      %p126 = scmp.ne.s32.totalorder %s114, %s115
      %p127 = scmp.eq.s32.totalorder %s18, 3
      %p128 = por %p126, %p127
      %p130 = scmp.ne.s32.totalorder %s115, %s129
      %p131 = scmp.eq.s32.totalorder %s18, 0
      %p132 = por %p130, %p131
      %s134 = sadd.s32 %s133, 1
      %p137 = scmp.eq.s32.totalorder %s12, 3
      %p138 = scmp.ne.s32.totalorder %s133, %s135
      %p139 = scmp.eq.s32.totalorder %s12, 0
      %p140 = por %p138, %p139
      %p141 = scmp.ne.s32.totalorder %s133, %s135
      %p142 = scmp.eq.s32.totalorder %s17, 3
      %p143 = por %p141, %p142
      %p144 = scmp.ne.s32.totalorder %s135, %s136
      %p145 = scmp.eq.s32.totalorder %s17, 0
      %p146 = por %p144, %p145
      %p147 = scmp.ne.s32.totalorder %s135, %s136
      %p148 = scmp.eq.s32.totalorder %s18, 3
      %p149 = por %p147, %p148
      %p151 = scmp.ne.s32.totalorder %s136, %s150
      %p152 = scmp.eq.s32.totalorder %s18, 0
      %p153 = por %p151, %p152
      %s155 = sadd.s32 %s154, 1
      %p158 = scmp.eq.s32.totalorder %s12, 3
      %p159 = scmp.ne.s32.totalorder %s154, %s156
      %p160 = scmp.eq.s32.totalorder %s12, 0
      %p161 = por %p159, %p160
      %p162 = scmp.ne.s32.totalorder %s154, %s156
      %p163 = scmp.eq.s32.totalorder %s17, 3
      %p164 = por %p162, %p163
      %p165 = scmp.ne.s32.totalorder %s156, %s157
      %p166 = scmp.eq.s32.totalorder %s17, 0
      %p167 = por %p165, %p166
      %p168 = scmp.ne.s32.totalorder %s156, %s157
      %p169 = scmp.eq.s32.totalorder %s18, 3
      %p170 = por %p168, %p169
      %p172 = scmp.ne.s32.totalorder %s157, %s171
      %p173 = scmp.eq.s32.totalorder %s18, 0
      %p174 = por %p172, %p173
      %s175 = ssub.s32 %s19, %s31
      %p176 = scmp.eq.s32.totalorder %s175, 0
      %s178 = sadd.s32 %s177, 1
      %s179 = scalar_select %p176, %s177, %s178
      %p182 = pneg %p176
      %p183 = scmp.eq.s32.totalorder %s12, 3
      %p184 = por %p182, %p183
      %p185 = scmp.ne.s32.totalorder %s177, %s180
      %p186 = scmp.eq.s32.totalorder %s12, 0
      %p187 = por %p185, %p186
      %p188 = scmp.ne.s32.totalorder %s177, %s180
      %p189 = scmp.eq.s32.totalorder %s17, 3
      %p190 = por %p188, %p189
      %p191 = scmp.ne.s32.totalorder %s180, %s181
      %p192 = scmp.eq.s32.totalorder %s17, 0
      %p193 = por %p191, %p192
      %p194 = scmp.ne.s32.totalorder %s180, %s181
      %p195 = scmp.eq.s32.totalorder %s18, 3
      %p196 = por %p194, %p195
      %p198 = scmp.ne.s32.totalorder %s181, %s197
      %p199 = scmp.eq.s32.totalorder %s18, 0
      %p200 = por %p198, %p199
      %p201 = scmp.le.s32.totalorder 1, %s12
      %p202 = scmp.lt.s32.totalorder %s12, 5
      %p203 = pnand %p201, %p202
      %p204 = pneg %p203
      // Predicated region
      $region9: #{net_forward.5} parent=5 // pred_check
        _
      $region10: #{net_forward.5} parent=5 // pred_check_branch
        %206 = sbr.rel (%p203) target = $region12
      $region11: #{net_forward.5} parent=5 // pred_region
        %s207 = ssub.s32 %s12, 1
        // Predicated region
        $region13: #{net_forward.5} parent=11 // pred_check
          %p208 = pneg %p125
        $region14: #{net_forward.5} parent=11 // pred_check_branch
          %210 = sbr.rel (%p208) target = $region16
        $region15: #{net_forward.5} parent=11 // pred_region
          _
        $region16: #{net_forward.5} parent=11 // pred_fallthru
          _
        // Predicated region
        $region17: #{net_forward.5} parent=11 // pred_check
          %p211 = pneg %p146
        $region18: #{net_forward.5} parent=11 // pred_check_branch
          %213 = sbr.rel (%p211) target = $region20
        $region19: #{net_forward.5} parent=11 // pred_region
          _
        $region20: #{net_forward.5} parent=11 // pred_fallthru
          _
        // Predicated region
        $region21: #{net_forward.5} parent=11 // pred_check
          %p214 = pneg %p167
        $region22: #{net_forward.5} parent=11 // pred_check_branch
          %216 = sbr.rel (%p214) target = $region24
        $region23: #{net_forward.5} parent=11 // pred_region
          _
        $region24: #{net_forward.5} parent=11 // pred_fallthru
          _
      $region12: #{net_forward.5} parent=5 // pred_fallthru
        _
      %p217 = scmp.lt.s32.totalorder %s12, 4
      // Predicated region
      $region25: #{net_forward.5} parent=5 // pred_check
        %p218 = pneg %p217
      $region26: #{net_forward.5} parent=5 // pred_check_branch
        %220 = sbr.rel (%p218) target = $region28
      $region27: #{net_forward.5} parent=5 // pred_region
        // Predicated region
        $region29: #{net_forward.5} parent=27 // pred_check
          %p221 = pneg %p46
        $region30: #{net_forward.5} parent=27 // pred_check_branch
          %223 = sbr.rel (%p221) target = $region32
        $region31: #{net_forward.5} parent=27 // pred_region
          %s224 = sand.u32 %s36, 1
          %s225 = sand.u32 %s36, 1
          %s226 = smul.addr %s225, 64
          %s227 = scalar_lea.vmem [#allocation3], %s226
          %s228 = smul.u32 16, %s19
          %s229 = smul.addr %s228, 2
          %s230 = sadd.s32 %s20, %s229
          %s231 = smul.addr %s230, 4
          %s232 = scalar_lea.vmem %s0, %s231
          // Predicated region
          $region33: #{net_forward.5} parent=31 // pred_check
            _
          $region34: #{net_forward.5} parent=31 // pred_check_branch
            %234 = sbr.rel (0) target = $region36
          $region35: #{net_forward.5} parent=31 // pred_region
            // Predicated region
            $region37: #{net_forward.5} parent=35 // pred_check
              _
            $region38: #{net_forward.5} parent=35 // pred_check_branch
              %236 = sbr.rel target = $region40
            $region39: #{net_forward.5} parent=35 // pred_region
              // Predicated region
              $region52: #{net_forward.5} parent=39 // pred_check
                _
              $region53: #{net_forward.5} parent=39 // pred_check_branch
                %282 = sbr.rel (0) target = $region55
              $region54: #{net_forward.5} parent=39 // pred_region
                loop: start=0, step=1, limit=1
                $region56: #{net_forward.5} parent=54 // loop_pre_header
                  _
                $region57: #{net_forward.5} parent=54 // loop_header
                  %s284 = sphi 0, %s288
                  %p285 = scmp.ge.s32.totalorder %s284, 1
                  %s289 = sphi %s232, %s232
                  %s290 = sphi %s227, %s227
                $region58: #{net_forward.5} parent=54 // loop_header_branch
                  %287 = sbr.rel (%p285) target = $region62
                $region59: #{net_forward.5} parent=54 // loop_body
                  _
                $region60: #{net_forward.5} parent=54 // loop_footer
                  %s288 = sadd.s32 1, %s284
                $region61: #{net_forward.5} parent=54 // loop_footer_branch
                  %283 = sbr.rel target = $region57
                $region62: #{net_forward.5} parent=54 // loop_exit
                  _
                %s292 = ssub.s32 16, 1
                loop: start=0, step=1, limit=1
                $region63: #{net_forward.5} parent=54 // loop_pre_header
                  _
                $region64: #{net_forward.5} parent=54 // loop_header
                  %s294 = sphi 0, %s298
                  %p295 = scmp.ge.s32.totalorder %s294, 1
                  %s299 = sphi %s232, %s232
                  %s300 = sphi %s227, %s227
                $region65: #{net_forward.5} parent=54 // loop_header_branch
                  %297 = sbr.rel (%p295) target = $region69
                $region66: #{net_forward.5} parent=54 // loop_body
                  %v301 = vld [vmem:[%s299] sm:%s292]
                  %302 = vst [vmem:[%s300] sm:%s292] %v301
                  %v303 = vld [vmem:[%s299 + $0x8] sm:%s292]
                  %304 = vst [vmem:[%s300 + $0x4] sm:%s292] %v303
                  %v305 = vld [vmem:[%s299 + $0x10] sm:%s292]
                  %306 = vst [vmem:[%s300 + $0x8] sm:%s292] %v305
                  %v307 = vld [vmem:[%s299 + $0x18] sm:%s292]
                  %308 = vst [vmem:[%s300 + $0xc] sm:%s292] %v307
                  %v309 = vld [vmem:[%s299 + $0x20] sm:%s292]
                  %310 = vst [vmem:[%s300 + $0x10] sm:%s292] %v309
                  %v311 = vld [vmem:[%s299 + $0x28] sm:%s292]
                  %312 = vst [vmem:[%s300 + $0x14] sm:%s292] %v311
                  %v313 = vld [vmem:[%s299 + $0x30] sm:%s292]
                  %314 = vst [vmem:[%s300 + $0x18] sm:%s292] %v313
                  %v315 = vld [vmem:[%s299 + $0x38] sm:%s292]
                  %316 = vst [vmem:[%s300 + $0x1c] sm:%s292] %v315
                  %v317 = vld [vmem:[%s299 + $0x40] sm:%s292]
                  %318 = vst [vmem:[%s300 + $0x20] sm:%s292] %v317
                  %v319 = vld [vmem:[%s299 + $0x48] sm:%s292]
                  %320 = vst [vmem:[%s300 + $0x24] sm:%s292] %v319
                  %v321 = vld [vmem:[%s299 + $0x50] sm:%s292]
                  %322 = vst [vmem:[%s300 + $0x28] sm:%s292] %v321
                  %v323 = vld [vmem:[%s299 + $0x58] sm:%s292]
                  %324 = vst [vmem:[%s300 + $0x2c] sm:%s292] %v323
                  %v325 = vld [vmem:[%s299 + $0x60] sm:%s292]
                  %326 = vst [vmem:[%s300 + $0x30] sm:%s292] %v325
                  %v327 = vld [vmem:[%s299 + $0x68] sm:%s292]
                  %328 = vst [vmem:[%s300 + $0x34] sm:%s292] %v327
                  %v329 = vld [vmem:[%s299 + $0x70] sm:%s292]
                  %330 = vst [vmem:[%s300 + $0x38] sm:%s292] %v329
                  %v331 = vld [vmem:[%s299 + $0x78] sm:%s292]
                  %332 = vst [vmem:[%s300 + $0x3c] sm:%s292] %v331
                $region67: #{net_forward.5} parent=54 // loop_footer
                  %s298 = sadd.s32 1, %s294
                $region68: #{net_forward.5} parent=54 // loop_footer_branch
                  %293 = sbr.rel target = $region64
                $region69: #{net_forward.5} parent=54 // loop_exit
                  _
              $region55: #{net_forward.5} parent=39 // pred_fallthru
                _
            $region40: #{net_forward.5} parent=35 // pred_fallthru
              _
            // Predicated region
            $region41: #{net_forward.5} parent=35 // pred_check
              _
            $region42: #{net_forward.5} parent=35 // pred_check_branch
              %238 = sbr.rel (0) target = $region44
            $region43: #{net_forward.5} parent=35 // pred_region
              %s240 = ssub.s32 16, 1
              loop: start=0, step=1, limit=1
              $region45: #{net_forward.5} parent=43 // loop_pre_header
                _
              $region46: #{net_forward.5} parent=43 // loop_header
                %s242 = sphi 0, %s246
                %p243 = scmp.ge.s32.totalorder %s242, 1
                %s247 = sphi %s232, %s232
                %s248 = sphi %s227, %s227
              $region47: #{net_forward.5} parent=43 // loop_header_branch
                %245 = sbr.rel (%p243) target = $region51
              $region48: #{net_forward.5} parent=43 // loop_body
                %v249 = vld [vmem:[%s247] sm:%s240]
                %250 = vst [vmem:[%s248] sm:%s240] %v249
                %v251 = vld [vmem:[%s247 + $0x8] sm:%s240]
                %252 = vst [vmem:[%s248 + $0x4] sm:%s240] %v251
                %v253 = vld [vmem:[%s247 + $0x10] sm:%s240]
                %254 = vst [vmem:[%s248 + $0x8] sm:%s240] %v253
                %v255 = vld [vmem:[%s247 + $0x18] sm:%s240]
                %256 = vst [vmem:[%s248 + $0xc] sm:%s240] %v255
                %v257 = vld [vmem:[%s247 + $0x20] sm:%s240]
                %258 = vst [vmem:[%s248 + $0x10] sm:%s240] %v257
                %v259 = vld [vmem:[%s247 + $0x28] sm:%s240]
                %260 = vst [vmem:[%s248 + $0x14] sm:%s240] %v259
                %v261 = vld [vmem:[%s247 + $0x30] sm:%s240]
                %262 = vst [vmem:[%s248 + $0x18] sm:%s240] %v261
                %v263 = vld [vmem:[%s247 + $0x38] sm:%s240]
                %264 = vst [vmem:[%s248 + $0x1c] sm:%s240] %v263
                %v265 = vld [vmem:[%s247 + $0x40] sm:%s240]
                %266 = vst [vmem:[%s248 + $0x20] sm:%s240] %v265
                %v267 = vld [vmem:[%s247 + $0x48] sm:%s240]
                %268 = vst [vmem:[%s248 + $0x24] sm:%s240] %v267
                %v269 = vld [vmem:[%s247 + $0x50] sm:%s240]
                %270 = vst [vmem:[%s248 + $0x28] sm:%s240] %v269
                %v271 = vld [vmem:[%s247 + $0x58] sm:%s240]
                %272 = vst [vmem:[%s248 + $0x2c] sm:%s240] %v271
                %v273 = vld [vmem:[%s247 + $0x60] sm:%s240]
                %274 = vst [vmem:[%s248 + $0x30] sm:%s240] %v273
                %v275 = vld [vmem:[%s247 + $0x68] sm:%s240]
                %276 = vst [vmem:[%s248 + $0x34] sm:%s240] %v275
                %v277 = vld [vmem:[%s247 + $0x70] sm:%s240]
                %278 = vst [vmem:[%s248 + $0x38] sm:%s240] %v277
                %v279 = vld [vmem:[%s247 + $0x78] sm:%s240]
                %280 = vst [vmem:[%s248 + $0x3c] sm:%s240] %v279
              $region49: #{net_forward.5} parent=43 // loop_footer
                %s246 = sadd.s32 1, %s242
              $region50: #{net_forward.5} parent=43 // loop_footer_branch
                %241 = sbr.rel target = $region46
              $region51: #{net_forward.5} parent=43 // loop_exit
                _
            $region44: #{net_forward.5} parent=35 // pred_fallthru
              _
          $region36: #{net_forward.5} parent=31 // pred_fallthru
            _
          %333 = vnop
        $region32: #{net_forward.5} parent=27 // pred_fallthru
          _
        // Predicated region
        $region70: #{net_forward.5} parent=27 // pred_check
          %p334 = pneg %p72
        $region71: #{net_forward.5} parent=27 // pred_check_branch
          %336 = sbr.rel (%p334) target = $region73
        $region72: #{net_forward.5} parent=27 // pred_region
          %s337 = smul.u32 16, %s20
          %p338 = scmp.lt.s32.totalorder %s337, 31
          %s339 = scalar_select %p338, %s337, 31
          %s340 = smul.addr %s339, 8
          %s341 = scalar_lea.vmem %s1, %s340
          %s342 = smul.u32 16, %s20
        $region73: #{net_forward.5} parent=27 // pred_fallthru
          _
        // Predicated region
        $region74: #{net_forward.5} parent=27 // pred_check
          %p343 = pneg %p98
        $region75: #{net_forward.5} parent=27 // pred_check_branch
          %345 = sbr.rel (%p343) target = $region77
        $region76: #{net_forward.5} parent=27 // pred_region
          %s346 = smul.u32 16, %s19
          %p347 = scmp.lt.s32.totalorder %s346, 31
          %s348 = scalar_select %p347, %s346, 31
          %s349 = smul.addr %s348, 8
          %s350 = scalar_lea.vmem %s2, %s349
          %s351 = smul.u32 16, %s19
        $region77: #{net_forward.5} parent=27 // pred_fallthru
          _
      $region28: #{net_forward.5} parent=5 // pred_fallthru
        _
      %p352 = scmp.le.s32.totalorder 1, %s12
      %p353 = scmp.lt.s32.totalorder %s12, 5
      %p354 = pnand %p352, %p353
      %p355 = pneg %p354
      // Predicated region
      $region78: #{net_forward.5} parent=5 // pred_check
        _
      $region79: #{net_forward.5} parent=5 // pred_check_branch
        %357 = sbr.rel (%p354) target = $region81
      $region80: #{net_forward.5} parent=5 // pred_region
        %s358 = ssub.s32 %s12, 1
        %s359 = sand.u32 %s39, 1
        %s360 = sand.u32 %s39, 1
        %s361 = smul.addr %s360, 64
        %s362 = scalar_lea.vmem [#allocation3], %s361
        // Predicated region
        $region82: #{net_forward.5} parent=80 // pred_check
          %p363 = pneg %p52
        $region83: #{net_forward.5} parent=80 // pred_check_branch
          %365 = sbr.rel (%p363) target = $region85
        $region84: #{net_forward.5} parent=80 // pred_region
          _
        $region85: #{net_forward.5} parent=80 // pred_fallthru
          _
        %s366 = sand.u32 %s39, 1
        %s367 = sand.u32 %s39, 1
        %s368 = smul.addr %s367, 64
        %s369 = scalar_lea.vmem [#allocation3], %s368
        %p370 = pneg %p52
        %p371 = pneg %p49
        %s372 = smul.u32 16, %s22
        %p373 = scmp.lt.s32.totalorder %s372, 31
        %s374 = scalar_select %p373, %s372, 31
        %s375 = smul.addr %s374, 8
        %s376 = scalar_lea.vmem %s1, %s375
        %p377 = pneg %p78
        %p378 = pneg %p75
        %s379 = smul.u32 16, %s21
        %p380 = scmp.lt.s32.totalorder %s379, 31
        %s381 = scalar_select %p380, %s379, 31
        %s382 = smul.addr %s381, 8
        %s383 = scalar_lea.vmem %s2, %s382
        %p384 = pneg %p104
        %p385 = pneg %p101
        %p386 = pneg %p125
        %p387 = pneg %p122
        %p388 = pneg %p146
        %p389 = pneg %p143
        %p390 = pneg %p167
        %p391 = pneg %p164
        %p392 = pneg %p193
        %p393 = pneg %p190
        %s394 = smul.u32 16, %s21
        %p395 = scmp.lt.s32.totalorder %s394, 31
        %s396 = scalar_select %p395, %s394, 31
        %s397 = smul.addr %s396, 8
        %s398 = scalar_lea.vmem %s6, %s397
        %s399 = smul.u32 16, %s21
        %s400 = smul.u32 16, %s22
        %p401 = scmp.lt.s32.totalorder %s400, 31
        %s402 = scalar_select %p401, %s400, 31
        %s403 = smul.addr %s402, 8
        %s404 = scalar_lea.vmem %s1, %s403
        %s405 = smul.u32 16, %s22
        %s406 = smul.u32 16, %s21
        %p407 = scmp.lt.s32.totalorder %s406, 31
        %s408 = scalar_select %p407, %s406, 31
        %s409 = smul.addr %s408, 8
        %s410 = scalar_lea.vmem %s2, %s409
        %s411 = smul.u32 16, %s21
        %s412 = smul.u32 16, %s21
        %p413 = scmp.lt.s32.totalorder %s412, 31
        %s414 = scalar_select %p413, %s412, 31
        %s415 = smul.addr %s414, 8
        %s416 = scalar_lea.vmem %s6, %s415
        %s417 = smul.u32 16, %s21
        %p418 = scmp.eq.s32.totalorder %s22, 0
        // Predicated region
        $region86: #{net_forward.5} parent=80 // pred_check
          %p419 = pneg %p418
        $region87: #{net_forward.5} parent=80 // pred_check_branch
          %421 = sbr.rel (%p419) target = $region89
        $region88: #{net_forward.5} parent=80 // pred_region
          %422 = vst [vmem:[#allocation2] sm:$0xff] 0.0
          %423 = vst [vmem:[#allocation2 + $0x8] sm:$0xff] 0.0
          %424 = vst [vmem:[#allocation2 + $0x10] sm:$0xff] 0.0
          %425 = vst [vmem:[#allocation2 + $0x18] sm:$0xff] 0.0
          %426 = vst [vmem:[#allocation2 + $0x20] sm:$0xff] 0.0
          %427 = vst [vmem:[#allocation2 + $0x28] sm:$0xff] 0.0
          %428 = vst [vmem:[#allocation2 + $0x30] sm:$0xff] 0.0
          %429 = vst [vmem:[#allocation2 + $0x38] sm:$0xff] 0.0
          %430 = vst [vmem:[#allocation2 + $0x40] sm:$0xff] 0.0
          %431 = vst [vmem:[#allocation2 + $0x48] sm:$0xff] 0.0
          %432 = vst [vmem:[#allocation2 + $0x50] sm:$0xff] 0.0
          %433 = vst [vmem:[#allocation2 + $0x58] sm:$0xff] 0.0
          %434 = vst [vmem:[#allocation2 + $0x60] sm:$0xff] 0.0
          %435 = vst [vmem:[#allocation2 + $0x68] sm:$0xff] 0.0
          %436 = vst [vmem:[#allocation2 + $0x70] sm:$0xff] 0.0
          %437 = vst [vmem:[#allocation2 + $0x78] sm:$0xff] 0.0
        $region89: #{net_forward.5} parent=80 // pred_fallthru
          _
        %v438 = vld [vmem:[%s404] sm:$0xff]
        %v439 = vld [vmem:[%s404 + $0x8] sm:$0xff]
        %v440 = vld [vmem:[%s404 + $0x10] sm:$0xff]
        %v441 = vld [vmem:[%s404 + $0x18] sm:$0xff]
        %v442 = vld [vmem:[%s404 + $0x20] sm:$0xff]
        %v443 = vld [vmem:[%s404 + $0x28] sm:$0xff]
        %v444 = vld [vmem:[%s404 + $0x30] sm:$0xff]
        %v445 = vld [vmem:[%s404 + $0x38] sm:$0xff]
        %v446 = vld [vmem:[%s404 + $0x40] sm:$0xff]
        %v447 = vld [vmem:[%s404 + $0x48] sm:$0xff]
        %v448 = vld [vmem:[%s404 + $0x50] sm:$0xff]
        %v449 = vld [vmem:[%s404 + $0x58] sm:$0xff]
        %v450 = vld [vmem:[%s404 + $0x60] sm:$0xff]
        %v451 = vld [vmem:[%s404 + $0x68] sm:$0xff]
        %v452 = vld [vmem:[%s404 + $0x70] sm:$0xff]
        %v453 = vld [vmem:[%s404 + $0x78] sm:$0xff]
        %v454 = vld [vmem:[%s3] sm:$0xff]
        %v455 = vld [vmem:[%s3 + $0x8] sm:$0xff]
        %v456 = vld [vmem:[%s3 + $0x10] sm:$0xff]
        %v457 = vld [vmem:[%s3 + $0x18] sm:$0xff]
        %v458 = vld [vmem:[%s3 + $0x20] sm:$0xff]
        %v459 = vld [vmem:[%s3 + $0x28] sm:$0xff]
        %v460 = vld [vmem:[%s3 + $0x30] sm:$0xff]
        %v461 = vld [vmem:[%s3 + $0x38] sm:$0xff]
        %v462 = vld [vmem:[%s3 + $0x40] sm:$0xff]
        %v463 = vld [vmem:[%s3 + $0x48] sm:$0xff]
        %v464 = vld [vmem:[%s3 + $0x50] sm:$0xff]
        %v465 = vld [vmem:[%s3 + $0x58] sm:$0xff]
        %v466 = vld [vmem:[%s3 + $0x60] sm:$0xff]
        %v467 = vld [vmem:[%s3 + $0x68] sm:$0xff]
        %v468 = vld [vmem:[%s3 + $0x70] sm:$0xff]
        %v469 = vld [vmem:[%s3 + $0x78] sm:$0xff]
        %470 = vmatpush.msra.mxu0 %v469
        %471 = vmatpush.msra.mxu0 %v468
        %472 = vmatpush.msra.mxu0 %v467
        %473 = vmatpush.msra.mxu0 %v466
        %474 = vmatpush.msra.mxu0 %v465
        %475 = vmatpush.msra.mxu0 %v464
        %476 = vmatpush.msra.mxu0 %v463
        %477 = vmatpush.msra.mxu0 %v462
        %478 = vmatpush.msra.mxu0 %v461
        %479 = vmatpush.msra.mxu0 %v460
        %480 = vmatpush.msra.mxu0 %v459
        %481 = vmatpush.msra.mxu0 %v458
        %482 = vmatpush.msra.mxu0 %v457
        %483 = vmatpush.msra.mxu0 %v456
        %484 = vmatpush.msra.mxu0 %v455
        %485 = vmatpush.msra.mxu0 %v454
        %486 = vmatmul.f32.gmra.mxu0 %v438
        %v487 = vpop.f32.mrf.mxu0
        %v488 = vadd.f32 0.0, %v487
        %489 = vmatmul.f32.gmra.mxu0 %v439
        %v490 = vpop.f32.mrf.mxu0
        %v491 = vadd.f32 0.0, %v490
        %492 = vmatmul.f32.gmra.mxu0 %v440
        %v493 = vpop.f32.mrf.mxu0
        %v494 = vadd.f32 0.0, %v493
        %495 = vmatmul.f32.gmra.mxu0 %v441
        %v496 = vpop.f32.mrf.mxu0
        %v497 = vadd.f32 0.0, %v496
        %498 = vmatmul.f32.gmra.mxu0 %v442
        %v499 = vpop.f32.mrf.mxu0
        %v500 = vadd.f32 0.0, %v499
        %501 = vmatmul.f32.gmra.mxu0 %v443
        %v502 = vpop.f32.mrf.mxu0
        %v503 = vadd.f32 0.0, %v502
        %504 = vmatmul.f32.gmra.mxu0 %v444
        %v505 = vpop.f32.mrf.mxu0
        %v506 = vadd.f32 0.0, %v505
        %507 = vmatmul.f32.gmra.mxu0 %v445
        %v508 = vpop.f32.mrf.mxu0
        %v509 = vadd.f32 0.0, %v508
        %510 = vmatmul.f32.gmra.mxu0 %v446
        %v511 = vpop.f32.mrf.mxu0
        %v512 = vadd.f32 0.0, %v511
        %513 = vmatmul.f32.gmra.mxu0 %v447
        %v514 = vpop.f32.mrf.mxu0
        %v515 = vadd.f32 0.0, %v514
        %516 = vmatmul.f32.gmra.mxu0 %v448
        %v517 = vpop.f32.mrf.mxu0
        %v518 = vadd.f32 0.0, %v517
        %519 = vmatmul.f32.gmra.mxu0 %v449
        %v520 = vpop.f32.mrf.mxu0
        %v521 = vadd.f32 0.0, %v520
        %522 = vmatmul.f32.gmra.mxu0 %v450
        %v523 = vpop.f32.mrf.mxu0
        %v524 = vadd.f32 0.0, %v523
        %525 = vmatmul.f32.gmra.mxu0 %v451
        %v526 = vpop.f32.mrf.mxu0
        %v527 = vadd.f32 0.0, %v526
        %528 = vmatmul.f32.gmra.mxu0 %v452
        %v529 = vpop.f32.mrf.mxu0
        %v530 = vadd.f32 0.0, %v529
        %531 = vmatmul.f32.gmra.mxu0 %v453
        %v532 = vpop.f32.mrf.mxu0
        %v533 = vadd.f32 0.0, %v532
        %534 = vdwg.mxu0
        %v535 = vld [vmem:[#allocation2] sm:$0xff]
        %v536 = vld [vmem:[#allocation2 + $0x8] sm:$0xff]
        %v537 = vld [vmem:[#allocation2 + $0x10] sm:$0xff]
        %v538 = vld [vmem:[#allocation2 + $0x18] sm:$0xff]
        %v539 = vld [vmem:[#allocation2 + $0x20] sm:$0xff]
        %v540 = vld [vmem:[#allocation2 + $0x28] sm:$0xff]
        %v541 = vld [vmem:[#allocation2 + $0x30] sm:$0xff]
        %v542 = vld [vmem:[#allocation2 + $0x38] sm:$0xff]
        %v543 = vld [vmem:[#allocation2 + $0x40] sm:$0xff]
        %v544 = vld [vmem:[#allocation2 + $0x48] sm:$0xff]
        %v545 = vld [vmem:[#allocation2 + $0x50] sm:$0xff]
        %v546 = vld [vmem:[#allocation2 + $0x58] sm:$0xff]
        %v547 = vld [vmem:[#allocation2 + $0x60] sm:$0xff]
        %v548 = vld [vmem:[#allocation2 + $0x68] sm:$0xff]
        %v549 = vld [vmem:[#allocation2 + $0x70] sm:$0xff]
        %v550 = vld [vmem:[#allocation2 + $0x78] sm:$0xff]
        %v551 = vld [vmem:[%s362] sm:$0xf]
        %v552 = vld [vmem:[%s362 + $0x4] sm:$0xf]
        %v553 = vld [vmem:[%s362 + $0x8] sm:$0xf]
        %v554 = vld [vmem:[%s362 + $0xc] sm:$0xf]
        %v555 = vld [vmem:[%s362 + $0x10] sm:$0xf]
        %v556 = vld [vmem:[%s362 + $0x14] sm:$0xf]
        %v557 = vld [vmem:[%s362 + $0x18] sm:$0xf]
        %v558 = vld [vmem:[%s362 + $0x1c] sm:$0xf]
        %v559 = vld [vmem:[%s362 + $0x20] sm:$0xf]
        %v560 = vld [vmem:[%s362 + $0x24] sm:$0xf]
        %v561 = vld [vmem:[%s362 + $0x28] sm:$0xf]
        %v562 = vld [vmem:[%s362 + $0x2c] sm:$0xf]
        %v563 = vld [vmem:[%s362 + $0x30] sm:$0xf]
        %v564 = vld [vmem:[%s362 + $0x34] sm:$0xf]
        %v565 = vld [vmem:[%s362 + $0x38] sm:$0xf]
        %v566 = vld [vmem:[%s362 + $0x3c] sm:$0xf]
        %v567 = vpack.c.bf16 %v491, %v488
        %v568 = vpack.c.bf16 %v497, %v494
        %v569 = vpack.c.bf16 %v503, %v500
        %v570 = vpack.c.bf16 %v509, %v506
        %v571 = vpack.c.bf16 %v515, %v512
        %v572 = vpack.c.bf16 %v521, %v518
        %v573 = vpack.c.bf16 %v527, %v524
        %v574 = vpack.c.bf16 %v533, %v530
        %v591 = vunpack.c.l.b16 %v551
        %v592 = vunpack.c.l.b16 %v552
        %v593 = vunpack.c.l.b16 %v553
        %v594 = vunpack.c.l.b16 %v554
        %v595 = vunpack.c.l.b16 %v555
        %v596 = vunpack.c.l.b16 %v556
        %v597 = vunpack.c.l.b16 %v557
        %v598 = vunpack.c.l.b16 %v558
        %v599 = vunpack.c.l.b16 %v559
        %v600 = vunpack.c.l.b16 %v560
        %v601 = vunpack.c.l.b16 %v561
        %v602 = vunpack.c.l.b16 %v562
        %v603 = vunpack.c.l.b16 %v563
        %v604 = vunpack.c.l.b16 %v564
        %v605 = vunpack.c.l.b16 %v565
        %v606 = vunpack.c.l.b16 %v566
        %v607 = vpack.c.b16 %v592, %v591
        %v608 = vpack.c.b16 %v594, %v593
        %v609 = vpack.c.b16 %v596, %v595
        %v610 = vpack.c.b16 %v598, %v597
        %v611 = vpack.c.b16 %v600, %v599
        %v612 = vpack.c.b16 %v602, %v601
        %v613 = vpack.c.b16 %v604, %v603
        %v614 = vpack.c.b16 %v606, %v605
        %623 = vmatpush.bf16.msra.mxu0 %v574
        %624 = vmatpush.bf16.msra.mxu0 %v573
        %625 = vmatpush.bf16.msra.mxu0 %v572
        %626 = vmatpush.bf16.msra.mxu0 %v571
        %627 = vmatpush.bf16.msra.mxu0 %v570
        %628 = vmatpush.bf16.msra.mxu0 %v569
        %629 = vmatpush.bf16.msra.mxu0 %v568
        %630 = vmatpush.bf16.msra.mxu0 %v567
        %631 = vmatmul.bf16.gmra.mxu0 %v607
        %v632 = vpop.f32.mrf.mxu0
        %v633 = vadd.f32 0.0, %v632
        %v634 = vpop.f32.mrf.mxu0
        %v635 = vadd.f32 0.0, %v634
        %636 = vmatmul.bf16.gmra.mxu0 %v608
        %v637 = vpop.f32.mrf.mxu0
        %v638 = vadd.f32 0.0, %v637
        %v639 = vpop.f32.mrf.mxu0
        %v640 = vadd.f32 0.0, %v639
        %641 = vmatmul.bf16.gmra.mxu0 %v609
        %v642 = vpop.f32.mrf.mxu0
        %v643 = vadd.f32 0.0, %v642
        %v644 = vpop.f32.mrf.mxu0
        %v645 = vadd.f32 0.0, %v644
        %646 = vmatmul.bf16.gmra.mxu0 %v610
        %v647 = vpop.f32.mrf.mxu0
        %v648 = vadd.f32 0.0, %v647
        %v649 = vpop.f32.mrf.mxu0
        %v650 = vadd.f32 0.0, %v649
        %651 = vmatmul.bf16.gmra.mxu0 %v611
        %v652 = vpop.f32.mrf.mxu0
        %v653 = vadd.f32 0.0, %v652
        %v654 = vpop.f32.mrf.mxu0
        %v655 = vadd.f32 0.0, %v654
        %656 = vmatmul.bf16.gmra.mxu0 %v612
        %v657 = vpop.f32.mrf.mxu0
        %v658 = vadd.f32 0.0, %v657
        %v659 = vpop.f32.mrf.mxu0
        %v660 = vadd.f32 0.0, %v659
        %661 = vmatmul.bf16.gmra.mxu0 %v613
        %v662 = vpop.f32.mrf.mxu0
        %v663 = vadd.f32 0.0, %v662
        %v664 = vpop.f32.mrf.mxu0
        %v665 = vadd.f32 0.0, %v664
        %666 = vmatmul.bf16.gmra.mxu0 %v614
        %v667 = vpop.f32.mrf.mxu0
        %v668 = vadd.f32 0.0, %v667
        %v669 = vpop.f32.mrf.mxu0
        %v670 = vadd.f32 0.0, %v669
        %671 = vdwg.mxu0
        %v672 = vadd.f32 %v535, %v633
        %v673 = vadd.f32 %v536, %v635
        %v674 = vadd.f32 %v537, %v638
        %v675 = vadd.f32 %v538, %v640
        %v676 = vadd.f32 %v539, %v643
        %v677 = vadd.f32 %v540, %v645
        %v678 = vadd.f32 %v541, %v648
        %v679 = vadd.f32 %v542, %v650
        %v680 = vadd.f32 %v543, %v653
        %v681 = vadd.f32 %v544, %v655
        %v682 = vadd.f32 %v545, %v658
        %v683 = vadd.f32 %v546, %v660
        %v684 = vadd.f32 %v547, %v663
        %v685 = vadd.f32 %v548, %v665
        %v686 = vadd.f32 %v549, %v668
        %v687 = vadd.f32 %v550, %v670
        %688 = vst [vmem:[#allocation2] sm:$0xff] %v672
        %689 = vst [vmem:[#allocation2 + $0x8] sm:$0xff] %v673
        %690 = vst [vmem:[#allocation2 + $0x10] sm:$0xff] %v674
        %691 = vst [vmem:[#allocation2 + $0x18] sm:$0xff] %v675
        %692 = vst [vmem:[#allocation2 + $0x20] sm:$0xff] %v676
        %693 = vst [vmem:[#allocation2 + $0x28] sm:$0xff] %v677
        %694 = vst [vmem:[#allocation2 + $0x30] sm:$0xff] %v678
        %695 = vst [vmem:[#allocation2 + $0x38] sm:$0xff] %v679
        %696 = vst [vmem:[#allocation2 + $0x40] sm:$0xff] %v680
        %697 = vst [vmem:[#allocation2 + $0x48] sm:$0xff] %v681
        %698 = vst [vmem:[#allocation2 + $0x50] sm:$0xff] %v682
        %699 = vst [vmem:[#allocation2 + $0x58] sm:$0xff] %v683
        %700 = vst [vmem:[#allocation2 + $0x60] sm:$0xff] %v684
        %701 = vst [vmem:[#allocation2 + $0x68] sm:$0xff] %v685
        %702 = vst [vmem:[#allocation2 + $0x70] sm:$0xff] %v686
        %703 = vst [vmem:[#allocation2 + $0x78] sm:$0xff] %v687
        %p704 = scmp.eq.s32.totalorder %s22, 1
        // Predicated region
        $region90: #{net_forward.5} parent=80 // pred_check
          %p705 = pneg %p704
        $region91: #{net_forward.5} parent=80 // pred_check_branch
          %707 = sbr.rel (%p705) target = $region93
        $region92: #{net_forward.5} parent=80 // pred_region
          %v708 = vld [vmem:[%s410] sm:$0xff]
          %v709 = vld [vmem:[%s410 + $0x8] sm:$0xff]
          %v710 = vld [vmem:[%s410 + $0x10] sm:$0xff]
          %v711 = vld [vmem:[%s410 + $0x18] sm:$0xff]
          %v712 = vld [vmem:[%s410 + $0x20] sm:$0xff]
          %v713 = vld [vmem:[%s410 + $0x28] sm:$0xff]
          %v714 = vld [vmem:[%s410 + $0x30] sm:$0xff]
          %v715 = vld [vmem:[%s410 + $0x38] sm:$0xff]
          %v716 = vld [vmem:[%s410 + $0x40] sm:$0xff]
          %v717 = vld [vmem:[%s410 + $0x48] sm:$0xff]
          %v718 = vld [vmem:[%s410 + $0x50] sm:$0xff]
          %v719 = vld [vmem:[%s410 + $0x58] sm:$0xff]
          %v720 = vld [vmem:[%s410 + $0x60] sm:$0xff]
          %v721 = vld [vmem:[%s410 + $0x68] sm:$0xff]
          %v722 = vld [vmem:[%s410 + $0x70] sm:$0xff]
          %v723 = vld [vmem:[%s410 + $0x78] sm:$0xff]
          %v724 = vld [vmem:[%s4] sm:$0xff]
          %v725 = vld [vmem:[%s4 + $0x8] sm:$0xff]
          %v726 = vld [vmem:[%s5] sm:$0x1]
          %v728 = vperm.slane %v726, 0
          %vm730 = vcmask 130048
          %v732 = vsel %vm730, %v708, 0
          %v735 = vsel %vm730, %v709, 0
          %v738 = vsel %vm730, %v710, 0
          %v741 = vsel %vm730, %v711, 0
          %v744 = vsel %vm730, %v712, 0
          %v747 = vsel %vm730, %v713, 0
          %v750 = vsel %vm730, %v714, 0
          %v753 = vsel %vm730, %v715, 0
          %v756 = vsel %vm730, %v716, 0
          %v759 = vsel %vm730, %v717, 0
          %v762 = vsel %vm730, %v718, 0
          %v765 = vsel %vm730, %v719, 0
          %v768 = vsel %vm730, %v720, 0
          %v771 = vsel %vm730, %v721, 0
          %v774 = vsel %vm730, %v722, 0
          %v777 = vsel %vm730, %v723, 0
          %779 = vmatpush.msra.mxu0 0.0
          %780 = vmatpush.msra.mxu0 0.0
          %781 = vmatpush.msra.mxu0 0.0
          %782 = vmatpush.msra.mxu0 0.0
          %783 = vmatpush.msra.mxu0 0.0
          %784 = vmatpush.msra.mxu0 0.0
          %785 = vmatpush.msra.mxu0 0.0
          %786 = vmatpush.msra.mxu0 0.0
          %787 = vmatpush.msra.mxu0 0.0
          %788 = vmatpush.msra.mxu0 0.0
          %789 = vmatpush.msra.mxu0 0.0
          %790 = vmatpush.msra.mxu0 0.0
          %791 = vmatpush.msra.mxu0 0.0
          %792 = vmatpush.msra.mxu0 0.0
          %793 = vmatpush.msra.mxu0 %v725
          %794 = vmatpush.msra.mxu0 %v724
          %795 = vmatmul.f32.gmra.mxu0 %v732
          %v796 = vpop.f32.mrf.mxu0
          %v797 = vadd.f32 %v728, %v796
          %798 = vmatmul.f32.gmra.mxu0 %v735
          %v799 = vpop.f32.mrf.mxu0
          %v800 = vadd.f32 %v728, %v799
          %801 = vmatmul.f32.gmra.mxu0 %v738
          %v802 = vpop.f32.mrf.mxu0
          %v803 = vadd.f32 %v728, %v802
          %804 = vmatmul.f32.gmra.mxu0 %v741
          %v805 = vpop.f32.mrf.mxu0
          %v806 = vadd.f32 %v728, %v805
          %807 = vmatmul.f32.gmra.mxu0 %v744
          %v808 = vpop.f32.mrf.mxu0
          %v809 = vadd.f32 %v728, %v808
          %810 = vmatmul.f32.gmra.mxu0 %v747
          %v811 = vpop.f32.mrf.mxu0
          %v812 = vadd.f32 %v728, %v811
          %813 = vmatmul.f32.gmra.mxu0 %v750
          %v814 = vpop.f32.mrf.mxu0
          %v815 = vadd.f32 %v728, %v814
          %816 = vmatmul.f32.gmra.mxu0 %v753
          %v817 = vpop.f32.mrf.mxu0
          %v818 = vadd.f32 %v728, %v817
          %819 = vmatmul.f32.gmra.mxu0 %v756
          %v820 = vpop.f32.mrf.mxu0
          %v821 = vadd.f32 %v728, %v820
          %822 = vmatmul.f32.gmra.mxu0 %v759
          %v823 = vpop.f32.mrf.mxu0
          %v824 = vadd.f32 %v728, %v823
          %825 = vmatmul.f32.gmra.mxu0 %v762
          %v826 = vpop.f32.mrf.mxu0
          %v827 = vadd.f32 %v728, %v826
          %828 = vmatmul.f32.gmra.mxu0 %v765
          %v829 = vpop.f32.mrf.mxu0
          %v830 = vadd.f32 %v728, %v829
          %831 = vmatmul.f32.gmra.mxu0 %v768
          %v832 = vpop.f32.mrf.mxu0
          %v833 = vadd.f32 %v728, %v832
          %834 = vmatmul.f32.gmra.mxu0 %v771
          %v835 = vpop.f32.mrf.mxu0
          %v836 = vadd.f32 %v728, %v835
          %837 = vmatmul.f32.gmra.mxu0 %v774
          %v838 = vpop.f32.mrf.mxu0
          %v839 = vadd.f32 %v728, %v838
          %840 = vmatmul.f32.gmra.mxu0 %v777
          %v841 = vpop.f32.mrf.mxu0
          %v842 = vadd.f32 %v728, %v841
          %843 = vdwg.mxu0
          %v844 = vld [vmem:[#allocation2] sm:$0xff]
          %v845 = vld [vmem:[#allocation2 + $0x8] sm:$0xff]
          %v846 = vld [vmem:[#allocation2 + $0x10] sm:$0xff]
          %v847 = vld [vmem:[#allocation2 + $0x18] sm:$0xff]
          %v848 = vld [vmem:[#allocation2 + $0x20] sm:$0xff]
          %v849 = vld [vmem:[#allocation2 + $0x28] sm:$0xff]
          %v850 = vld [vmem:[#allocation2 + $0x30] sm:$0xff]
          %v851 = vld [vmem:[#allocation2 + $0x38] sm:$0xff]
          %v852 = vld [vmem:[#allocation2 + $0x40] sm:$0xff]
          %v853 = vld [vmem:[#allocation2 + $0x48] sm:$0xff]
          %v854 = vld [vmem:[#allocation2 + $0x50] sm:$0xff]
          %v855 = vld [vmem:[#allocation2 + $0x58] sm:$0xff]
          %v856 = vld [vmem:[#allocation2 + $0x60] sm:$0xff]
          %v857 = vld [vmem:[#allocation2 + $0x68] sm:$0xff]
          %v858 = vld [vmem:[#allocation2 + $0x70] sm:$0xff]
          %v859 = vld [vmem:[#allocation2 + $0x78] sm:$0xff]
          %v860 = vadd.f32 %v844, %v797
          %v861 = vadd.f32 %v845, %v800
          %v862 = vadd.f32 %v846, %v803
          %v863 = vadd.f32 %v847, %v806
          %v864 = vadd.f32 %v848, %v809
          %v865 = vadd.f32 %v849, %v812
          %v866 = vadd.f32 %v850, %v815
          %v867 = vadd.f32 %v851, %v818
          %v868 = vadd.f32 %v852, %v821
          %v869 = vadd.f32 %v853, %v824
          %v870 = vadd.f32 %v854, %v827
          %v871 = vadd.f32 %v855, %v830
          %v872 = vadd.f32 %v856, %v833
          %v873 = vadd.f32 %v857, %v836
          %v874 = vadd.f32 %v858, %v839
          %v875 = vadd.f32 %v859, %v842
          %v876 = vmax.f32 %v860, 0.0
          %v877 = vmax.f32 %v861, 0.0
          %v878 = vmax.f32 %v862, 0.0
          %v879 = vmax.f32 %v863, 0.0
          %v880 = vmax.f32 %v864, 0.0
          %v881 = vmax.f32 %v865, 0.0
          %v882 = vmax.f32 %v866, 0.0
          %v883 = vmax.f32 %v867, 0.0
          %v884 = vmax.f32 %v868, 0.0
          %v885 = vmax.f32 %v869, 0.0
          %v886 = vmax.f32 %v870, 0.0
          %v887 = vmax.f32 %v871, 0.0
          %v888 = vmax.f32 %v872, 0.0
          %v889 = vmax.f32 %v873, 0.0
          %v890 = vmax.f32 %v874, 0.0
          %v891 = vmax.f32 %v875, 0.0
          %892 = vst [vmem:[%s416] sm:$0xff] %v876
          %893 = vst [vmem:[%s416 + $0x8] sm:$0xff] %v877
          %894 = vst [vmem:[%s416 + $0x10] sm:$0xff] %v878
          %895 = vst [vmem:[%s416 + $0x18] sm:$0xff] %v879
          %896 = vst [vmem:[%s416 + $0x20] sm:$0xff] %v880
          %897 = vst [vmem:[%s416 + $0x28] sm:$0xff] %v881
          %898 = vst [vmem:[%s416 + $0x30] sm:$0xff] %v882
          %899 = vst [vmem:[%s416 + $0x38] sm:$0xff] %v883
          %900 = vst [vmem:[%s416 + $0x40] sm:$0xff] %v884
          %901 = vst [vmem:[%s416 + $0x48] sm:$0xff] %v885
          %902 = vst [vmem:[%s416 + $0x50] sm:$0xff] %v886
          %903 = vst [vmem:[%s416 + $0x58] sm:$0xff] %v887
          %904 = vst [vmem:[%s416 + $0x60] sm:$0xff] %v888
          %905 = vst [vmem:[%s416 + $0x68] sm:$0xff] %v889
          %906 = vst [vmem:[%s416 + $0x70] sm:$0xff] %v890
          %907 = vst [vmem:[%s416 + $0x78] sm:$0xff] %v891
        $region93: #{net_forward.5} parent=80 // pred_fallthru
          _
        %s908 = smul.u32 16, %s21
        %p909 = scmp.lt.s32.totalorder %s908, 31
        %s910 = scalar_select %p909, %s908, 31
        %s911 = smul.addr %s910, 8
        %s912 = scalar_lea.vmem %s6, %s911
        // Predicated region
        $region94: #{net_forward.5} parent=80 // pred_check
          %p913 = pneg %p190
        $region95: #{net_forward.5} parent=80 // pred_check_branch
          %915 = sbr.rel (%p913) target = $region97
        $region96: #{net_forward.5} parent=80 // pred_region
          %s916 = smul.u32 16, %s21
        $region97: #{net_forward.5} parent=80 // pred_fallthru
          _
      $region81: #{net_forward.5} parent=5 // pred_fallthru
        _
      %p917 = scmp.le.s32.totalorder 2, %s12
      // Predicated region
      $region98: #{net_forward.5} parent=5 // pred_check
        %p918 = pneg %p917
      $region99: #{net_forward.5} parent=5 // pred_check_branch
        %920 = sbr.rel (%p918) target = $region101
      $region100: #{net_forward.5} parent=5 // pred_region
        %s921 = ssub.s32 %s12, 2
        // Predicated region
        $region102: #{net_forward.5} parent=100 // pred_check
          %p922 = pneg %p196
        $region103: #{net_forward.5} parent=100 // pred_check_branch
          %924 = sbr.rel (%p922) target = $region105
        $region104: #{net_forward.5} parent=100 // pred_region
          %s925 = smul.u32 16, %s23
          %p926 = scmp.lt.s32.totalorder %s925, 31
          %s927 = scalar_select %p926, %s925, 31
          %s928 = smul.addr %s927, 8
          %s929 = scalar_lea.vmem %s6, %s928
        $region105: #{net_forward.5} parent=100 // pred_fallthru
          _
      $region101: #{net_forward.5} parent=5 // pred_fallthru
        _
    $region6: #{net_forward.5} parent=1 // loop_footer
      %s16 = sadd.s32 1, %s12
    $region7: #{net_forward.5} parent=1 // loop_footer_branch
      %11 = sbr.rel target = $region3
    $region8: #{net_forward.5} parent=1 // loop_exit
      _

// kernel: net_forward.6
$region0: #{net_forward.6}
  #allocation0 [shape = 'u32[]', space=smem, size = 0x4, offset = 0x4, fixed_abs, tag = 'smem constant byte address 0x4 - core index']
  #allocation1 [shape = 'u32[72,128]{1,0:T(1,128)}', space=vmem, size = 0x9000, scoped, tag = 'internal scratch']
  #allocation2 [shape = 'f32[128,128]{1,0:T(8,128)}', space=vmem, size = 0x10000, scoped, tag = 'scratch operand']
  %s0 = inlined_call_operand.vmem [shape: bf16[256,256], index: 0, kind: input, shape index: {}]
  %s1 = inlined_call_operand.vmem [shape: f32[256,128], index: 1, kind: input, shape index: {}, may-alias: {1,2}]
  %s2 = inlined_call_operand.vmem [shape: f32[256,128], index: 2, kind: input, shape index: {}, may-alias: {1,2}]
  %s3 = inlined_call_operand.vmem [shape: f32[128,128], index: 3, kind: input, shape index: {}]
  %s4 = inlined_call_operand.vmem [shape: f32[128,128], index: 4, kind: input, shape index: {}]
  %s5 = inlined_call_operand.vmem [shape: f32[1,128], index: 5, kind: input, shape index: {}]
  %s6 = inlined_call_operand.vmem [shape: f32[256,128], index: 6, kind: output, shape index: {}]
  %s7 = sld [smem:[#allocation0]]
  $region106: #{net_forward.6} parent=0
    _
  %s9 = ssub.s32 1, %s7
  %s10 = scalar_select 0, %s9, %s7
  $region1: #{net_forward.6} parent=0
    #allocation3 [shape = 'u8[65536]{0}', space=vmem, size = 0x10000, scoped, tag = 'input window, operand 0']
    loop: start=0, step=1, limit=6
    $region2: #{net_forward.6} parent=1 // loop_pre_header
      _
    $region3: #{net_forward.6} parent=1 // loop_header
      %s12 = sphi 0, %s16
      %p13 = scmp.ge.s32.totalorder %s12, 6
      %s19 = sphi 0, %s31
      %s20 = sphi 0, %s27
      %s21 = sphi 0, %s19
      %s22 = sphi 0, %s20
      %s23 = sphi 0, %s21
      %s24 = sphi 0, %s22
      %s36 = sphi 0, %s38
      %s39 = sphi 0, %s36
      %s40 = sphi 0, %s39
      %s56 = sphi 0, %s40
      %s62 = sphi 0, %s64
      %s65 = sphi 0, %s62
      %s66 = sphi 0, %s65
      %s82 = sphi 0, %s66
      %s88 = sphi 0, %s90
      %s91 = sphi 0, %s88
      %s92 = sphi 0, %s91
      %s108 = sphi 0, %s92
      %s112 = sphi 0, %s112
      %s114 = sphi 0, %s112
      %s115 = sphi 0, %s114
      %s129 = sphi 0, %s115
      %s133 = sphi 0, %s133
      %s135 = sphi 0, %s133
      %s136 = sphi 0, %s135
      %s150 = sphi 0, %s136
      %s154 = sphi 0, %s154
      %s156 = sphi 0, %s154
      %s157 = sphi 0, %s156
      %s171 = sphi 0, %s157
      %s177 = sphi 0, %s179
      %s180 = sphi 0, %s177
      %s181 = sphi 0, %s180
      %s197 = sphi 0, %s181
    $region4: #{net_forward.6} parent=1 // loop_header_branch
      %15 = sbr.rel (%p13) target = $region8
    $region5: #{net_forward.6} parent=1 // loop_body
      %s17 = ssub.s32 %s12, 1
      %s18 = ssub.s32 %s12, 2
      %s25 = sadd.s32 1, %s20
      %p26 = scmp.ge.s32.totalorder %s25, 2
      %s27 = scalar_select %p26, 0, %s25
      %s28 = sadd.s32 1, %s19
      %s29 = scalar_select %p26, %s28, %s19
      %p30 = scmp.ge.s32.totalorder %s29, 2
      %s31 = scalar_select %p30, 0, %s29
      %s32 = ssub.s32 %s19, %s31
      %s33 = ssub.s32 %s20, %s27
      %s34 = sor.u32 %s32, %s33
      %p35 = scmp.eq.s32.totalorder %s34, 0
      %s37 = sadd.s32 %s36, 1
      %s38 = scalar_select %p35, %s36, %s37
      %p41 = pneg %p35
      %p42 = scmp.eq.s32.totalorder %s12, 3
      %p43 = por %p41, %p42
      %p44 = scmp.ne.s32.totalorder %s36, %s39
      %p45 = scmp.eq.s32.totalorder %s12, 0
      %p46 = por %p44, %p45
      %p47 = scmp.ne.s32.totalorder %s36, %s39
      %p48 = scmp.eq.s32.totalorder %s17, 3
      %p49 = por %p47, %p48
      %p50 = scmp.ne.s32.totalorder %s39, %s40
      %p51 = scmp.eq.s32.totalorder %s17, 0
      %p52 = por %p50, %p51
      %p53 = scmp.ne.s32.totalorder %s39, %s40
      %p54 = scmp.eq.s32.totalorder %s18, 3
      %p55 = por %p53, %p54
      %p57 = scmp.ne.s32.totalorder %s40, %s56
      %p58 = scmp.eq.s32.totalorder %s18, 0
      %p59 = por %p57, %p58
      %s60 = ssub.s32 %s20, %s27
      %p61 = scmp.eq.s32.totalorder %s60, 0
      %s63 = sadd.s32 %s62, 1
      %s64 = scalar_select %p61, %s62, %s63
      %p67 = pneg %p61
      %p68 = scmp.eq.s32.totalorder %s12, 3
      %p69 = por %p67, %p68
      %p70 = scmp.ne.s32.totalorder %s62, %s65
      %p71 = scmp.eq.s32.totalorder %s12, 0
      %p72 = por %p70, %p71
      %p73 = scmp.ne.s32.totalorder %s62, %s65
      %p74 = scmp.eq.s32.totalorder %s17, 3
      %p75 = por %p73, %p74
      %p76 = scmp.ne.s32.totalorder %s65, %s66
      %p77 = scmp.eq.s32.totalorder %s17, 0
      %p78 = por %p76, %p77
      %p79 = scmp.ne.s32.totalorder %s65, %s66
      %p80 = scmp.eq.s32.totalorder %s18, 3
      %p81 = por %p79, %p80
      %p83 = scmp.ne.s32.totalorder %s66, %s82
      %p84 = scmp.eq.s32.totalorder %s18, 0
      %p85 = por %p83, %p84
      %s86 = ssub.s32 %s19, %s31
      %p87 = scmp.eq.s32.totalorder %s86, 0
      %s89 = sadd.s32 %s88, 1
      %s90 = scalar_select %p87, %s88, %s89
      %p93 = pneg %p87
      %p94 = scmp.eq.s32.totalorder %s12, 3
      %p95 = por %p93, %p94
      %p96 = scmp.ne.s32.totalorder %s88, %s91
      %p97 = scmp.eq.s32.totalorder %s12, 0
      %p98 = por %p96, %p97
      %p99 = scmp.ne.s32.totalorder %s88, %s91
      %p100 = scmp.eq.s32.totalorder %s17, 3
      %p101 = por %p99, %p100
      %p102 = scmp.ne.s32.totalorder %s91, %s92
      %p103 = scmp.eq.s32.totalorder %s17, 0
      %p104 = por %p102, %p103
      %p105 = scmp.ne.s32.totalorder %s91, %s92
      %p106 = scmp.eq.s32.totalorder %s18, 3
      %p107 = por %p105, %p106
      %p109 = scmp.ne.s32.totalorder %s92, %s108
      %p110 = scmp.eq.s32.totalorder %s18, 0
      %p111 = por %p109, %p110
      %s113 = sadd.s32 %s112, 1
      %p116 = scmp.eq.s32.totalorder %s12, 3
      %p117 = scmp.ne.s32.totalorder %s112, %s114
      %p118 = scmp.eq.s32.totalorder %s12, 0
      %p119 = por %p117, %p118
      %p120 = scmp.ne.s32.totalorder %s112, %s114
      %p121 = scmp.eq.s32.totalorder %s17, 3
      %p122 = por %p120, %p121
      %p123 = scmp.ne.s32.totalorder %s114, %s115
      %p124 = scmp.eq.s32.totalorder %s17, 0
      %p125 = por %p123, %p124
      %p126 = scmp.ne.s32.totalorder %s114, %s115
      %p127 = scmp.eq.s32.totalorder %s18, 3
      %p128 = por %p126, %p127
      %p130 = scmp.ne.s32.totalorder %s115, %s129
      %p131 = scmp.eq.s32.totalorder %s18, 0
      %p132 = por %p130, %p131
      %s134 = sadd.s32 %s133, 1
      %p137 = scmp.eq.s32.totalorder %s12, 3
      %p138 = scmp.ne.s32.totalorder %s133, %s135
      %p139 = scmp.eq.s32.totalorder %s12, 0
      %p140 = por %p138, %p139
      %p141 = scmp.ne.s32.totalorder %s133, %s135
      %p142 = scmp.eq.s32.totalorder %s17, 3
      %p143 = por %p141, %p142
      %p144 = scmp.ne.s32.totalorder %s135, %s136
      %p145 = scmp.eq.s32.totalorder %s17, 0
      %p146 = por %p144, %p145
      %p147 = scmp.ne.s32.totalorder %s135, %s136
      %p148 = scmp.eq.s32.totalorder %s18, 3
      %p149 = por %p147, %p148
      %p151 = scmp.ne.s32.totalorder %s136, %s150
      %p152 = scmp.eq.s32.totalorder %s18, 0
      %p153 = por %p151, %p152
      %s155 = sadd.s32 %s154, 1
      %p158 = scmp.eq.s32.totalorder %s12, 3
      %p159 = scmp.ne.s32.totalorder %s154, %s156
      %p160 = scmp.eq.s32.totalorder %s12, 0
      %p161 = por %p159, %p160
      %p162 = scmp.ne.s32.totalorder %s154, %s156
      %p163 = scmp.eq.s32.totalorder %s17, 3
      %p164 = por %p162, %p163
      %p165 = scmp.ne.s32.totalorder %s156, %s157
      %p166 = scmp.eq.s32.totalorder %s17, 0
      %p167 = por %p165, %p166
      %p168 = scmp.ne.s32.totalorder %s156, %s157
      %p169 = scmp.eq.s32.totalorder %s18, 3
      %p170 = por %p168, %p169
      %p172 = scmp.ne.s32.totalorder %s157, %s171
      %p173 = scmp.eq.s32.totalorder %s18, 0
      %p174 = por %p172, %p173
      %s175 = ssub.s32 %s19, %s31
      %p176 = scmp.eq.s32.totalorder %s175, 0
      %s178 = sadd.s32 %s177, 1
      %s179 = scalar_select %p176, %s177, %s178
      %p182 = pneg %p176
      %p183 = scmp.eq.s32.totalorder %s12, 3
      %p184 = por %p182, %p183
      %p185 = scmp.ne.s32.totalorder %s177, %s180
      %p186 = scmp.eq.s32.totalorder %s12, 0
      %p187 = por %p185, %p186
      %p188 = scmp.ne.s32.totalorder %s177, %s180
      %p189 = scmp.eq.s32.totalorder %s17, 3
      %p190 = por %p188, %p189
      %p191 = scmp.ne.s32.totalorder %s180, %s181
      %p192 = scmp.eq.s32.totalorder %s17, 0
      %p193 = por %p191, %p192
      %p194 = scmp.ne.s32.totalorder %s180, %s181
      %p195 = scmp.eq.s32.totalorder %s18, 3
      %p196 = por %p194, %p195
      %p198 = scmp.ne.s32.totalorder %s181, %s197
      %p199 = scmp.eq.s32.totalorder %s18, 0
      %p200 = por %p198, %p199
      %p201 = scmp.le.s32.totalorder 1, %s12
      %p202 = scmp.lt.s32.totalorder %s12, 5
      %p203 = pnand %p201, %p202
      %p204 = pneg %p203
      // Predicated region
      $region9: #{net_forward.6} parent=5 // pred_check
        _
      $region10: #{net_forward.6} parent=5 // pred_check_branch
        %206 = sbr.rel (%p203) target = $region12
      $region11: #{net_forward.6} parent=5 // pred_region
        %s207 = ssub.s32 %s12, 1
        // Predicated region
        $region13: #{net_forward.6} parent=11 // pred_check
          %p208 = pneg %p125
        $region14: #{net_forward.6} parent=11 // pred_check_branch
          %210 = sbr.rel (%p208) target = $region16
        $region15: #{net_forward.6} parent=11 // pred_region
          _
        $region16: #{net_forward.6} parent=11 // pred_fallthru
          _
        // Predicated region
        $region17: #{net_forward.6} parent=11 // pred_check
          %p211 = pneg %p146
        $region18: #{net_forward.6} parent=11 // pred_check_branch
          %213 = sbr.rel (%p211) target = $region20
        $region19: #{net_forward.6} parent=11 // pred_region
          _
        $region20: #{net_forward.6} parent=11 // pred_fallthru
          _
        // Predicated region
        $region21: #{net_forward.6} parent=11 // pred_check
          %p214 = pneg %p167
        $region22: #{net_forward.6} parent=11 // pred_check_branch
          %216 = sbr.rel (%p214) target = $region24
        $region23: #{net_forward.6} parent=11 // pred_region
          _
        $region24: #{net_forward.6} parent=11 // pred_fallthru
          _
      $region12: #{net_forward.6} parent=5 // pred_fallthru
        _
      %p217 = scmp.lt.s32.totalorder %s12, 4
      // Predicated region
      $region25: #{net_forward.6} parent=5 // pred_check
        %p218 = pneg %p217
      $region26: #{net_forward.6} parent=5 // pred_check_branch
        %220 = sbr.rel (%p218) target = $region28
      $region27: #{net_forward.6} parent=5 // pred_region
        // Predicated region
        $region29: #{net_forward.6} parent=27 // pred_check
          %p221 = pneg %p46
        $region30: #{net_forward.6} parent=27 // pred_check_branch
          %223 = sbr.rel (%p221) target = $region32
        $region31: #{net_forward.6} parent=27 // pred_region
          %s224 = sand.u32 %s36, 1
          %s225 = sand.u32 %s36, 1
          %s226 = smul.addr %s225, 64
          %s227 = scalar_lea.vmem [#allocation3], %s226
          %s228 = smul.u32 16, %s19
          %s229 = smul.addr %s228, 2
          %s230 = sadd.s32 %s20, %s229
          %s231 = smul.addr %s230, 4
          %s232 = scalar_lea.vmem %s0, %s231
          // Predicated region
          $region33: #{net_forward.6} parent=31 // pred_check
            _
          $region34: #{net_forward.6} parent=31 // pred_check_branch
            %234 = sbr.rel (0) target = $region36
          $region35: #{net_forward.6} parent=31 // pred_region
            // Predicated region
            $region37: #{net_forward.6} parent=35 // pred_check
              _
            $region38: #{net_forward.6} parent=35 // pred_check_branch
              %236 = sbr.rel target = $region40
            $region39: #{net_forward.6} parent=35 // pred_region
              // Predicated region
              $region52: #{net_forward.6} parent=39 // pred_check
                _
              $region53: #{net_forward.6} parent=39 // pred_check_branch
                %282 = sbr.rel (0) target = $region55
              $region54: #{net_forward.6} parent=39 // pred_region
                loop: start=0, step=1, limit=1
                $region56: #{net_forward.6} parent=54 // loop_pre_header
                  _
                $region57: #{net_forward.6} parent=54 // loop_header
                  %s284 = sphi 0, %s288
                  %p285 = scmp.ge.s32.totalorder %s284, 1
                  %s289 = sphi %s232, %s232
                  %s290 = sphi %s227, %s227
                $region58: #{net_forward.6} parent=54 // loop_header_branch
                  %287 = sbr.rel (%p285) target = $region62
                $region59: #{net_forward.6} parent=54 // loop_body
                  _
                $region60: #{net_forward.6} parent=54 // loop_footer
                  %s288 = sadd.s32 1, %s284
                $region61: #{net_forward.6} parent=54 // loop_footer_branch
                  %283 = sbr.rel target = $region57
                $region62: #{net_forward.6} parent=54 // loop_exit
                  _
                %s292 = ssub.s32 16, 1
                loop: start=0, step=1, limit=1
                $region63: #{net_forward.6} parent=54 // loop_pre_header
                  _
                $region64: #{net_forward.6} parent=54 // loop_header
                  %s294 = sphi 0, %s298
                  %p295 = scmp.ge.s32.totalorder %s294, 1
                  %s299 = sphi %s232, %s232
                  %s300 = sphi %s227, %s227
                $region65: #{net_forward.6} parent=54 // loop_header_branch
                  %297 = sbr.rel (%p295) target = $region69
                $region66: #{net_forward.6} parent=54 // loop_body
                  %v301 = vld [vmem:[%s299] sm:%s292]
                  %302 = vst [vmem:[%s300] sm:%s292] %v301
                  %v303 = vld [vmem:[%s299 + $0x8] sm:%s292]
                  %304 = vst [vmem:[%s300 + $0x4] sm:%s292] %v303
                  %v305 = vld [vmem:[%s299 + $0x10] sm:%s292]
                  %306 = vst [vmem:[%s300 + $0x8] sm:%s292] %v305
                  %v307 = vld [vmem:[%s299 + $0x18] sm:%s292]
                  %308 = vst [vmem:[%s300 + $0xc] sm:%s292] %v307
                  %v309 = vld [vmem:[%s299 + $0x20] sm:%s292]
                  %310 = vst [vmem:[%s300 + $0x10] sm:%s292] %v309
                  %v311 = vld [vmem:[%s299 + $0x28] sm:%s292]
                  %312 = vst [vmem:[%s300 + $0x14] sm:%s292] %v311
                  %v313 = vld [vmem:[%s299 + $0x30] sm:%s292]
                  %314 = vst [vmem:[%s300 + $0x18] sm:%s292] %v313
                  %v315 = vld [vmem:[%s299 + $0x38] sm:%s292]
                  %316 = vst [vmem:[%s300 + $0x1c] sm:%s292] %v315
                  %v317 = vld [vmem:[%s299 + $0x40] sm:%s292]
                  %318 = vst [vmem:[%s300 + $0x20] sm:%s292] %v317
                  %v319 = vld [vmem:[%s299 + $0x48] sm:%s292]
                  %320 = vst [vmem:[%s300 + $0x24] sm:%s292] %v319
                  %v321 = vld [vmem:[%s299 + $0x50] sm:%s292]
                  %322 = vst [vmem:[%s300 + $0x28] sm:%s292] %v321
                  %v323 = vld [vmem:[%s299 + $0x58] sm:%s292]
                  %324 = vst [vmem:[%s300 + $0x2c] sm:%s292] %v323
                  %v325 = vld [vmem:[%s299 + $0x60] sm:%s292]
                  %326 = vst [vmem:[%s300 + $0x30] sm:%s292] %v325
                  %v327 = vld [vmem:[%s299 + $0x68] sm:%s292]
                  %328 = vst [vmem:[%s300 + $0x34] sm:%s292] %v327
                  %v329 = vld [vmem:[%s299 + $0x70] sm:%s292]
                  %330 = vst [vmem:[%s300 + $0x38] sm:%s292] %v329
                  %v331 = vld [vmem:[%s299 + $0x78] sm:%s292]
                  %332 = vst [vmem:[%s300 + $0x3c] sm:%s292] %v331
                $region67: #{net_forward.6} parent=54 // loop_footer
                  %s298 = sadd.s32 1, %s294
                $region68: #{net_forward.6} parent=54 // loop_footer_branch
                  %293 = sbr.rel target = $region64
                $region69: #{net_forward.6} parent=54 // loop_exit
                  _
              $region55: #{net_forward.6} parent=39 // pred_fallthru
                _
            $region40: #{net_forward.6} parent=35 // pred_fallthru
              _
            // Predicated region
            $region41: #{net_forward.6} parent=35 // pred_check
              _
            $region42: #{net_forward.6} parent=35 // pred_check_branch
              %238 = sbr.rel (0) target = $region44
            $region43: #{net_forward.6} parent=35 // pred_region
              %s240 = ssub.s32 16, 1
              loop: start=0, step=1, limit=1
              $region45: #{net_forward.6} parent=43 // loop_pre_header
                _
              $region46: #{net_forward.6} parent=43 // loop_header
                %s242 = sphi 0, %s246
                %p243 = scmp.ge.s32.totalorder %s242, 1
                %s247 = sphi %s232, %s232
                %s248 = sphi %s227, %s227
              $region47: #{net_forward.6} parent=43 // loop_header_branch
                %245 = sbr.rel (%p243) target = $region51
              $region48: #{net_forward.6} parent=43 // loop_body
                %v249 = vld [vmem:[%s247] sm:%s240]
                %250 = vst [vmem:[%s248] sm:%s240] %v249
                %v251 = vld [vmem:[%s247 + $0x8] sm:%s240]
                %252 = vst [vmem:[%s248 + $0x4] sm:%s240] %v251
                %v253 = vld [vmem:[%s247 + $0x10] sm:%s240]
                %254 = vst [vmem:[%s248 + $0x8] sm:%s240] %v253
                %v255 = vld [vmem:[%s247 + $0x18] sm:%s240]
                %256 = vst [vmem:[%s248 + $0xc] sm:%s240] %v255
                %v257 = vld [vmem:[%s247 + $0x20] sm:%s240]
                %258 = vst [vmem:[%s248 + $0x10] sm:%s240] %v257
                %v259 = vld [vmem:[%s247 + $0x28] sm:%s240]
                %260 = vst [vmem:[%s248 + $0x14] sm:%s240] %v259
                %v261 = vld [vmem:[%s247 + $0x30] sm:%s240]
                %262 = vst [vmem:[%s248 + $0x18] sm:%s240] %v261
                %v263 = vld [vmem:[%s247 + $0x38] sm:%s240]
                %264 = vst [vmem:[%s248 + $0x1c] sm:%s240] %v263
                %v265 = vld [vmem:[%s247 + $0x40] sm:%s240]
                %266 = vst [vmem:[%s248 + $0x20] sm:%s240] %v265
                %v267 = vld [vmem:[%s247 + $0x48] sm:%s240]
                %268 = vst [vmem:[%s248 + $0x24] sm:%s240] %v267
                %v269 = vld [vmem:[%s247 + $0x50] sm:%s240]
                %270 = vst [vmem:[%s248 + $0x28] sm:%s240] %v269
                %v271 = vld [vmem:[%s247 + $0x58] sm:%s240]
                %272 = vst [vmem:[%s248 + $0x2c] sm:%s240] %v271
                %v273 = vld [vmem:[%s247 + $0x60] sm:%s240]
                %274 = vst [vmem:[%s248 + $0x30] sm:%s240] %v273
                %v275 = vld [vmem:[%s247 + $0x68] sm:%s240]
                %276 = vst [vmem:[%s248 + $0x34] sm:%s240] %v275
                %v277 = vld [vmem:[%s247 + $0x70] sm:%s240]
                %278 = vst [vmem:[%s248 + $0x38] sm:%s240] %v277
                %v279 = vld [vmem:[%s247 + $0x78] sm:%s240]
                %280 = vst [vmem:[%s248 + $0x3c] sm:%s240] %v279
              $region49: #{net_forward.6} parent=43 // loop_footer
                %s246 = sadd.s32 1, %s242
              $region50: #{net_forward.6} parent=43 // loop_footer_branch
                %241 = sbr.rel target = $region46
              $region51: #{net_forward.6} parent=43 // loop_exit
                _
            $region44: #{net_forward.6} parent=35 // pred_fallthru
              _
          $region36: #{net_forward.6} parent=31 // pred_fallthru
            _
          %333 = vnop
        $region32: #{net_forward.6} parent=27 // pred_fallthru
          _
        // Predicated region
        $region70: #{net_forward.6} parent=27 // pred_check
          %p334 = pneg %p72
        $region71: #{net_forward.6} parent=27 // pred_check_branch
          %336 = sbr.rel (%p334) target = $region73
        $region72: #{net_forward.6} parent=27 // pred_region
          %s337 = smul.u32 16, %s20
          %p338 = scmp.lt.s32.totalorder %s337, 31
          %s339 = scalar_select %p338, %s337, 31
          %s340 = smul.addr %s339, 8
          %s341 = scalar_lea.vmem %s1, %s340
          %s342 = smul.u32 16, %s20
        $region73: #{net_forward.6} parent=27 // pred_fallthru
          _
        // Predicated region
        $region74: #{net_forward.6} parent=27 // pred_check
          %p343 = pneg %p98
        $region75: #{net_forward.6} parent=27 // pred_check_branch
          %345 = sbr.rel (%p343) target = $region77
        $region76: #{net_forward.6} parent=27 // pred_region
          %s346 = smul.u32 16, %s19
          %p347 = scmp.lt.s32.totalorder %s346, 31
          %s348 = scalar_select %p347, %s346, 31
          %s349 = smul.addr %s348, 8
          %s350 = scalar_lea.vmem %s2, %s349
          %s351 = smul.u32 16, %s19
        $region77: #{net_forward.6} parent=27 // pred_fallthru
          _
      $region28: #{net_forward.6} parent=5 // pred_fallthru
        _
      %p352 = scmp.le.s32.totalorder 1, %s12
      %p353 = scmp.lt.s32.totalorder %s12, 5
      %p354 = pnand %p352, %p353
      %p355 = pneg %p354
      // Predicated region
      $region78: #{net_forward.6} parent=5 // pred_check
        _
      $region79: #{net_forward.6} parent=5 // pred_check_branch
        %357 = sbr.rel (%p354) target = $region81
      $region80: #{net_forward.6} parent=5 // pred_region
        %s358 = ssub.s32 %s12, 1
        %s359 = sand.u32 %s39, 1
        %s360 = sand.u32 %s39, 1
        %s361 = smul.addr %s360, 64
        %s362 = scalar_lea.vmem [#allocation3], %s361
        // Predicated region
        $region82: #{net_forward.6} parent=80 // pred_check
          %p363 = pneg %p52
        $region83: #{net_forward.6} parent=80 // pred_check_branch
          %365 = sbr.rel (%p363) target = $region85
        $region84: #{net_forward.6} parent=80 // pred_region
          _
        $region85: #{net_forward.6} parent=80 // pred_fallthru
          _
        %s366 = sand.u32 %s39, 1
        %s367 = sand.u32 %s39, 1
        %s368 = smul.addr %s367, 64
        %s369 = scalar_lea.vmem [#allocation3], %s368
        %p370 = pneg %p52
        %p371 = pneg %p49
        %s372 = smul.u32 16, %s22
        %p373 = scmp.lt.s32.totalorder %s372, 31
        %s374 = scalar_select %p373, %s372, 31
        %s375 = smul.addr %s374, 8
        %s376 = scalar_lea.vmem %s1, %s375
        %p377 = pneg %p78
        %p378 = pneg %p75
        %s379 = smul.u32 16, %s21
        %p380 = scmp.lt.s32.totalorder %s379, 31
        %s381 = scalar_select %p380, %s379, 31
        %s382 = smul.addr %s381, 8
        %s383 = scalar_lea.vmem %s2, %s382
        %p384 = pneg %p104
        %p385 = pneg %p101
        %p386 = pneg %p125
        %p387 = pneg %p122
        %p388 = pneg %p146
        %p389 = pneg %p143
        %p390 = pneg %p167
        %p391 = pneg %p164
        %p392 = pneg %p193
        %p393 = pneg %p190
        %s394 = smul.u32 16, %s21
        %p395 = scmp.lt.s32.totalorder %s394, 31
        %s396 = scalar_select %p395, %s394, 31
        %s397 = smul.addr %s396, 8
        %s398 = scalar_lea.vmem %s6, %s397
        %s399 = smul.u32 16, %s21
        %s400 = smul.u32 16, %s22
        %p401 = scmp.lt.s32.totalorder %s400, 31
        %s402 = scalar_select %p401, %s400, 31
        %s403 = smul.addr %s402, 8
        %s404 = scalar_lea.vmem %s1, %s403
        %s405 = smul.u32 16, %s22
        %s406 = smul.u32 16, %s21
        %p407 = scmp.lt.s32.totalorder %s406, 31
        %s408 = scalar_select %p407, %s406, 31
        %s409 = smul.addr %s408, 8
        %s410 = scalar_lea.vmem %s2, %s409
        %s411 = smul.u32 16, %s21
        %s412 = smul.u32 16, %s21
        %p413 = scmp.lt.s32.totalorder %s412, 31
        %s414 = scalar_select %p413, %s412, 31
        %s415 = smul.addr %s414, 8
        %s416 = scalar_lea.vmem %s6, %s415
        %s417 = smul.u32 16, %s21
        %p418 = scmp.eq.s32.totalorder %s22, 0
        // Predicated region
        $region86: #{net_forward.6} parent=80 // pred_check
          %p419 = pneg %p418
        $region87: #{net_forward.6} parent=80 // pred_check_branch
          %421 = sbr.rel (%p419) target = $region89
        $region88: #{net_forward.6} parent=80 // pred_region
          %422 = vst [vmem:[#allocation2] sm:$0xff] 0.0
          %423 = vst [vmem:[#allocation2 + $0x8] sm:$0xff] 0.0
          %424 = vst [vmem:[#allocation2 + $0x10] sm:$0xff] 0.0
          %425 = vst [vmem:[#allocation2 + $0x18] sm:$0xff] 0.0
          %426 = vst [vmem:[#allocation2 + $0x20] sm:$0xff] 0.0
          %427 = vst [vmem:[#allocation2 + $0x28] sm:$0xff] 0.0
          %428 = vst [vmem:[#allocation2 + $0x30] sm:$0xff] 0.0
          %429 = vst [vmem:[#allocation2 + $0x38] sm:$0xff] 0.0
          %430 = vst [vmem:[#allocation2 + $0x40] sm:$0xff] 0.0
          %431 = vst [vmem:[#allocation2 + $0x48] sm:$0xff] 0.0
          %432 = vst [vmem:[#allocation2 + $0x50] sm:$0xff] 0.0
          %433 = vst [vmem:[#allocation2 + $0x58] sm:$0xff] 0.0
          %434 = vst [vmem:[#allocation2 + $0x60] sm:$0xff] 0.0
          %435 = vst [vmem:[#allocation2 + $0x68] sm:$0xff] 0.0
          %436 = vst [vmem:[#allocation2 + $0x70] sm:$0xff] 0.0
          %437 = vst [vmem:[#allocation2 + $0x78] sm:$0xff] 0.0
        $region89: #{net_forward.6} parent=80 // pred_fallthru
          _
        %v438 = vld [vmem:[%s404] sm:$0xff]
        %v439 = vld [vmem:[%s404 + $0x8] sm:$0xff]
        %v440 = vld [vmem:[%s404 + $0x10] sm:$0xff]
        %v441 = vld [vmem:[%s404 + $0x18] sm:$0xff]
        %v442 = vld [vmem:[%s404 + $0x20] sm:$0xff]
        %v443 = vld [vmem:[%s404 + $0x28] sm:$0xff]
        %v444 = vld [vmem:[%s404 + $0x30] sm:$0xff]
        %v445 = vld [vmem:[%s404 + $0x38] sm:$0xff]
        %v446 = vld [vmem:[%s404 + $0x40] sm:$0xff]
        %v447 = vld [vmem:[%s404 + $0x48] sm:$0xff]
        %v448 = vld [vmem:[%s404 + $0x50] sm:$0xff]
        %v449 = vld [vmem:[%s404 + $0x58] sm:$0xff]
        %v450 = vld [vmem:[%s404 + $0x60] sm:$0xff]
        %v451 = vld [vmem:[%s404 + $0x68] sm:$0xff]
        %v452 = vld [vmem:[%s404 + $0x70] sm:$0xff]
        %v453 = vld [vmem:[%s404 + $0x78] sm:$0xff]
        %v454 = vld [vmem:[%s3] sm:$0xff]
        %v455 = vld [vmem:[%s3 + $0x8] sm:$0xff]
        %v456 = vld [vmem:[%s3 + $0x10] sm:$0xff]
        %v457 = vld [vmem:[%s3 + $0x18] sm:$0xff]
        %v458 = vld [vmem:[%s3 + $0x20] sm:$0xff]
        %v459 = vld [vmem:[%s3 + $0x28] sm:$0xff]
        %v460 = vld [vmem:[%s3 + $0x30] sm:$0xff]
        %v461 = vld [vmem:[%s3 + $0x38] sm:$0xff]
        %v462 = vld [vmem:[%s3 + $0x40] sm:$0xff]
        %v463 = vld [vmem:[%s3 + $0x48] sm:$0xff]
        %v464 = vld [vmem:[%s3 + $0x50] sm:$0xff]
        %v465 = vld [vmem:[%s3 + $0x58] sm:$0xff]
        %v466 = vld [vmem:[%s3 + $0x60] sm:$0xff]
        %v467 = vld [vmem:[%s3 + $0x68] sm:$0xff]
        %v468 = vld [vmem:[%s3 + $0x70] sm:$0xff]
        %v469 = vld [vmem:[%s3 + $0x78] sm:$0xff]
        %470 = vmatpush.msra.mxu0 %v469
        %471 = vmatpush.msra.mxu0 %v468
        %472 = vmatpush.msra.mxu0 %v467
        %473 = vmatpush.msra.mxu0 %v466
        %474 = vmatpush.msra.mxu0 %v465
        %475 = vmatpush.msra.mxu0 %v464
        %476 = vmatpush.msra.mxu0 %v463
        %477 = vmatpush.msra.mxu0 %v462
        %478 = vmatpush.msra.mxu0 %v461
        %479 = vmatpush.msra.mxu0 %v460
        %480 = vmatpush.msra.mxu0 %v459
        %481 = vmatpush.msra.mxu0 %v458
        %482 = vmatpush.msra.mxu0 %v457
        %483 = vmatpush.msra.mxu0 %v456
        %484 = vmatpush.msra.mxu0 %v455
        %485 = vmatpush.msra.mxu0 %v454
        %486 = vmatmul.f32.gmra.mxu0 %v438
        %v487 = vpop.f32.mrf.mxu0
        %v488 = vadd.f32 0.0, %v487
        %489 = vmatmul.f32.gmra.mxu0 %v439
        %v490 = vpop.f32.mrf.mxu0
        %v491 = vadd.f32 0.0, %v490
        %492 = vmatmul.f32.gmra.mxu0 %v440
        %v493 = vpop.f32.mrf.mxu0
        %v494 = vadd.f32 0.0, %v493
        %495 = vmatmul.f32.gmra.mxu0 %v441
        %v496 = vpop.f32.mrf.mxu0
        %v497 = vadd.f32 0.0, %v496
        %498 = vmatmul.f32.gmra.mxu0 %v442
        %v499 = vpop.f32.mrf.mxu0
        %v500 = vadd.f32 0.0, %v499
        %501 = vmatmul.f32.gmra.mxu0 %v443
        %v502 = vpop.f32.mrf.mxu0
        %v503 = vadd.f32 0.0, %v502
        %504 = vmatmul.f32.gmra.mxu0 %v444
        %v505 = vpop.f32.mrf.mxu0
        %v506 = vadd.f32 0.0, %v505
        %507 = vmatmul.f32.gmra.mxu0 %v445
        %v508 = vpop.f32.mrf.mxu0
        %v509 = vadd.f32 0.0, %v508
        %510 = vmatmul.f32.gmra.mxu0 %v446
        %v511 = vpop.f32.mrf.mxu0
        %v512 = vadd.f32 0.0, %v511
        %513 = vmatmul.f32.gmra.mxu0 %v447
        %v514 = vpop.f32.mrf.mxu0
        %v515 = vadd.f32 0.0, %v514
        %516 = vmatmul.f32.gmra.mxu0 %v448
        %v517 = vpop.f32.mrf.mxu0
        %v518 = vadd.f32 0.0, %v517
        %519 = vmatmul.f32.gmra.mxu0 %v449
        %v520 = vpop.f32.mrf.mxu0
        %v521 = vadd.f32 0.0, %v520
        %522 = vmatmul.f32.gmra.mxu0 %v450
        %v523 = vpop.f32.mrf.mxu0
        %v524 = vadd.f32 0.0, %v523
        %525 = vmatmul.f32.gmra.mxu0 %v451
        %v526 = vpop.f32.mrf.mxu0
        %v527 = vadd.f32 0.0, %v526
        %528 = vmatmul.f32.gmra.mxu0 %v452
        %v529 = vpop.f32.mrf.mxu0
        %v530 = vadd.f32 0.0, %v529
        %531 = vmatmul.f32.gmra.mxu0 %v453
        %v532 = vpop.f32.mrf.mxu0
        %v533 = vadd.f32 0.0, %v532
        %534 = vdwg.mxu0
        %v535 = vld [vmem:[#allocation2] sm:$0xff]
        %v536 = vld [vmem:[#allocation2 + $0x8] sm:$0xff]
        %v537 = vld [vmem:[#allocation2 + $0x10] sm:$0xff]
        %v538 = vld [vmem:[#allocation2 + $0x18] sm:$0xff]
        %v539 = vld [vmem:[#allocation2 + $0x20] sm:$0xff]
        %v540 = vld [vmem:[#allocation2 + $0x28] sm:$0xff]
        %v541 = vld [vmem:[#allocation2 + $0x30] sm:$0xff]
        %v542 = vld [vmem:[#allocation2 + $0x38] sm:$0xff]
        %v543 = vld [vmem:[#allocation2 + $0x40] sm:$0xff]
        %v544 = vld [vmem:[#allocation2 + $0x48] sm:$0xff]
        %v545 = vld [vmem:[#allocation2 + $0x50] sm:$0xff]
        %v546 = vld [vmem:[#allocation2 + $0x58] sm:$0xff]
        %v547 = vld [vmem:[#allocation2 + $0x60] sm:$0xff]
        %v548 = vld [vmem:[#allocation2 + $0x68] sm:$0xff]
        %v549 = vld [vmem:[#allocation2 + $0x70] sm:$0xff]
        %v550 = vld [vmem:[#allocation2 + $0x78] sm:$0xff]
        %v551 = vld [vmem:[%s362] sm:$0xf]
        %v552 = vld [vmem:[%s362 + $0x4] sm:$0xf]
        %v553 = vld [vmem:[%s362 + $0x8] sm:$0xf]
        %v554 = vld [vmem:[%s362 + $0xc] sm:$0xf]
        %v555 = vld [vmem:[%s362 + $0x10] sm:$0xf]
        %v556 = vld [vmem:[%s362 + $0x14] sm:$0xf]
        %v557 = vld [vmem:[%s362 + $0x18] sm:$0xf]
        %v558 = vld [vmem:[%s362 + $0x1c] sm:$0xf]
        %v559 = vld [vmem:[%s362 + $0x20] sm:$0xf]
        %v560 = vld [vmem:[%s362 + $0x24] sm:$0xf]
        %v561 = vld [vmem:[%s362 + $0x28] sm:$0xf]
        %v562 = vld [vmem:[%s362 + $0x2c] sm:$0xf]
        %v563 = vld [vmem:[%s362 + $0x30] sm:$0xf]
        %v564 = vld [vmem:[%s362 + $0x34] sm:$0xf]
        %v565 = vld [vmem:[%s362 + $0x38] sm:$0xf]
        %v566 = vld [vmem:[%s362 + $0x3c] sm:$0xf]
        %v567 = vpack.c.bf16 %v491, %v488
        %v568 = vpack.c.bf16 %v497, %v494
        %v569 = vpack.c.bf16 %v503, %v500
        %v570 = vpack.c.bf16 %v509, %v506
        %v571 = vpack.c.bf16 %v515, %v512
        %v572 = vpack.c.bf16 %v521, %v518
        %v573 = vpack.c.bf16 %v527, %v524
        %v574 = vpack.c.bf16 %v533, %v530
        %v591 = vunpack.c.l.b16 %v551
        %v592 = vunpack.c.l.b16 %v552
        %v593 = vunpack.c.l.b16 %v553
        %v594 = vunpack.c.l.b16 %v554
        %v595 = vunpack.c.l.b16 %v555
        %v596 = vunpack.c.l.b16 %v556
        %v597 = vunpack.c.l.b16 %v557
        %v598 = vunpack.c.l.b16 %v558
        %v599 = vunpack.c.l.b16 %v559
        %v600 = vunpack.c.l.b16 %v560
        %v601 = vunpack.c.l.b16 %v561
        %v602 = vunpack.c.l.b16 %v562
        %v603 = vunpack.c.l.b16 %v563
        %v604 = vunpack.c.l.b16 %v564
        %v605 = vunpack.c.l.b16 %v565
        %v606 = vunpack.c.l.b16 %v566
        %v607 = vpack.c.b16 %v592, %v591
        %v608 = vpack.c.b16 %v594, %v593
        %v609 = vpack.c.b16 %v596, %v595
        %v610 = vpack.c.b16 %v598, %v597
        %v611 = vpack.c.b16 %v600, %v599
        %v612 = vpack.c.b16 %v602, %v601
        %v613 = vpack.c.b16 %v604, %v603
        %v614 = vpack.c.b16 %v606, %v605
        %623 = vmatpush.bf16.msra.mxu0 %v574
        %624 = vmatpush.bf16.msra.mxu0 %v573
        %625 = vmatpush.bf16.msra.mxu0 %v572
        %626 = vmatpush.bf16.msra.mxu0 %v571
        %627 = vmatpush.bf16.msra.mxu0 %v570
        %628 = vmatpush.bf16.msra.mxu0 %v569
        %629 = vmatpush.bf16.msra.mxu0 %v568
        %630 = vmatpush.bf16.msra.mxu0 %v567
        %631 = vmatmul.bf16.gmra.mxu0 %v607
        %v632 = vpop.f32.mrf.mxu0
        %v633 = vadd.f32 0.0, %v632
        %v634 = vpop.f32.mrf.mxu0
        %v635 = vadd.f32 0.0, %v634
        %636 = vmatmul.bf16.gmra.mxu0 %v608
        %v637 = vpop.f32.mrf.mxu0
        %v638 = vadd.f32 0.0, %v637
        %v639 = vpop.f32.mrf.mxu0
        %v640 = vadd.f32 0.0, %v639
        %641 = vmatmul.bf16.gmra.mxu0 %v609
        %v642 = vpop.f32.mrf.mxu0
        %v643 = vadd.f32 0.0, %v642
        %v644 = vpop.f32.mrf.mxu0
        %v645 = vadd.f32 0.0, %v644
        %646 = vmatmul.bf16.gmra.mxu0 %v610
        %v647 = vpop.f32.mrf.mxu0
        %v648 = vadd.f32 0.0, %v647
        %v649 = vpop.f32.mrf.mxu0
        %v650 = vadd.f32 0.0, %v649
        %651 = vmatmul.bf16.gmra.mxu0 %v611
        %v652 = vpop.f32.mrf.mxu0
        %v653 = vadd.f32 0.0, %v652
        %v654 = vpop.f32.mrf.mxu0
        %v655 = vadd.f32 0.0, %v654
        %656 = vmatmul.bf16.gmra.mxu0 %v612
        %v657 = vpop.f32.mrf.mxu0
        %v658 = vadd.f32 0.0, %v657
        %v659 = vpop.f32.mrf.mxu0
        %v660 = vadd.f32 0.0, %v659
        %661 = vmatmul.bf16.gmra.mxu0 %v613
        %v662 = vpop.f32.mrf.mxu0
        %v663 = vadd.f32 0.0, %v662
        %v664 = vpop.f32.mrf.mxu0
        %v665 = vadd.f32 0.0, %v664
        %666 = vmatmul.bf16.gmra.mxu0 %v614
        %v667 = vpop.f32.mrf.mxu0
        %v668 = vadd.f32 0.0, %v667
        %v669 = vpop.f32.mrf.mxu0
        %v670 = vadd.f32 0.0, %v669
        %671 = vdwg.mxu0
        %v672 = vadd.f32 %v535, %v633
        %v673 = vadd.f32 %v536, %v635
        %v674 = vadd.f32 %v537, %v638
        %v675 = vadd.f32 %v538, %v640
        %v676 = vadd.f32 %v539, %v643
        %v677 = vadd.f32 %v540, %v645
        %v678 = vadd.f32 %v541, %v648
        %v679 = vadd.f32 %v542, %v650
        %v680 = vadd.f32 %v543, %v653
        %v681 = vadd.f32 %v544, %v655
        %v682 = vadd.f32 %v545, %v658
        %v683 = vadd.f32 %v546, %v660
        %v684 = vadd.f32 %v547, %v663
        %v685 = vadd.f32 %v548, %v665
        %v686 = vadd.f32 %v549, %v668
        %v687 = vadd.f32 %v550, %v670
        %688 = vst [vmem:[#allocation2] sm:$0xff] %v672
        %689 = vst [vmem:[#allocation2 + $0x8] sm:$0xff] %v673
        %690 = vst [vmem:[#allocation2 + $0x10] sm:$0xff] %v674
        %691 = vst [vmem:[#allocation2 + $0x18] sm:$0xff] %v675
        %692 = vst [vmem:[#allocation2 + $0x20] sm:$0xff] %v676
        %693 = vst [vmem:[#allocation2 + $0x28] sm:$0xff] %v677
        %694 = vst [vmem:[#allocation2 + $0x30] sm:$0xff] %v678
        %695 = vst [vmem:[#allocation2 + $0x38] sm:$0xff] %v679
        %696 = vst [vmem:[#allocation2 + $0x40] sm:$0xff] %v680
        %697 = vst [vmem:[#allocation2 + $0x48] sm:$0xff] %v681
        %698 = vst [vmem:[#allocation2 + $0x50] sm:$0xff] %v682
        %699 = vst [vmem:[#allocation2 + $0x58] sm:$0xff] %v683
        %700 = vst [vmem:[#allocation2 + $0x60] sm:$0xff] %v684
        %701 = vst [vmem:[#allocation2 + $0x68] sm:$0xff] %v685
        %702 = vst [vmem:[#allocation2 + $0x70] sm:$0xff] %v686
        %703 = vst [vmem:[#allocation2 + $0x78] sm:$0xff] %v687
        %p704 = scmp.eq.s32.totalorder %s22, 1
        // Predicated region
        $region90: #{net_forward.6} parent=80 // pred_check
          %p705 = pneg %p704
        $region91: #{net_forward.6} parent=80 // pred_check_branch
          %707 = sbr.rel (%p705) target = $region93
        $region92: #{net_forward.6} parent=80 // pred_region
          %v708 = vld [vmem:[%s410] sm:$0xff]
          %v709 = vld [vmem:[%s410 + $0x8] sm:$0xff]
          %v710 = vld [vmem:[%s410 + $0x10] sm:$0xff]
          %v711 = vld [vmem:[%s410 + $0x18] sm:$0xff]
          %v712 = vld [vmem:[%s410 + $0x20] sm:$0xff]
          %v713 = vld [vmem:[%s410 + $0x28] sm:$0xff]
          %v714 = vld [vmem:[%s410 + $0x30] sm:$0xff]
          %v715 = vld [vmem:[%s410 + $0x38] sm:$0xff]
          %v716 = vld [vmem:[%s410 + $0x40] sm:$0xff]
          %v717 = vld [vmem:[%s410 + $0x48] sm:$0xff]
          %v718 = vld [vmem:[%s410 + $0x50] sm:$0xff]
          %v719 = vld [vmem:[%s410 + $0x58] sm:$0xff]
          %v720 = vld [vmem:[%s410 + $0x60] sm:$0xff]
          %v721 = vld [vmem:[%s410 + $0x68] sm:$0xff]
          %v722 = vld [vmem:[%s410 + $0x70] sm:$0xff]
          %v723 = vld [vmem:[%s410 + $0x78] sm:$0xff]
          %v724 = vld [vmem:[%s4] sm:$0xff]
          %v725 = vld [vmem:[%s4 + $0x8] sm:$0xff]
          %v726 = vld [vmem:[%s4 + $0x10] sm:$0xff]
          %v727 = vld [vmem:[%s4 + $0x18] sm:$0xff]
          %v728 = vld [vmem:[%s4 + $0x20] sm:$0xff]
          %v729 = vld [vmem:[%s4 + $0x28] sm:$0xff]
          %v730 = vld [vmem:[%s4 + $0x30] sm:$0xff]
          %v731 = vld [vmem:[%s4 + $0x38] sm:$0xff]
          %v732 = vld [vmem:[%s4 + $0x40] sm:$0xff]
          %v733 = vld [vmem:[%s4 + $0x48] sm:$0xff]
          %v734 = vld [vmem:[%s4 + $0x50] sm:$0xff]
          %v735 = vld [vmem:[%s4 + $0x58] sm:$0xff]
          %v736 = vld [vmem:[%s4 + $0x60] sm:$0xff]
          %v737 = vld [vmem:[%s4 + $0x68] sm:$0xff]
          %v738 = vld [vmem:[%s4 + $0x70] sm:$0xff]
          %v739 = vld [vmem:[%s4 + $0x78] sm:$0xff]
          %v740 = vld [vmem:[%s5] sm:$0x1]
          %v742 = vperm.slane %v740, 0
          %744 = vmatpush.msra.mxu0 %v739
          %745 = vmatpush.msra.mxu0 %v738
          %746 = vmatpush.msra.mxu0 %v737
          %747 = vmatpush.msra.mxu0 %v736
          %748 = vmatpush.msra.mxu0 %v735
          %749 = vmatpush.msra.mxu0 %v734
          %750 = vmatpush.msra.mxu0 %v733
          %751 = vmatpush.msra.mxu0 %v732
          %752 = vmatpush.msra.mxu0 %v731
          %753 = vmatpush.msra.mxu0 %v730
          %754 = vmatpush.msra.mxu0 %v729
          %755 = vmatpush.msra.mxu0 %v728
          %756 = vmatpush.msra.mxu0 %v727
          %757 = vmatpush.msra.mxu0 %v726
          %758 = vmatpush.msra.mxu0 %v725
          %759 = vmatpush.msra.mxu0 %v724
          %760 = vmatmul.f32.gmra.mxu0 %v708
          %v761 = vpop.f32.mrf.mxu0
          %v762 = vadd.f32 %v742, %v761
          %763 = vmatmul.f32.gmra.mxu0 %v709
          %v764 = vpop.f32.mrf.mxu0
          %v765 = vadd.f32 %v742, %v764
          %766 = vmatmul.f32.gmra.mxu0 %v710
          %v767 = vpop.f32.mrf.mxu0
          %v768 = vadd.f32 %v742, %v767
          %769 = vmatmul.f32.gmra.mxu0 %v711
          %v770 = vpop.f32.mrf.mxu0
          %v771 = vadd.f32 %v742, %v770
          %772 = vmatmul.f32.gmra.mxu0 %v712
          %v773 = vpop.f32.mrf.mxu0
          %v774 = vadd.f32 %v742, %v773
          %775 = vmatmul.f32.gmra.mxu0 %v713
          %v776 = vpop.f32.mrf.mxu0
          %v777 = vadd.f32 %v742, %v776
          %778 = vmatmul.f32.gmra.mxu0 %v714
          %v779 = vpop.f32.mrf.mxu0
          %v780 = vadd.f32 %v742, %v779
          %781 = vmatmul.f32.gmra.mxu0 %v715
          %v782 = vpop.f32.mrf.mxu0
          %v783 = vadd.f32 %v742, %v782
          %784 = vmatmul.f32.gmra.mxu0 %v716
          %v785 = vpop.f32.mrf.mxu0
          %v786 = vadd.f32 %v742, %v785
          %787 = vmatmul.f32.gmra.mxu0 %v717
          %v788 = vpop.f32.mrf.mxu0
          %v789 = vadd.f32 %v742, %v788
          %790 = vmatmul.f32.gmra.mxu0 %v718
          %v791 = vpop.f32.mrf.mxu0
          %v792 = vadd.f32 %v742, %v791
          %793 = vmatmul.f32.gmra.mxu0 %v719
          %v794 = vpop.f32.mrf.mxu0
          %v795 = vadd.f32 %v742, %v794
          %796 = vmatmul.f32.gmra.mxu0 %v720
          %v797 = vpop.f32.mrf.mxu0
          %v798 = vadd.f32 %v742, %v797
          %799 = vmatmul.f32.gmra.mxu0 %v721
          %v800 = vpop.f32.mrf.mxu0
          %v801 = vadd.f32 %v742, %v800
          %802 = vmatmul.f32.gmra.mxu0 %v722
          %v803 = vpop.f32.mrf.mxu0
          %v804 = vadd.f32 %v742, %v803
          %805 = vmatmul.f32.gmra.mxu0 %v723
          %v806 = vpop.f32.mrf.mxu0
          %v807 = vadd.f32 %v742, %v806
          %808 = vdwg.mxu0
          %v809 = vld [vmem:[#allocation2] sm:$0xff]
          %v810 = vld [vmem:[#allocation2 + $0x8] sm:$0xff]
          %v811 = vld [vmem:[#allocation2 + $0x10] sm:$0xff]
          %v812 = vld [vmem:[#allocation2 + $0x18] sm:$0xff]
          %v813 = vld [vmem:[#allocation2 + $0x20] sm:$0xff]
          %v814 = vld [vmem:[#allocation2 + $0x28] sm:$0xff]
          %v815 = vld [vmem:[#allocation2 + $0x30] sm:$0xff]
          %v816 = vld [vmem:[#allocation2 + $0x38] sm:$0xff]
          %v817 = vld [vmem:[#allocation2 + $0x40] sm:$0xff]
          %v818 = vld [vmem:[#allocation2 + $0x48] sm:$0xff]
          %v819 = vld [vmem:[#allocation2 + $0x50] sm:$0xff]
          %v820 = vld [vmem:[#allocation2 + $0x58] sm:$0xff]
          %v821 = vld [vmem:[#allocation2 + $0x60] sm:$0xff]
          %v822 = vld [vmem:[#allocation2 + $0x68] sm:$0xff]
          %v823 = vld [vmem:[#allocation2 + $0x70] sm:$0xff]
          %v824 = vld [vmem:[#allocation2 + $0x78] sm:$0xff]
          %v825 = vadd.f32 %v809, %v762
          %v826 = vadd.f32 %v810, %v765
          %v827 = vadd.f32 %v811, %v768
          %v828 = vadd.f32 %v812, %v771
          %v829 = vadd.f32 %v813, %v774
          %v830 = vadd.f32 %v814, %v777
          %v831 = vadd.f32 %v815, %v780
          %v832 = vadd.f32 %v816, %v783
          %v833 = vadd.f32 %v817, %v786
          %v834 = vadd.f32 %v818, %v789
          %v835 = vadd.f32 %v819, %v792
          %v836 = vadd.f32 %v820, %v795
          %v837 = vadd.f32 %v821, %v798
          %v838 = vadd.f32 %v822, %v801
          %v839 = vadd.f32 %v823, %v804
          %v840 = vadd.f32 %v824, %v807
          %841 = vst [vmem:[%s416] sm:$0xff] %v825
          %842 = vst [vmem:[%s416 + $0x8] sm:$0xff] %v826
          %843 = vst [vmem:[%s416 + $0x10] sm:$0xff] %v827
          %844 = vst [vmem:[%s416 + $0x18] sm:$0xff] %v828
          %845 = vst [vmem:[%s416 + $0x20] sm:$0xff] %v829
          %846 = vst [vmem:[%s416 + $0x28] sm:$0xff] %v830
          %847 = vst [vmem:[%s416 + $0x30] sm:$0xff] %v831
          %848 = vst [vmem:[%s416 + $0x38] sm:$0xff] %v832
          %849 = vst [vmem:[%s416 + $0x40] sm:$0xff] %v833
          %850 = vst [vmem:[%s416 + $0x48] sm:$0xff] %v834
          %851 = vst [vmem:[%s416 + $0x50] sm:$0xff] %v835
          %852 = vst [vmem:[%s416 + $0x58] sm:$0xff] %v836
          %853 = vst [vmem:[%s416 + $0x60] sm:$0xff] %v837
          %854 = vst [vmem:[%s416 + $0x68] sm:$0xff] %v838
          %855 = vst [vmem:[%s416 + $0x70] sm:$0xff] %v839
          %856 = vst [vmem:[%s416 + $0x78] sm:$0xff] %v840
        $region93: #{net_forward.6} parent=80 // pred_fallthru
          _
        %s857 = smul.u32 16, %s21
        %p858 = scmp.lt.s32.totalorder %s857, 31
        %s859 = scalar_select %p858, %s857, 31
        %s860 = smul.addr %s859, 8
        %s861 = scalar_lea.vmem %s6, %s860
        // Predicated region
        $region94: #{net_forward.6} parent=80 // pred_check
          %p862 = pneg %p190
        $region95: #{net_forward.6} parent=80 // pred_check_branch
          %864 = sbr.rel (%p862) target = $region97
        $region96: #{net_forward.6} parent=80 // pred_region
          %s865 = smul.u32 16, %s21
        $region97: #{net_forward.6} parent=80 // pred_fallthru
          _
      $region81: #{net_forward.6} parent=5 // pred_fallthru
        _
      %p866 = scmp.le.s32.totalorder 2, %s12
      // Predicated region
      $region98: #{net_forward.6} parent=5 // pred_check
        %p867 = pneg %p866
      $region99: #{net_forward.6} parent=5 // pred_check_branch
        %869 = sbr.rel (%p867) target = $region101
      $region100: #{net_forward.6} parent=5 // pred_region
        %s870 = ssub.s32 %s12, 2
        // Predicated region
        $region102: #{net_forward.6} parent=100 // pred_check
          %p871 = pneg %p196
        $region103: #{net_forward.6} parent=100 // pred_check_branch
          %873 = sbr.rel (%p871) target = $region105
        $region104: #{net_forward.6} parent=100 // pred_region
          %s874 = smul.u32 16, %s23
          %p875 = scmp.lt.s32.totalorder %s874, 31
          %s876 = scalar_select %p875, %s874, 31
          %s877 = smul.addr %s876, 8
          %s878 = scalar_lea.vmem %s6, %s877
        $region105: #{net_forward.6} parent=100 // pred_fallthru
          _
      $region101: #{net_forward.6} parent=5 // pred_fallthru
        _
    $region6: #{net_forward.6} parent=1 // loop_footer
      %s16 = sadd.s32 1, %s12
    $region7: #{net_forward.6} parent=1 // loop_footer_branch
      %11 = sbr.rel target = $region3
    $region8: #{net_forward.6} parent=1 // loop_exit
      _

// kernel: net_forward.7
$region0: #{net_forward.7}
  #allocation0 [shape = 'u32[]', space=smem, size = 0x4, offset = 0x4, fixed_abs, tag = 'smem constant byte address 0x4 - core index']
  #allocation1 [shape = 'u32[72,128]{1,0:T(1,128)}', space=vmem, size = 0x9000, scoped, tag = 'internal scratch']
  #allocation2 [shape = 'f32[128,128]{1,0:T(8,128)}', space=vmem, size = 0x10000, scoped, tag = 'scratch operand']
  %s0 = inlined_call_operand.vmem [shape: bf16[256,256], index: 0, kind: input, shape index: {}]
  %s1 = inlined_call_operand.vmem [shape: f32[256,128], index: 1, kind: input, shape index: {}]
  %s2 = inlined_call_operand.vmem [shape: f32[256,128], index: 2, kind: input, shape index: {}]
  %s3 = inlined_call_operand.vmem [shape: f32[128,128], index: 3, kind: input, shape index: {}]
  %s4 = inlined_call_operand.vmem [shape: f32[128,128], index: 4, kind: input, shape index: {}]
  %s5 = inlined_call_operand.vmem [shape: f32[1,128], index: 5, kind: input, shape index: {}]
  %s6 = inlined_call_operand.vmem [shape: f32[128,128], index: 6, kind: input, shape index: {}]
  %s7 = inlined_call_operand.vmem [shape: f32[256,128], index: 7, kind: output, shape index: {}]
  %s8 = sld [smem:[#allocation0]]
  $region110: #{net_forward.7} parent=0
    _
  %s10 = ssub.s32 1, %s8
  %s11 = scalar_select 0, %s10, %s8
  $region1: #{net_forward.7} parent=0
    #allocation3 [shape = 'u8[65536]{0}', space=vmem, size = 0x10000, scoped, tag = 'input window, operand 0']
    loop: start=0, step=1, limit=6
    $region2: #{net_forward.7} parent=1 // loop_pre_header
      _
    $region3: #{net_forward.7} parent=1 // loop_header
      %s13 = sphi 0, %s17
      %p14 = scmp.ge.s32.totalorder %s13, 6
      %s20 = sphi 0, %s32
      %s21 = sphi 0, %s28
      %s22 = sphi 0, %s20
      %s23 = sphi 0, %s21
      %s24 = sphi 0, %s22
      %s25 = sphi 0, %s23
      %s37 = sphi 0, %s39
      %s40 = sphi 0, %s37
      %s41 = sphi 0, %s40
      %s57 = sphi 0, %s41
      %s63 = sphi 0, %s65
      %s66 = sphi 0, %s63
      %s67 = sphi 0, %s66
      %s83 = sphi 0, %s67
      %s89 = sphi 0, %s91
      %s92 = sphi 0, %s89
      %s93 = sphi 0, %s92
      %s109 = sphi 0, %s93
      %s113 = sphi 0, %s113
      %s115 = sphi 0, %s113
      %s116 = sphi 0, %s115
      %s130 = sphi 0, %s116
      %s134 = sphi 0, %s134
      %s136 = sphi 0, %s134
      %s137 = sphi 0, %s136
      %s151 = sphi 0, %s137
      %s155 = sphi 0, %s155
      %s157 = sphi 0, %s155
      %s158 = sphi 0, %s157
      %s172 = sphi 0, %s158
      %s176 = sphi 0, %s176
      %s178 = sphi 0, %s176
      %s179 = sphi 0, %s178
      %s193 = sphi 0, %s179
      %s199 = sphi 0, %s201
      %s202 = sphi 0, %s199
      %s203 = sphi 0, %s202
      %s219 = sphi 0, %s203
    $region4: #{net_forward.7} parent=1 // loop_header_branch
      %16 = sbr.rel (%p14) target = $region8
    $region5: #{net_forward.7} parent=1 // loop_body
      %s18 = ssub.s32 %s13, 1
      %s19 = ssub.s32 %s13, 2
      %s26 = sadd.s32 1, %s21
      %p27 = scmp.ge.s32.totalorder %s26, 2
      %s28 = scalar_select %p27, 0, %s26
      %s29 = sadd.s32 1, %s20
      %s30 = scalar_select %p27, %s29, %s20
      %p31 = scmp.ge.s32.totalorder %s30, 2
      %s32 = scalar_select %p31, 0, %s30
      %s33 = ssub.s32 %s20, %s32
      %s34 = ssub.s32 %s21, %s28
      %s35 = sor.u32 %s33, %s34
      %p36 = scmp.eq.s32.totalorder %s35, 0
      %s38 = sadd.s32 %s37, 1
      %s39 = scalar_select %p36, %s37, %s38
      %p42 = pneg %p36
      %p43 = scmp.eq.s32.totalorder %s13, 3
      %p44 = por %p42, %p43
      %p45 = scmp.ne.s32.totalorder %s37, %s40
      %p46 = scmp.eq.s32.totalorder %s13, 0
      %p47 = por %p45, %p46
      %p48 = scmp.ne.s32.totalorder %s37, %s40
      %p49 = scmp.eq.s32.totalorder %s18, 3
      %p50 = por %p48, %p49
      %p51 = scmp.ne.s32.totalorder %s40, %s41
      %p52 = scmp.eq.s32.totalorder %s18, 0
      %p53 = por %p51, %p52
      %p54 = scmp.ne.s32.totalorder %s40, %s41
      %p55 = scmp.eq.s32.totalorder %s19, 3
      %p56 = por %p54, %p55
      %p58 = scmp.ne.s32.totalorder %s41, %s57
      %p59 = scmp.eq.s32.totalorder %s19, 0
      %p60 = por %p58, %p59
      %s61 = ssub.s32 %s21, %s28
      %p62 = scmp.eq.s32.totalorder %s61, 0
      %s64 = sadd.s32 %s63, 1
      %s65 = scalar_select %p62, %s63, %s64
      %p68 = pneg %p62
      %p69 = scmp.eq.s32.totalorder %s13, 3
      %p70 = por %p68, %p69
      %p71 = scmp.ne.s32.totalorder %s63, %s66
      %p72 = scmp.eq.s32.totalorder %s13, 0
      %p73 = por %p71, %p72
      %p74 = scmp.ne.s32.totalorder %s63, %s66
      %p75 = scmp.eq.s32.totalorder %s18, 3
      %p76 = por %p74, %p75
      %p77 = scmp.ne.s32.totalorder %s66, %s67
      %p78 = scmp.eq.s32.totalorder %s18, 0
      %p79 = por %p77, %p78
      %p80 = scmp.ne.s32.totalorder %s66, %s67
      %p81 = scmp.eq.s32.totalorder %s19, 3
      %p82 = por %p80, %p81
      %p84 = scmp.ne.s32.totalorder %s67, %s83
      %p85 = scmp.eq.s32.totalorder %s19, 0
      %p86 = por %p84, %p85
      %s87 = ssub.s32 %s20, %s32
      %p88 = scmp.eq.s32.totalorder %s87, 0
      %s90 = sadd.s32 %s89, 1
      %s91 = scalar_select %p88, %s89, %s90
      %p94 = pneg %p88
      %p95 = scmp.eq.s32.totalorder %s13, 3
      %p96 = por %p94, %p95
      %p97 = scmp.ne.s32.totalorder %s89, %s92
      %p98 = scmp.eq.s32.totalorder %s13, 0
      %p99 = por %p97, %p98
      %p100 = scmp.ne.s32.totalorder %s89, %s92
      %p101 = scmp.eq.s32.totalorder %s18, 3
      %p102 = por %p100, %p101
      %p103 = scmp.ne.s32.totalorder %s92, %s93
      %p104 = scmp.eq.s32.totalorder %s18, 0
      %p105 = por %p103, %p104
      %p106 = scmp.ne.s32.totalorder %s92, %s93
      %p107 = scmp.eq.s32.totalorder %s19, 3
      %p108 = por %p106, %p107
      %p110 = scmp.ne.s32.totalorder %s93, %s109
      %p111 = scmp.eq.s32.totalorder %s19, 0
      %p112 = por %p110, %p111
      %s114 = sadd.s32 %s113, 1
      %p117 = scmp.eq.s32.totalorder %s13, 3
      %p118 = scmp.ne.s32.totalorder %s113, %s115
      %p119 = scmp.eq.s32.totalorder %s13, 0
      %p120 = por %p118, %p119
      %p121 = scmp.ne.s32.totalorder %s113, %s115
      %p122 = scmp.eq.s32.totalorder %s18, 3
      %p123 = por %p121, %p122
      %p124 = scmp.ne.s32.totalorder %s115, %s116
      %p125 = scmp.eq.s32.totalorder %s18, 0
      %p126 = por %p124, %p125
      %p127 = scmp.ne.s32.totalorder %s115, %s116
      %p128 = scmp.eq.s32.totalorder %s19, 3
      %p129 = por %p127, %p128
      %p131 = scmp.ne.s32.totalorder %s116, %s130
      %p132 = scmp.eq.s32.totalorder %s19, 0
      %p133 = por %p131, %p132
      %s135 = sadd.s32 %s134, 1
      %p138 = scmp.eq.s32.totalorder %s13, 3
      %p139 = scmp.ne.s32.totalorder %s134, %s136
      %p140 = scmp.eq.s32.totalorder %s13, 0
      %p141 = por %p139, %p140
      %p142 = scmp.ne.s32.totalorder %s134, %s136
      %p143 = scmp.eq.s32.totalorder %s18, 3
      %p144 = por %p142, %p143
      %p145 = scmp.ne.s32.totalorder %s136, %s137
      %p146 = scmp.eq.s32.totalorder %s18, 0
      %p147 = por %p145, %p146
      %p148 = scmp.ne.s32.totalorder %s136, %s137
      %p149 = scmp.eq.s32.totalorder %s19, 3
      %p150 = por %p148, %p149
      %p152 = scmp.ne.s32.totalorder %s137, %s151
      %p153 = scmp.eq.s32.totalorder %s19, 0
      %p154 = por %p152, %p153
      %s156 = sadd.s32 %s155, 1
      %p159 = scmp.eq.s32.totalorder %s13, 3
      %p160 = scmp.ne.s32.totalorder %s155, %s157
      %p161 = scmp.eq.s32.totalorder %s13, 0
      %p162 = por %p160, %p161
      %p163 = scmp.ne.s32.totalorder %s155, %s157
      %p164 = scmp.eq.s32.totalorder %s18, 3
      %p165 = por %p163, %p164
      %p166 = scmp.ne.s32.totalorder %s157, %s158
      %p167 = scmp.eq.s32.totalorder %s18, 0
      %p168 = por %p166, %p167
      %p169 = scmp.ne.s32.totalorder %s157, %s158
      %p170 = scmp.eq.s32.totalorder %s19, 3
      %p171 = por %p169, %p170
      %p173 = scmp.ne.s32.totalorder %s158, %s172
      %p174 = scmp.eq.s32.totalorder %s19, 0
      %p175 = por %p173, %p174
      %s177 = sadd.s32 %s176, 1
      %p180 = scmp.eq.s32.totalorder %s13, 3
      %p181 = scmp.ne.s32.totalorder %s176, %s178
      %p182 = scmp.eq.s32.totalorder %s13, 0
      %p183 = por %p181, %p182
      %p184 = scmp.ne.s32.totalorder %s176, %s178
      %p185 = scmp.eq.s32.totalorder %s18, 3
      %p186 = por %p184, %p185
      %p187 = scmp.ne.s32.totalorder %s178, %s179
      %p188 = scmp.eq.s32.totalorder %s18, 0
      %p189 = por %p187, %p188
      %p190 = scmp.ne.s32.totalorder %s178, %s179
      %p191 = scmp.eq.s32.totalorder %s19, 3
      %p192 = por %p190, %p191
      %p194 = scmp.ne.s32.totalorder %s179, %s193
      %p195 = scmp.eq.s32.totalorder %s19, 0
      %p196 = por %p194, %p195
      %s197 = ssub.s32 %s20, %s32
      %p198 = scmp.eq.s32.totalorder %s197, 0
      %s200 = sadd.s32 %s199, 1
      %s201 = scalar_select %p198, %s199, %s200
      %p204 = pneg %p198
      %p205 = scmp.eq.s32.totalorder %s13, 3
      %p206 = por %p204, %p205
      %p207 = scmp.ne.s32.totalorder %s199, %s202
      %p208 = scmp.eq.s32.totalorder %s13, 0
      %p209 = por %p207, %p208
      %p210 = scmp.ne.s32.totalorder %s199, %s202
      %p211 = scmp.eq.s32.totalorder %s18, 3
      %p212 = por %p210, %p211
      %p213 = scmp.ne.s32.totalorder %s202, %s203
      %p214 = scmp.eq.s32.totalorder %s18, 0
      %p215 = por %p213, %p214
      %p216 = scmp.ne.s32.totalorder %s202, %s203
      %p217 = scmp.eq.s32.totalorder %s19, 3
      %p218 = por %p216, %p217
      %p220 = scmp.ne.s32.totalorder %s203, %s219
      %p221 = scmp.eq.s32.totalorder %s19, 0
      %p222 = por %p220, %p221
      %p223 = scmp.le.s32.totalorder 1, %s13
      %p224 = scmp.lt.s32.totalorder %s13, 5
      %p225 = pnand %p223, %p224
      %p226 = pneg %p225
      // Predicated region
      $region9: #{net_forward.7} parent=5 // pred_check
        _
      $region10: #{net_forward.7} parent=5 // pred_check_branch
        %228 = sbr.rel (%p225) target = $region12
      $region11: #{net_forward.7} parent=5 // pred_region
        %s229 = ssub.s32 %s13, 1
        // Predicated region
        $region13: #{net_forward.7} parent=11 // pred_check
          %p230 = pneg %p126
        $region14: #{net_forward.7} parent=11 // pred_check_branch
          %232 = sbr.rel (%p230) target = $region16
        $region15: #{net_forward.7} parent=11 // pred_region
          _
        $region16: #{net_forward.7} parent=11 // pred_fallthru
          _
        // Predicated region
        $region17: #{net_forward.7} parent=11 // pred_check
          %p233 = pneg %p147
        $region18: #{net_forward.7} parent=11 // pred_check_branch
          %235 = sbr.rel (%p233) target = $region20
        $region19: #{net_forward.7} parent=11 // pred_region
          _
        $region20: #{net_forward.7} parent=11 // pred_fallthru
          _
        // Predicated region
        $region21: #{net_forward.7} parent=11 // pred_check
          %p236 = pneg %p168
        $region22: #{net_forward.7} parent=11 // pred_check_branch
          %238 = sbr.rel (%p236) target = $region24
        $region23: #{net_forward.7} parent=11 // pred_region
          _
        $region24: #{net_forward.7} parent=11 // pred_fallthru
          _
        // Predicated region
        $region25: #{net_forward.7} parent=11 // pred_check
          %p239 = pneg %p189
        $region26: #{net_forward.7} parent=11 // pred_check_branch
          %241 = sbr.rel (%p239) target = $region28
        $region27: #{net_forward.7} parent=11 // pred_region
          _
        $region28: #{net_forward.7} parent=11 // pred_fallthru
          _
      $region12: #{net_forward.7} parent=5 // pred_fallthru
        _
      %p242 = scmp.lt.s32.totalorder %s13, 4
      // Predicated region
      $region29: #{net_forward.7} parent=5 // pred_check
        %p243 = pneg %p242
      $region30: #{net_forward.7} parent=5 // pred_check_branch
        %245 = sbr.rel (%p243) target = $region32
      $region31: #{net_forward.7} parent=5 // pred_region
        // Predicated region
        $region33: #{net_forward.7} parent=31 // pred_check
          %p246 = pneg %p47
        $region34: #{net_forward.7} parent=31 // pred_check_branch
          %248 = sbr.rel (%p246) target = $region36
        $region35: #{net_forward.7} parent=31 // pred_region
          %s249 = sand.u32 %s37, 1
          %s250 = sand.u32 %s37, 1
          %s251 = smul.addr %s250, 64
          %s252 = scalar_lea.vmem [#allocation3], %s251
          %s253 = smul.u32 16, %s20
          %s254 = smul.addr %s253, 2
          %s255 = sadd.s32 %s21, %s254
          %s256 = smul.addr %s255, 4
          %s257 = scalar_lea.vmem %s0, %s256
          // Predicated region
          $region37: #{net_forward.7} parent=35 // pred_check
            _
          $region38: #{net_forward.7} parent=35 // pred_check_branch
            %259 = sbr.rel (0) target = $region40
          $region39: #{net_forward.7} parent=35 // pred_region
            // Predicated region
            $region41: #{net_forward.7} parent=39 // pred_check
              _
            $region42: #{net_forward.7} parent=39 // pred_check_branch
              %261 = sbr.rel target = $region44
            $region43: #{net_forward.7} parent=39 // pred_region
              // Predicated region
              $region56: #{net_forward.7} parent=43 // pred_check
                _
              $region57: #{net_forward.7} parent=43 // pred_check_branch
                %307 = sbr.rel (0) target = $region59
              $region58: #{net_forward.7} parent=43 // pred_region
                loop: start=0, step=1, limit=1
                $region60: #{net_forward.7} parent=58 // loop_pre_header
                  _
                $region61: #{net_forward.7} parent=58 // loop_header
                  %s309 = sphi 0, %s313
                  %p310 = scmp.ge.s32.totalorder %s309, 1
                  %s314 = sphi %s257, %s257
                  %s315 = sphi %s252, %s252
                $region62: #{net_forward.7} parent=58 // loop_header_branch
                  %312 = sbr.rel (%p310) target = $region66
                $region63: #{net_forward.7} parent=58 // loop_body
                  _
                $region64: #{net_forward.7} parent=58 // loop_footer
                  %s313 = sadd.s32 1, %s309
                $region65: #{net_forward.7} parent=58 // loop_footer_branch
                  %308 = sbr.rel target = $region61
                $region66: #{net_forward.7} parent=58 // loop_exit
                  _
                %s317 = ssub.s32 16, 1
                loop: start=0, step=1, limit=1
                $region67: #{net_forward.7} parent=58 // loop_pre_header
                  _
                $region68: #{net_forward.7} parent=58 // loop_header
                  %s319 = sphi 0, %s323
                  %p320 = scmp.ge.s32.totalorder %s319, 1
                  %s324 = sphi %s257, %s257
                  %s325 = sphi %s252, %s252
                $region69: #{net_forward.7} parent=58 // loop_header_branch
                  %322 = sbr.rel (%p320) target = $region73
                $region70: #{net_forward.7} parent=58 // loop_body
                  %v326 = vld [vmem:[%s324] sm:%s317]
                  %327 = vst [vmem:[%s325] sm:%s317] %v326
                  %v328 = vld [vmem:[%s324 + $0x8] sm:%s317]
                  %329 = vst [vmem:[%s325 + $0x4] sm:%s317] %v328
                  %v330 = vld [vmem:[%s324 + $0x10] sm:%s317]
                  %331 = vst [vmem:[%s325 + $0x8] sm:%s317] %v330
                  %v332 = vld [vmem:[%s324 + $0x18] sm:%s317]
                  %333 = vst [vmem:[%s325 + $0xc] sm:%s317] %v332
                  %v334 = vld [vmem:[%s324 + $0x20] sm:%s317]
                  %335 = vst [vmem:[%s325 + $0x10] sm:%s317] %v334
                  %v336 = vld [vmem:[%s324 + $0x28] sm:%s317]
                  %337 = vst [vmem:[%s325 + $0x14] sm:%s317] %v336
                  %v338 = vld [vmem:[%s324 + $0x30] sm:%s317]
                  %339 = vst [vmem:[%s325 + $0x18] sm:%s317] %v338
                  %v340 = vld [vmem:[%s324 + $0x38] sm:%s317]
                  %341 = vst [vmem:[%s325 + $0x1c] sm:%s317] %v340
                  %v342 = vld [vmem:[%s324 + $0x40] sm:%s317]
                  %343 = vst [vmem:[%s325 + $0x20] sm:%s317] %v342
                  %v344 = vld [vmem:[%s324 + $0x48] sm:%s317]
                  %345 = vst [vmem:[%s325 + $0x24] sm:%s317] %v344
                  %v346 = vld [vmem:[%s324 + $0x50] sm:%s317]
                  %347 = vst [vmem:[%s325 + $0x28] sm:%s317] %v346
                  %v348 = vld [vmem:[%s324 + $0x58] sm:%s317]
                  %349 = vst [vmem:[%s325 + $0x2c] sm:%s317] %v348
                  %v350 = vld [vmem:[%s324 + $0x60] sm:%s317]
                  %351 = vst [vmem:[%s325 + $0x30] sm:%s317] %v350
                  %v352 = vld [vmem:[%s324 + $0x68] sm:%s317]
                  %353 = vst [vmem:[%s325 + $0x34] sm:%s317] %v352
                  %v354 = vld [vmem:[%s324 + $0x70] sm:%s317]
                  %355 = vst [vmem:[%s325 + $0x38] sm:%s317] %v354
                  %v356 = vld [vmem:[%s324 + $0x78] sm:%s317]
                  %357 = vst [vmem:[%s325 + $0x3c] sm:%s317] %v356
                $region71: #{net_forward.7} parent=58 // loop_footer
                  %s323 = sadd.s32 1, %s319
                $region72: #{net_forward.7} parent=58 // loop_footer_branch
                  %318 = sbr.rel target = $region68
                $region73: #{net_forward.7} parent=58 // loop_exit
                  _
              $region59: #{net_forward.7} parent=43 // pred_fallthru
                _
            $region44: #{net_forward.7} parent=39 // pred_fallthru
              _
            // Predicated region
            $region45: #{net_forward.7} parent=39 // pred_check
              _
            $region46: #{net_forward.7} parent=39 // pred_check_branch
              %263 = sbr.rel (0) target = $region48
            $region47: #{net_forward.7} parent=39 // pred_region
              %s265 = ssub.s32 16, 1
              loop: start=0, step=1, limit=1
              $region49: #{net_forward.7} parent=47 // loop_pre_header
                _
              $region50: #{net_forward.7} parent=47 // loop_header
                %s267 = sphi 0, %s271
                %p268 = scmp.ge.s32.totalorder %s267, 1
                %s272 = sphi %s257, %s257
                %s273 = sphi %s252, %s252
              $region51: #{net_forward.7} parent=47 // loop_header_branch
                %270 = sbr.rel (%p268) target = $region55
              $region52: #{net_forward.7} parent=47 // loop_body
                %v274 = vld [vmem:[%s272] sm:%s265]
                %275 = vst [vmem:[%s273] sm:%s265] %v274
                %v276 = vld [vmem:[%s272 + $0x8] sm:%s265]
                %277 = vst [vmem:[%s273 + $0x4] sm:%s265] %v276
                %v278 = vld [vmem:[%s272 + $0x10] sm:%s265]
                %279 = vst [vmem:[%s273 + $0x8] sm:%s265] %v278
                %v280 = vld [vmem:[%s272 + $0x18] sm:%s265]
                %281 = vst [vmem:[%s273 + $0xc] sm:%s265] %v280
                %v282 = vld [vmem:[%s272 + $0x20] sm:%s265]
                %283 = vst [vmem:[%s273 + $0x10] sm:%s265] %v282
                %v284 = vld [vmem:[%s272 + $0x28] sm:%s265]
                %285 = vst [vmem:[%s273 + $0x14] sm:%s265] %v284
                %v286 = vld [vmem:[%s272 + $0x30] sm:%s265]
                %287 = vst [vmem:[%s273 + $0x18] sm:%s265] %v286
                %v288 = vld [vmem:[%s272 + $0x38] sm:%s265]
                %289 = vst [vmem:[%s273 + $0x1c] sm:%s265] %v288
                %v290 = vld [vmem:[%s272 + $0x40] sm:%s265]
                %291 = vst [vmem:[%s273 + $0x20] sm:%s265] %v290
                %v292 = vld [vmem:[%s272 + $0x48] sm:%s265]
                %293 = vst [vmem:[%s273 + $0x24] sm:%s265] %v292
                %v294 = vld [vmem:[%s272 + $0x50] sm:%s265]
                %295 = vst [vmem:[%s273 + $0x28] sm:%s265] %v294
                %v296 = vld [vmem:[%s272 + $0x58] sm:%s265]
                %297 = vst [vmem:[%s273 + $0x2c] sm:%s265] %v296
                %v298 = vld [vmem:[%s272 + $0x60] sm:%s265]
                %299 = vst [vmem:[%s273 + $0x30] sm:%s265] %v298
                %v300 = vld [vmem:[%s272 + $0x68] sm:%s265]
                %301 = vst [vmem:[%s273 + $0x34] sm:%s265] %v300
                %v302 = vld [vmem:[%s272 + $0x70] sm:%s265]
                %303 = vst [vmem:[%s273 + $0x38] sm:%s265] %v302
                %v304 = vld [vmem:[%s272 + $0x78] sm:%s265]
                %305 = vst [vmem:[%s273 + $0x3c] sm:%s265] %v304
              $region53: #{net_forward.7} parent=47 // loop_footer
                %s271 = sadd.s32 1, %s267
              $region54: #{net_forward.7} parent=47 // loop_footer_branch
                %266 = sbr.rel target = $region50
              $region55: #{net_forward.7} parent=47 // loop_exit
                _
            $region48: #{net_forward.7} parent=39 // pred_fallthru
              _
          $region40: #{net_forward.7} parent=35 // pred_fallthru
            _
          %358 = vnop
        $region36: #{net_forward.7} parent=31 // pred_fallthru
          _
        // Predicated region
        $region74: #{net_forward.7} parent=31 // pred_check
          %p359 = pneg %p73
        $region75: #{net_forward.7} parent=31 // pred_check_branch
          %361 = sbr.rel (%p359) target = $region77
        $region76: #{net_forward.7} parent=31 // pred_region
          %s362 = smul.u32 16, %s21
          %p363 = scmp.lt.s32.totalorder %s362, 31
          %s364 = scalar_select %p363, %s362, 31
          %s365 = smul.addr %s364, 8
          %s366 = scalar_lea.vmem %s1, %s365
          %s367 = smul.u32 16, %s21
        $region77: #{net_forward.7} parent=31 // pred_fallthru
          _
        // Predicated region
        $region78: #{net_forward.7} parent=31 // pred_check
          %p368 = pneg %p99
        $region79: #{net_forward.7} parent=31 // pred_check_branch
          %370 = sbr.rel (%p368) target = $region81
        $region80: #{net_forward.7} parent=31 // pred_region
          %s371 = smul.u32 16, %s20
          %p372 = scmp.lt.s32.totalorder %s371, 31
          %s373 = scalar_select %p372, %s371, 31
          %s374 = smul.addr %s373, 8
          %s375 = scalar_lea.vmem %s2, %s374
          %s376 = smul.u32 16, %s20
        $region81: #{net_forward.7} parent=31 // pred_fallthru
          _
      $region32: #{net_forward.7} parent=5 // pred_fallthru
        _
      %p377 = scmp.le.s32.totalorder 1, %s13
      %p378 = scmp.lt.s32.totalorder %s13, 5
      %p379 = pnand %p377, %p378
      %p380 = pneg %p379
      // Predicated region
      $region82: #{net_forward.7} parent=5 // pred_check
        _
      $region83: #{net_forward.7} parent=5 // pred_check_branch
        %382 = sbr.rel (%p379) target = $region85
      $region84: #{net_forward.7} parent=5 // pred_region
        %s383 = ssub.s32 %s13, 1
        %s384 = sand.u32 %s40, 1
        %s385 = sand.u32 %s40, 1
        %s386 = smul.addr %s385, 64
        %s387 = scalar_lea.vmem [#allocation3], %s386
        // Predicated region
        $region86: #{net_forward.7} parent=84 // pred_check
          %p388 = pneg %p53
        $region87: #{net_forward.7} parent=84 // pred_check_branch
          %390 = sbr.rel (%p388) target = $region89
        $region88: #{net_forward.7} parent=84 // pred_region
          _
        $region89: #{net_forward.7} parent=84 // pred_fallthru
          _
        %s391 = sand.u32 %s40, 1
        %s392 = sand.u32 %s40, 1
        %s393 = smul.addr %s392, 64
        %s394 = scalar_lea.vmem [#allocation3], %s393
        %p395 = pneg %p53
        %p396 = pneg %p50
        %s397 = smul.u32 16, %s23
        %p398 = scmp.lt.s32.totalorder %s397, 31
        %s399 = scalar_select %p398, %s397, 31
        %s400 = smul.addr %s399, 8
        %s401 = scalar_lea.vmem %s1, %s400
        %p402 = pneg %p79
        %p403 = pneg %p76
        %s404 = smul.u32 16, %s22
        %p405 = scmp.lt.s32.totalorder %s404, 31
        %s406 = scalar_select %p405, %s404, 31
        %s407 = smul.addr %s406, 8
        %s408 = scalar_lea.vmem %s2, %s407
        %p409 = pneg %p105
        %p410 = pneg %p102
        %p411 = pneg %p126
        %p412 = pneg %p123
        %p413 = pneg %p147
        %p414 = pneg %p144
        %p415 = pneg %p168
        %p416 = pneg %p165
        %p417 = pneg %p189
        %p418 = pneg %p186
        %p419 = pneg %p215
        %p420 = pneg %p212
        %s421 = smul.u32 16, %s22
        %p422 = scmp.lt.s32.totalorder %s421, 31
        %s423 = scalar_select %p422, %s421, 31
        %s424 = smul.addr %s423, 8
        %s425 = scalar_lea.vmem %s7, %s424
        %s426 = smul.u32 16, %s22
        %s427 = smul.u32 16, %s23
        %p428 = scmp.lt.s32.totalorder %s427, 31
        %s429 = scalar_select %p428, %s427, 31
        %s430 = smul.addr %s429, 8
        %s431 = scalar_lea.vmem %s1, %s430
        %s432 = smul.u32 16, %s23
        %s433 = smul.u32 16, %s22
        %p434 = scmp.lt.s32.totalorder %s433, 31
        %s435 = scalar_select %p434, %s433, 31
        %s436 = smul.addr %s435, 8
        %s437 = scalar_lea.vmem %s2, %s436
        %s438 = smul.u32 16, %s22
        %s439 = smul.u32 16, %s22
        %p440 = scmp.lt.s32.totalorder %s439, 31
        %s441 = scalar_select %p440, %s439, 31
        %s442 = smul.addr %s441, 8
        %s443 = scalar_lea.vmem %s7, %s442
        %s444 = smul.u32 16, %s22
        %p445 = scmp.eq.s32.totalorder %s23, 0
        // Predicated region
        $region90: #{net_forward.7} parent=84 // pred_check
          %p446 = pneg %p445
        $region91: #{net_forward.7} parent=84 // pred_check_branch
          %448 = sbr.rel (%p446) target = $region93
        $region92: #{net_forward.7} parent=84 // pred_region
          %449 = vst [vmem:[#allocation2] sm:$0xff] 0.0
          %450 = vst [vmem:[#allocation2 + $0x8] sm:$0xff] 0.0
          %451 = vst [vmem:[#allocation2 + $0x10] sm:$0xff] 0.0
          %452 = vst [vmem:[#allocation2 + $0x18] sm:$0xff] 0.0
          %453 = vst [vmem:[#allocation2 + $0x20] sm:$0xff] 0.0
          %454 = vst [vmem:[#allocation2 + $0x28] sm:$0xff] 0.0
          %455 = vst [vmem:[#allocation2 + $0x30] sm:$0xff] 0.0
          %456 = vst [vmem:[#allocation2 + $0x38] sm:$0xff] 0.0
          %457 = vst [vmem:[#allocation2 + $0x40] sm:$0xff] 0.0
          %458 = vst [vmem:[#allocation2 + $0x48] sm:$0xff] 0.0
          %459 = vst [vmem:[#allocation2 + $0x50] sm:$0xff] 0.0
          %460 = vst [vmem:[#allocation2 + $0x58] sm:$0xff] 0.0
          %461 = vst [vmem:[#allocation2 + $0x60] sm:$0xff] 0.0
          %462 = vst [vmem:[#allocation2 + $0x68] sm:$0xff] 0.0
          %463 = vst [vmem:[#allocation2 + $0x70] sm:$0xff] 0.0
          %464 = vst [vmem:[#allocation2 + $0x78] sm:$0xff] 0.0
        $region93: #{net_forward.7} parent=84 // pred_fallthru
          _
        %v465 = vld [vmem:[%s431] sm:$0xff]
        %v466 = vld [vmem:[%s431 + $0x8] sm:$0xff]
        %v467 = vld [vmem:[%s431 + $0x10] sm:$0xff]
        %v468 = vld [vmem:[%s431 + $0x18] sm:$0xff]
        %v469 = vld [vmem:[%s431 + $0x20] sm:$0xff]
        %v470 = vld [vmem:[%s431 + $0x28] sm:$0xff]
        %v471 = vld [vmem:[%s431 + $0x30] sm:$0xff]
        %v472 = vld [vmem:[%s431 + $0x38] sm:$0xff]
        %v473 = vld [vmem:[%s431 + $0x40] sm:$0xff]
        %v474 = vld [vmem:[%s431 + $0x48] sm:$0xff]
        %v475 = vld [vmem:[%s431 + $0x50] sm:$0xff]
        %v476 = vld [vmem:[%s431 + $0x58] sm:$0xff]
        %v477 = vld [vmem:[%s431 + $0x60] sm:$0xff]
        %v478 = vld [vmem:[%s431 + $0x68] sm:$0xff]
        %v479 = vld [vmem:[%s431 + $0x70] sm:$0xff]
        %v480 = vld [vmem:[%s431 + $0x78] sm:$0xff]
        %v481 = vld [vmem:[%s3] sm:$0xff]
        %v482 = vld [vmem:[%s3 + $0x8] sm:$0xff]
        %v483 = vld [vmem:[%s3 + $0x10] sm:$0xff]
        %v484 = vld [vmem:[%s3 + $0x18] sm:$0xff]
        %v485 = vld [vmem:[%s3 + $0x20] sm:$0xff]
        %v486 = vld [vmem:[%s3 + $0x28] sm:$0xff]
        %v487 = vld [vmem:[%s3 + $0x30] sm:$0xff]
        %v488 = vld [vmem:[%s3 + $0x38] sm:$0xff]
        %v489 = vld [vmem:[%s3 + $0x40] sm:$0xff]
        %v490 = vld [vmem:[%s3 + $0x48] sm:$0xff]
        %v491 = vld [vmem:[%s3 + $0x50] sm:$0xff]
        %v492 = vld [vmem:[%s3 + $0x58] sm:$0xff]
        %v493 = vld [vmem:[%s3 + $0x60] sm:$0xff]
        %v494 = vld [vmem:[%s3 + $0x68] sm:$0xff]
        %v495 = vld [vmem:[%s3 + $0x70] sm:$0xff]
        %v496 = vld [vmem:[%s3 + $0x78] sm:$0xff]
        %497 = vmatpush.msra.mxu0 %v496
        %498 = vmatpush.msra.mxu0 %v495
        %499 = vmatpush.msra.mxu0 %v494
        %500 = vmatpush.msra.mxu0 %v493
        %501 = vmatpush.msra.mxu0 %v492
        %502 = vmatpush.msra.mxu0 %v491
        %503 = vmatpush.msra.mxu0 %v490
        %504 = vmatpush.msra.mxu0 %v489
        %505 = vmatpush.msra.mxu0 %v488
        %506 = vmatpush.msra.mxu0 %v487
        %507 = vmatpush.msra.mxu0 %v486
        %508 = vmatpush.msra.mxu0 %v485
        %509 = vmatpush.msra.mxu0 %v484
        %510 = vmatpush.msra.mxu0 %v483
        %511 = vmatpush.msra.mxu0 %v482
        %512 = vmatpush.msra.mxu0 %v481
        %513 = vmatmul.f32.gmra.mxu0 %v465
        %v514 = vpop.f32.mrf.mxu0
        %v515 = vadd.f32 0.0, %v514
        %516 = vmatmul.f32.gmra.mxu0 %v466
        %v517 = vpop.f32.mrf.mxu0
        %v518 = vadd.f32 0.0, %v517
        %519 = vmatmul.f32.gmra.mxu0 %v467
        %v520 = vpop.f32.mrf.mxu0
        %v521 = vadd.f32 0.0, %v520
        %522 = vmatmul.f32.gmra.mxu0 %v468
        %v523 = vpop.f32.mrf.mxu0
        %v524 = vadd.f32 0.0, %v523
        %525 = vmatmul.f32.gmra.mxu0 %v469
        %v526 = vpop.f32.mrf.mxu0
        %v527 = vadd.f32 0.0, %v526
        %528 = vmatmul.f32.gmra.mxu0 %v470
        %v529 = vpop.f32.mrf.mxu0
        %v530 = vadd.f32 0.0, %v529
        %531 = vmatmul.f32.gmra.mxu0 %v471
        %v532 = vpop.f32.mrf.mxu0
        %v533 = vadd.f32 0.0, %v532
        %534 = vmatmul.f32.gmra.mxu0 %v472
        %v535 = vpop.f32.mrf.mxu0
        %v536 = vadd.f32 0.0, %v535
        %537 = vmatmul.f32.gmra.mxu0 %v473
        %v538 = vpop.f32.mrf.mxu0
        %v539 = vadd.f32 0.0, %v538
        %540 = vmatmul.f32.gmra.mxu0 %v474
        %v541 = vpop.f32.mrf.mxu0
        %v542 = vadd.f32 0.0, %v541
        %543 = vmatmul.f32.gmra.mxu0 %v475
        %v544 = vpop.f32.mrf.mxu0
        %v545 = vadd.f32 0.0, %v544
        %546 = vmatmul.f32.gmra.mxu0 %v476
        %v547 = vpop.f32.mrf.mxu0
        %v548 = vadd.f32 0.0, %v547
        %549 = vmatmul.f32.gmra.mxu0 %v477
        %v550 = vpop.f32.mrf.mxu0
        %v551 = vadd.f32 0.0, %v550
        %552 = vmatmul.f32.gmra.mxu0 %v478
        %v553 = vpop.f32.mrf.mxu0
        %v554 = vadd.f32 0.0, %v553
        %555 = vmatmul.f32.gmra.mxu0 %v479
        %v556 = vpop.f32.mrf.mxu0
        %v557 = vadd.f32 0.0, %v556
        %558 = vmatmul.f32.gmra.mxu0 %v480
        %v559 = vpop.f32.mrf.mxu0
        %v560 = vadd.f32 0.0, %v559
        %561 = vdwg.mxu0
        %v562 = vld [vmem:[#allocation2] sm:$0xff]
        %v563 = vld [vmem:[#allocation2 + $0x8] sm:$0xff]
        %v564 = vld [vmem:[#allocation2 + $0x10] sm:$0xff]
        %v565 = vld [vmem:[#allocation2 + $0x18] sm:$0xff]
        %v566 = vld [vmem:[#allocation2 + $0x20] sm:$0xff]
        %v567 = vld [vmem:[#allocation2 + $0x28] sm:$0xff]
        %v568 = vld [vmem:[#allocation2 + $0x30] sm:$0xff]
        %v569 = vld [vmem:[#allocation2 + $0x38] sm:$0xff]
        %v570 = vld [vmem:[#allocation2 + $0x40] sm:$0xff]
        %v571 = vld [vmem:[#allocation2 + $0x48] sm:$0xff]
        %v572 = vld [vmem:[#allocation2 + $0x50] sm:$0xff]
        %v573 = vld [vmem:[#allocation2 + $0x58] sm:$0xff]
        %v574 = vld [vmem:[#allocation2 + $0x60] sm:$0xff]
        %v575 = vld [vmem:[#allocation2 + $0x68] sm:$0xff]
        %v576 = vld [vmem:[#allocation2 + $0x70] sm:$0xff]
        %v577 = vld [vmem:[#allocation2 + $0x78] sm:$0xff]
        %v578 = vld [vmem:[%s387] sm:$0xf]
        %v579 = vld [vmem:[%s387 + $0x4] sm:$0xf]
        %v580 = vld [vmem:[%s387 + $0x8] sm:$0xf]
        %v581 = vld [vmem:[%s387 + $0xc] sm:$0xf]
        %v582 = vld [vmem:[%s387 + $0x10] sm:$0xf]
        %v583 = vld [vmem:[%s387 + $0x14] sm:$0xf]
        %v584 = vld [vmem:[%s387 + $0x18] sm:$0xf]
        %v585 = vld [vmem:[%s387 + $0x1c] sm:$0xf]
        %v586 = vld [vmem:[%s387 + $0x20] sm:$0xf]
        %v587 = vld [vmem:[%s387 + $0x24] sm:$0xf]
        %v588 = vld [vmem:[%s387 + $0x28] sm:$0xf]
        %v589 = vld [vmem:[%s387 + $0x2c] sm:$0xf]
        %v590 = vld [vmem:[%s387 + $0x30] sm:$0xf]
        %v591 = vld [vmem:[%s387 + $0x34] sm:$0xf]
        %v592 = vld [vmem:[%s387 + $0x38] sm:$0xf]
        %v593 = vld [vmem:[%s387 + $0x3c] sm:$0xf]
        %v594 = vpack.c.bf16 %v518, %v515
        %v595 = vpack.c.bf16 %v524, %v521
        %v596 = vpack.c.bf16 %v530, %v527
        %v597 = vpack.c.bf16 %v536, %v533
        %v598 = vpack.c.bf16 %v542, %v539
        %v599 = vpack.c.bf16 %v548, %v545
        %v600 = vpack.c.bf16 %v554, %v551
        %v601 = vpack.c.bf16 %v560, %v557
        %v618 = vunpack.c.l.b16 %v578
        %v619 = vunpack.c.l.b16 %v579
        %v620 = vunpack.c.l.b16 %v580
        %v621 = vunpack.c.l.b16 %v581
        %v622 = vunpack.c.l.b16 %v582
        %v623 = vunpack.c.l.b16 %v583
        %v624 = vunpack.c.l.b16 %v584
        %v625 = vunpack.c.l.b16 %v585
        %v626 = vunpack.c.l.b16 %v586
        %v627 = vunpack.c.l.b16 %v587
        %v628 = vunpack.c.l.b16 %v588
        %v629 = vunpack.c.l.b16 %v589
        %v630 = vunpack.c.l.b16 %v590
        %v631 = vunpack.c.l.b16 %v591
        %v632 = vunpack.c.l.b16 %v592
        %v633 = vunpack.c.l.b16 %v593
        %v634 = vpack.c.b16 %v619, %v618
        %v635 = vpack.c.b16 %v621, %v620
        %v636 = vpack.c.b16 %v623, %v622
        %v637 = vpack.c.b16 %v625, %v624
        %v638 = vpack.c.b16 %v627, %v626
        %v639 = vpack.c.b16 %v629, %v628
        %v640 = vpack.c.b16 %v631, %v630
        %v641 = vpack.c.b16 %v633, %v632
        %650 = vmatpush.bf16.msra.mxu0 %v601
        %651 = vmatpush.bf16.msra.mxu0 %v600
        %652 = vmatpush.bf16.msra.mxu0 %v599
        %653 = vmatpush.bf16.msra.mxu0 %v598
        %654 = vmatpush.bf16.msra.mxu0 %v597
        %655 = vmatpush.bf16.msra.mxu0 %v596
        %656 = vmatpush.bf16.msra.mxu0 %v595
        %657 = vmatpush.bf16.msra.mxu0 %v594
        %658 = vmatmul.bf16.gmra.mxu0 %v634
        %v659 = vpop.f32.mrf.mxu0
        %v660 = vadd.f32 0.0, %v659
        %v661 = vpop.f32.mrf.mxu0
        %v662 = vadd.f32 0.0, %v661
        %663 = vmatmul.bf16.gmra.mxu0 %v635
        %v664 = vpop.f32.mrf.mxu0
        %v665 = vadd.f32 0.0, %v664
        %v666 = vpop.f32.mrf.mxu0
        %v667 = vadd.f32 0.0, %v666
        %668 = vmatmul.bf16.gmra.mxu0 %v636
        %v669 = vpop.f32.mrf.mxu0
        %v670 = vadd.f32 0.0, %v669
        %v671 = vpop.f32.mrf.mxu0
        %v672 = vadd.f32 0.0, %v671
        %673 = vmatmul.bf16.gmra.mxu0 %v637
        %v674 = vpop.f32.mrf.mxu0
        %v675 = vadd.f32 0.0, %v674
        %v676 = vpop.f32.mrf.mxu0
        %v677 = vadd.f32 0.0, %v676
        %678 = vmatmul.bf16.gmra.mxu0 %v638
        %v679 = vpop.f32.mrf.mxu0
        %v680 = vadd.f32 0.0, %v679
        %v681 = vpop.f32.mrf.mxu0
        %v682 = vadd.f32 0.0, %v681
        %683 = vmatmul.bf16.gmra.mxu0 %v639
        %v684 = vpop.f32.mrf.mxu0
        %v685 = vadd.f32 0.0, %v684
        %v686 = vpop.f32.mrf.mxu0
        %v687 = vadd.f32 0.0, %v686
        %688 = vmatmul.bf16.gmra.mxu0 %v640
        %v689 = vpop.f32.mrf.mxu0
        %v690 = vadd.f32 0.0, %v689
        %v691 = vpop.f32.mrf.mxu0
        %v692 = vadd.f32 0.0, %v691
        %693 = vmatmul.bf16.gmra.mxu0 %v641
        %v694 = vpop.f32.mrf.mxu0
        %v695 = vadd.f32 0.0, %v694
        %v696 = vpop.f32.mrf.mxu0
        %v697 = vadd.f32 0.0, %v696
        %698 = vdwg.mxu0
        %v699 = vadd.f32 %v562, %v660
        %v700 = vadd.f32 %v563, %v662
        %v701 = vadd.f32 %v564, %v665
        %v702 = vadd.f32 %v565, %v667
        %v703 = vadd.f32 %v566, %v670
        %v704 = vadd.f32 %v567, %v672
        %v705 = vadd.f32 %v568, %v675
        %v706 = vadd.f32 %v569, %v677
        %v707 = vadd.f32 %v570, %v680
        %v708 = vadd.f32 %v571, %v682
        %v709 = vadd.f32 %v572, %v685
        %v710 = vadd.f32 %v573, %v687
        %v711 = vadd.f32 %v574, %v690
        %v712 = vadd.f32 %v575, %v692
        %v713 = vadd.f32 %v576, %v695
        %v714 = vadd.f32 %v577, %v697
        %715 = vst [vmem:[#allocation2] sm:$0xff] %v699
        %716 = vst [vmem:[#allocation2 + $0x8] sm:$0xff] %v700
        %717 = vst [vmem:[#allocation2 + $0x10] sm:$0xff] %v701
        %718 = vst [vmem:[#allocation2 + $0x18] sm:$0xff] %v702
        %719 = vst [vmem:[#allocation2 + $0x20] sm:$0xff] %v703
        %720 = vst [vmem:[#allocation2 + $0x28] sm:$0xff] %v704
        %721 = vst [vmem:[#allocation2 + $0x30] sm:$0xff] %v705
        %722 = vst [vmem:[#allocation2 + $0x38] sm:$0xff] %v706
        %723 = vst [vmem:[#allocation2 + $0x40] sm:$0xff] %v707
        %724 = vst [vmem:[#allocation2 + $0x48] sm:$0xff] %v708
        %725 = vst [vmem:[#allocation2 + $0x50] sm:$0xff] %v709
        %726 = vst [vmem:[#allocation2 + $0x58] sm:$0xff] %v710
        %727 = vst [vmem:[#allocation2 + $0x60] sm:$0xff] %v711
        %728 = vst [vmem:[#allocation2 + $0x68] sm:$0xff] %v712
        %729 = vst [vmem:[#allocation2 + $0x70] sm:$0xff] %v713
        %730 = vst [vmem:[#allocation2 + $0x78] sm:$0xff] %v714
        %p731 = scmp.eq.s32.totalorder %s23, 1
        // Predicated region
        $region94: #{net_forward.7} parent=84 // pred_check
          %p732 = pneg %p731
        $region95: #{net_forward.7} parent=84 // pred_check_branch
          %734 = sbr.rel (%p732) target = $region97
        $region96: #{net_forward.7} parent=84 // pred_region
          %v735 = vld [vmem:[%s437] sm:$0xff]
          %v736 = vld [vmem:[%s437 + $0x8] sm:$0xff]
          %v737 = vld [vmem:[%s437 + $0x10] sm:$0xff]
          %v738 = vld [vmem:[%s437 + $0x18] sm:$0xff]
          %v739 = vld [vmem:[%s437 + $0x20] sm:$0xff]
          %v740 = vld [vmem:[%s437 + $0x28] sm:$0xff]
          %v741 = vld [vmem:[%s437 + $0x30] sm:$0xff]
          %v742 = vld [vmem:[%s437 + $0x38] sm:$0xff]
          %v743 = vld [vmem:[%s437 + $0x40] sm:$0xff]
          %v744 = vld [vmem:[%s437 + $0x48] sm:$0xff]
          %v745 = vld [vmem:[%s437 + $0x50] sm:$0xff]
          %v746 = vld [vmem:[%s437 + $0x58] sm:$0xff]
          %v747 = vld [vmem:[%s437 + $0x60] sm:$0xff]
          %v748 = vld [vmem:[%s437 + $0x68] sm:$0xff]
          %v749 = vld [vmem:[%s437 + $0x70] sm:$0xff]
          %v750 = vld [vmem:[%s437 + $0x78] sm:$0xff]
          %v751 = vld [vmem:[%s4] sm:$0xff]
          %v752 = vld [vmem:[%s4 + $0x8] sm:$0xff]
          %v753 = vld [vmem:[%s4 + $0x10] sm:$0xff]
          %v754 = vld [vmem:[%s4 + $0x18] sm:$0xff]
          %v755 = vld [vmem:[%s4 + $0x20] sm:$0xff]
          %v756 = vld [vmem:[%s4 + $0x28] sm:$0xff]
          %v757 = vld [vmem:[%s4 + $0x30] sm:$0xff]
          %v758 = vld [vmem:[%s4 + $0x38] sm:$0xff]
          %v759 = vld [vmem:[%s4 + $0x40] sm:$0xff]
          %v760 = vld [vmem:[%s4 + $0x48] sm:$0xff]
          %v761 = vld [vmem:[%s4 + $0x50] sm:$0xff]
          %v762 = vld [vmem:[%s4 + $0x58] sm:$0xff]
          %v763 = vld [vmem:[%s4 + $0x60] sm:$0xff]
          %v764 = vld [vmem:[%s4 + $0x68] sm:$0xff]
          %v765 = vld [vmem:[%s4 + $0x70] sm:$0xff]
          %v766 = vld [vmem:[%s4 + $0x78] sm:$0xff]
          %v767 = vld [vmem:[%s5] sm:$0x1]
          %v769 = vperm.slane %v767, 0
          %771 = vmatpush.msra.mxu0 %v766
          %772 = vmatpush.msra.mxu0 %v765
          %773 = vmatpush.msra.mxu0 %v764
          %774 = vmatpush.msra.mxu0 %v763
          %775 = vmatpush.msra.mxu0 %v762
          %776 = vmatpush.msra.mxu0 %v761
          %777 = vmatpush.msra.mxu0 %v760
          %778 = vmatpush.msra.mxu0 %v759
          %779 = vmatpush.msra.mxu0 %v758
          %780 = vmatpush.msra.mxu0 %v757
          %781 = vmatpush.msra.mxu0 %v756
          %782 = vmatpush.msra.mxu0 %v755
          %783 = vmatpush.msra.mxu0 %v754
          %784 = vmatpush.msra.mxu0 %v753
          %785 = vmatpush.msra.mxu0 %v752
          %786 = vmatpush.msra.mxu0 %v751
          %787 = vmatmul.f32.gmra.mxu0 %v735
          %v788 = vpop.f32.mrf.mxu0
          %v789 = vadd.f32 %v769, %v788
          %790 = vmatmul.f32.gmra.mxu0 %v736
          %v791 = vpop.f32.mrf.mxu0
          %v792 = vadd.f32 %v769, %v791
          %793 = vmatmul.f32.gmra.mxu0 %v737
          %v794 = vpop.f32.mrf.mxu0
          %v795 = vadd.f32 %v769, %v794
          %796 = vmatmul.f32.gmra.mxu0 %v738
          %v797 = vpop.f32.mrf.mxu0
          %v798 = vadd.f32 %v769, %v797
          %799 = vmatmul.f32.gmra.mxu0 %v739
          %v800 = vpop.f32.mrf.mxu0
          %v801 = vadd.f32 %v769, %v800
          %802 = vmatmul.f32.gmra.mxu0 %v740
          %v803 = vpop.f32.mrf.mxu0
          %v804 = vadd.f32 %v769, %v803
          %805 = vmatmul.f32.gmra.mxu0 %v741
          %v806 = vpop.f32.mrf.mxu0
          %v807 = vadd.f32 %v769, %v806
          %808 = vmatmul.f32.gmra.mxu0 %v742
          %v809 = vpop.f32.mrf.mxu0
          %v810 = vadd.f32 %v769, %v809
          %811 = vmatmul.f32.gmra.mxu0 %v743
          %v812 = vpop.f32.mrf.mxu0
          %v813 = vadd.f32 %v769, %v812
          %814 = vmatmul.f32.gmra.mxu0 %v744
          %v815 = vpop.f32.mrf.mxu0
          %v816 = vadd.f32 %v769, %v815
          %817 = vmatmul.f32.gmra.mxu0 %v745
          %v818 = vpop.f32.mrf.mxu0
          %v819 = vadd.f32 %v769, %v818
          %820 = vmatmul.f32.gmra.mxu0 %v746
          %v821 = vpop.f32.mrf.mxu0
          %v822 = vadd.f32 %v769, %v821
          %823 = vmatmul.f32.gmra.mxu0 %v747
          %v824 = vpop.f32.mrf.mxu0
          %v825 = vadd.f32 %v769, %v824
          %826 = vmatmul.f32.gmra.mxu0 %v748
          %v827 = vpop.f32.mrf.mxu0
          %v828 = vadd.f32 %v769, %v827
          %829 = vmatmul.f32.gmra.mxu0 %v749
          %v830 = vpop.f32.mrf.mxu0
          %v831 = vadd.f32 %v769, %v830
          %832 = vmatmul.f32.gmra.mxu0 %v750
          %v833 = vpop.f32.mrf.mxu0
          %v834 = vadd.f32 %v769, %v833
          %835 = vdwg.mxu0
          %v836 = vld [vmem:[#allocation2] sm:$0xff]
          %v837 = vld [vmem:[#allocation2 + $0x8] sm:$0xff]
          %v838 = vld [vmem:[#allocation2 + $0x10] sm:$0xff]
          %v839 = vld [vmem:[#allocation2 + $0x18] sm:$0xff]
          %v840 = vld [vmem:[#allocation2 + $0x20] sm:$0xff]
          %v841 = vld [vmem:[#allocation2 + $0x28] sm:$0xff]
          %v842 = vld [vmem:[#allocation2 + $0x30] sm:$0xff]
          %v843 = vld [vmem:[#allocation2 + $0x38] sm:$0xff]
          %v844 = vld [vmem:[#allocation2 + $0x40] sm:$0xff]
          %v845 = vld [vmem:[#allocation2 + $0x48] sm:$0xff]
          %v846 = vld [vmem:[#allocation2 + $0x50] sm:$0xff]
          %v847 = vld [vmem:[#allocation2 + $0x58] sm:$0xff]
          %v848 = vld [vmem:[#allocation2 + $0x60] sm:$0xff]
          %v849 = vld [vmem:[#allocation2 + $0x68] sm:$0xff]
          %v850 = vld [vmem:[#allocation2 + $0x70] sm:$0xff]
          %v851 = vld [vmem:[#allocation2 + $0x78] sm:$0xff]
          %v852 = vadd.f32 %v836, %v789
          %v853 = vadd.f32 %v837, %v792
          %v854 = vadd.f32 %v838, %v795
          %v855 = vadd.f32 %v839, %v798
          %v856 = vadd.f32 %v840, %v801
          %v857 = vadd.f32 %v841, %v804
          %v858 = vadd.f32 %v842, %v807
          %v859 = vadd.f32 %v843, %v810
          %v860 = vadd.f32 %v844, %v813
          %v861 = vadd.f32 %v845, %v816
          %v862 = vadd.f32 %v846, %v819
          %v863 = vadd.f32 %v847, %v822
          %v864 = vadd.f32 %v848, %v825
          %v865 = vadd.f32 %v849, %v828
          %v866 = vadd.f32 %v850, %v831
          %v867 = vadd.f32 %v851, %v834
          %v868 = vld [vmem:[%s6] sm:$0xff]
          %v869 = vld [vmem:[%s6 + $0x8] sm:$0xff]
          %v870 = vld [vmem:[%s6 + $0x10] sm:$0xff]
          %v871 = vld [vmem:[%s6 + $0x18] sm:$0xff]
          %v872 = vld [vmem:[%s6 + $0x20] sm:$0xff]
          %v873 = vld [vmem:[%s6 + $0x28] sm:$0xff]
          %v874 = vld [vmem:[%s6 + $0x30] sm:$0xff]
          %v875 = vld [vmem:[%s6 + $0x38] sm:$0xff]
          %v876 = vld [vmem:[%s6 + $0x40] sm:$0xff]
          %v877 = vld [vmem:[%s6 + $0x48] sm:$0xff]
          %v878 = vld [vmem:[%s6 + $0x50] sm:$0xff]
          %v879 = vld [vmem:[%s6 + $0x58] sm:$0xff]
          %v880 = vld [vmem:[%s6 + $0x60] sm:$0xff]
          %v881 = vld [vmem:[%s6 + $0x68] sm:$0xff]
          %v882 = vld [vmem:[%s6 + $0x70] sm:$0xff]
          %v883 = vld [vmem:[%s6 + $0x78] sm:$0xff]
          %884 = vmatpush.msra.mxu0 %v883
          %885 = vmatpush.msra.mxu0 %v882
          %886 = vmatpush.msra.mxu0 %v881
          %887 = vmatpush.msra.mxu0 %v880
          %888 = vmatpush.msra.mxu0 %v879
          %889 = vmatpush.msra.mxu0 %v878
          %890 = vmatpush.msra.mxu0 %v877
          %891 = vmatpush.msra.mxu0 %v876
          %892 = vmatpush.msra.mxu0 %v875
          %893 = vmatpush.msra.mxu0 %v874
          %894 = vmatpush.msra.mxu0 %v873
          %895 = vmatpush.msra.mxu0 %v872
          %896 = vmatpush.msra.mxu0 %v871
          %897 = vmatpush.msra.mxu0 %v870
          %898 = vmatpush.msra.mxu0 %v869
          %899 = vmatpush.msra.mxu0 %v868
          %900 = vmatmul.f32.gmra.mxu0 %v852
          %v901 = vpop.f32.mrf.mxu0
          %v902 = vadd.f32 0.0, %v901
          %903 = vmatmul.f32.gmra.mxu0 %v853
          %v904 = vpop.f32.mrf.mxu0
          %v905 = vadd.f32 0.0, %v904
          %906 = vmatmul.f32.gmra.mxu0 %v854
          %v907 = vpop.f32.mrf.mxu0
          %v908 = vadd.f32 0.0, %v907
          %909 = vmatmul.f32.gmra.mxu0 %v855
          %v910 = vpop.f32.mrf.mxu0
          %v911 = vadd.f32 0.0, %v910
          %912 = vmatmul.f32.gmra.mxu0 %v856
          %v913 = vpop.f32.mrf.mxu0
          %v914 = vadd.f32 0.0, %v913
          %915 = vmatmul.f32.gmra.mxu0 %v857
          %v916 = vpop.f32.mrf.mxu0
          %v917 = vadd.f32 0.0, %v916
          %918 = vmatmul.f32.gmra.mxu0 %v858
          %v919 = vpop.f32.mrf.mxu0
          %v920 = vadd.f32 0.0, %v919
          %921 = vmatmul.f32.gmra.mxu0 %v859
          %v922 = vpop.f32.mrf.mxu0
          %v923 = vadd.f32 0.0, %v922
          %924 = vmatmul.f32.gmra.mxu0 %v860
          %v925 = vpop.f32.mrf.mxu0
          %v926 = vadd.f32 0.0, %v925
          %927 = vmatmul.f32.gmra.mxu0 %v861
          %v928 = vpop.f32.mrf.mxu0
          %v929 = vadd.f32 0.0, %v928
          %930 = vmatmul.f32.gmra.mxu0 %v862
          %v931 = vpop.f32.mrf.mxu0
          %v932 = vadd.f32 0.0, %v931
          %933 = vmatmul.f32.gmra.mxu0 %v863
          %v934 = vpop.f32.mrf.mxu0
          %v935 = vadd.f32 0.0, %v934
          %936 = vmatmul.f32.gmra.mxu0 %v864
          %v937 = vpop.f32.mrf.mxu0
          %v938 = vadd.f32 0.0, %v937
          %939 = vmatmul.f32.gmra.mxu0 %v865
          %v940 = vpop.f32.mrf.mxu0
          %v941 = vadd.f32 0.0, %v940
          %942 = vmatmul.f32.gmra.mxu0 %v866
          %v943 = vpop.f32.mrf.mxu0
          %v944 = vadd.f32 0.0, %v943
          %945 = vmatmul.f32.gmra.mxu0 %v867
          %v946 = vpop.f32.mrf.mxu0
          %v947 = vadd.f32 0.0, %v946
          %948 = vdwg.mxu0
          %v949 = vlaneseq
          %v950 = vand.u32 %v949, 127
          %vm951 = vcmp.lt.s32.totalorder %v950, 4
          %v952 = vsel %vm951, %v902, -inf
          %v953 = vsel %vm951, %v905, -inf
          %v954 = vsel %vm951, %v908, -inf
          %v955 = vsel %vm951, %v911, -inf
          %v956 = vsel %vm951, %v914, -inf
          %v957 = vsel %vm951, %v917, -inf
          %v958 = vsel %vm951, %v920, -inf
          %v959 = vsel %vm951, %v923, -inf
          %v960 = vsel %vm951, %v926, -inf
          %v961 = vsel %vm951, %v929, -inf
          %v962 = vsel %vm951, %v932, -inf
          %v963 = vsel %vm951, %v935, -inf
          %v964 = vsel %vm951, %v938, -inf
          %v965 = vsel %vm951, %v941, -inf
          %v966 = vsel %vm951, %v944, -inf
          %v967 = vsel %vm951, %v947, -inf
          %968 = vmax.xlane.f32.xlu0 %v952
          %v969 = vpop.xlane.xlu0 %968
          %970 = vmax.xlane.f32.xlu0 %v953
          %v971 = vpop.xlane.xlu0 %970
          %972 = vmax.xlane.f32.xlu0 %v954
          %v973 = vpop.xlane.xlu0 %972
          %974 = vmax.xlane.f32.xlu0 %v955
          %v975 = vpop.xlane.xlu0 %974
          %976 = vmax.xlane.f32.xlu0 %v956
          %v977 = vpop.xlane.xlu0 %976
          %978 = vmax.xlane.f32.xlu0 %v957
          %v979 = vpop.xlane.xlu0 %978
          %980 = vmax.xlane.f32.xlu0 %v958
          %v981 = vpop.xlane.xlu0 %980
          %982 = vmax.xlane.f32.xlu0 %v959
          %v983 = vpop.xlane.xlu0 %982
          %984 = vmax.xlane.f32.xlu0 %v960
          %v985 = vpop.xlane.xlu0 %984
          %986 = vmax.xlane.f32.xlu0 %v961
          %v987 = vpop.xlane.xlu0 %986
          %988 = vmax.xlane.f32.xlu0 %v962
          %v989 = vpop.xlane.xlu0 %988
          %990 = vmax.xlane.f32.xlu0 %v963
          %v991 = vpop.xlane.xlu0 %990
          %992 = vmax.xlane.f32.xlu0 %v964
          %v993 = vpop.xlane.xlu0 %992
          %994 = vmax.xlane.f32.xlu0 %v965
          %v995 = vpop.xlane.xlu0 %994
          %996 = vmax.xlane.f32.xlu0 %v966
          %v997 = vpop.xlane.xlu0 %996
          %998 = vmax.xlane.f32.xlu0 %v967
          %v999 = vpop.xlane.xlu0 %998
          %v1000 = vsub.f32 %v952, %v969
          %v1001 = vsub.f32 %v953, %v971
          %v1002 = vsub.f32 %v954, %v973
          %v1003 = vsub.f32 %v955, %v975
          %v1004 = vsub.f32 %v956, %v977
          %v1005 = vsub.f32 %v957, %v979
          %v1006 = vsub.f32 %v958, %v981
          %v1007 = vsub.f32 %v959, %v983
          %v1008 = vsub.f32 %v960, %v985
          %v1009 = vsub.f32 %v961, %v987
          %v1010 = vsub.f32 %v962, %v989
          %v1011 = vsub.f32 %v963, %v991
          %v1012 = vsub.f32 %v964, %v993
          %v1013 = vsub.f32 %v965, %v995
          %v1014 = vsub.f32 %v966, %v997
          %v1015 = vsub.f32 %v967, %v999
          %v1016 = vmul.f32 %v1000, 1.442695
          %v1017 = vpow.pop %v1016
          %v1018 = vmul.f32 %v1001, 1.442695
          %v1019 = vpow.pop %v1018
          %v1020 = vmul.f32 %v1002, 1.442695
          %v1021 = vpow.pop %v1020
          %v1022 = vmul.f32 %v1003, 1.442695
          %v1023 = vpow.pop %v1022
          %v1024 = vmul.f32 %v1004, 1.442695
          %v1025 = vpow.pop %v1024
          %v1026 = vmul.f32 %v1005, 1.442695
          %v1027 = vpow.pop %v1026
          %v1028 = vmul.f32 %v1006, 1.442695
          %v1029 = vpow.pop %v1028
          %v1030 = vmul.f32 %v1007, 1.442695
          %v1031 = vpow.pop %v1030
          %v1032 = vmul.f32 %v1008, 1.442695
          %v1033 = vpow.pop %v1032
          %v1034 = vmul.f32 %v1009, 1.442695
          %v1035 = vpow.pop %v1034
          %v1036 = vmul.f32 %v1010, 1.442695
          %v1037 = vpow.pop %v1036
          %v1038 = vmul.f32 %v1011, 1.442695
          %v1039 = vpow.pop %v1038
          %v1040 = vmul.f32 %v1012, 1.442695
          %v1041 = vpow.pop %v1040
          %v1042 = vmul.f32 %v1013, 1.442695
          %v1043 = vpow.pop %v1042
          %v1044 = vmul.f32 %v1014, 1.442695
          %v1045 = vpow.pop %v1044
          %v1046 = vmul.f32 %v1015, 1.442695
          %v1047 = vpow.pop %v1046
          %1048 = vadd.xlane.f32.xlu0 %v1017
          %v1049 = vpop.xlane.xlu0 %1048
          %1050 = vadd.xlane.f32.xlu0 %v1019
          %v1051 = vpop.xlane.xlu0 %1050
          %1052 = vadd.xlane.f32.xlu0 %v1021
          %v1053 = vpop.xlane.xlu0 %1052
          %1054 = vadd.xlane.f32.xlu0 %v1023
          %v1055 = vpop.xlane.xlu0 %1054
          %1056 = vadd.xlane.f32.xlu0 %v1025
          %v1057 = vpop.xlane.xlu0 %1056
          %1058 = vadd.xlane.f32.xlu0 %v1027
          %v1059 = vpop.xlane.xlu0 %1058
          %1060 = vadd.xlane.f32.xlu0 %v1029
          %v1061 = vpop.xlane.xlu0 %1060
          %1062 = vadd.xlane.f32.xlu0 %v1031
          %v1063 = vpop.xlane.xlu0 %1062
          %1064 = vadd.xlane.f32.xlu0 %v1033
          %v1065 = vpop.xlane.xlu0 %1064
          %1066 = vadd.xlane.f32.xlu0 %v1035
          %v1067 = vpop.xlane.xlu0 %1066
          %1068 = vadd.xlane.f32.xlu0 %v1037
          %v1069 = vpop.xlane.xlu0 %1068
          %1070 = vadd.xlane.f32.xlu0 %v1039
          %v1071 = vpop.xlane.xlu0 %1070
          %1072 = vadd.xlane.f32.xlu0 %v1041
          %v1073 = vpop.xlane.xlu0 %1072
          %1074 = vadd.xlane.f32.xlu0 %v1043
          %v1075 = vpop.xlane.xlu0 %1074
          %1076 = vadd.xlane.f32.xlu0 %v1045
          %v1077 = vpop.xlane.xlu0 %1076
          %1078 = vadd.xlane.f32.xlu0 %v1047
          %v1079 = vpop.xlane.xlu0 %1078
          %v1080 = vlog2.pop %v1049
          %v1081 = vmul.f32 %v1080, 0.6931472
          %v1082 = vlog2.pop %v1051
          %v1083 = vmul.f32 %v1082, 0.6931472
          %v1084 = vlog2.pop %v1053
          %v1085 = vmul.f32 %v1084, 0.6931472
          %v1086 = vlog2.pop %v1055
          %v1087 = vmul.f32 %v1086, 0.6931472
          %v1088 = vlog2.pop %v1057
          %v1089 = vmul.f32 %v1088, 0.6931472
          %v1090 = vlog2.pop %v1059
          %v1091 = vmul.f32 %v1090, 0.6931472
          %v1092 = vlog2.pop %v1061
          %v1093 = vmul.f32 %v1092, 0.6931472
          %v1094 = vlog2.pop %v1063
          %v1095 = vmul.f32 %v1094, 0.6931472
          %v1096 = vlog2.pop %v1065
          %v1097 = vmul.f32 %v1096, 0.6931472
          %v1098 = vlog2.pop %v1067
          %v1099 = vmul.f32 %v1098, 0.6931472
          %v1100 = vlog2.pop %v1069
          %v1101 = vmul.f32 %v1100, 0.6931472
          %v1102 = vlog2.pop %v1071
          %v1103 = vmul.f32 %v1102, 0.6931472
          %v1104 = vlog2.pop %v1073
          %v1105 = vmul.f32 %v1104, 0.6931472
          %v1106 = vlog2.pop %v1075
          %v1107 = vmul.f32 %v1106, 0.6931472
          %v1108 = vlog2.pop %v1077
          %v1109 = vmul.f32 %v1108, 0.6931472
          %v1110 = vlog2.pop %v1079
          %v1111 = vmul.f32 %v1110, 0.6931472
          %v1112 = vadd.f32 %v1081, %v969
          %v1113 = vadd.f32 %v1083, %v971
          %v1114 = vadd.f32 %v1085, %v973
          %v1115 = vadd.f32 %v1087, %v975
          %v1116 = vadd.f32 %v1089, %v977
          %v1117 = vadd.f32 %v1091, %v979
          %v1118 = vadd.f32 %v1093, %v981
          %v1119 = vadd.f32 %v1095, %v983
          %v1120 = vadd.f32 %v1097, %v985
          %v1121 = vadd.f32 %v1099, %v987
          %v1122 = vadd.f32 %v1101, %v989
          %v1123 = vadd.f32 %v1103, %v991
          %v1124 = vadd.f32 %v1105, %v993
          %v1125 = vadd.f32 %v1107, %v995
          %v1126 = vadd.f32 %v1109, %v997
          %v1127 = vadd.f32 %v1111, %v999
          %v1128 = vsub.f32 %v902, %v1112
          %v1129 = vsub.f32 %v905, %v1113
          %v1130 = vsub.f32 %v908, %v1114
          %v1131 = vsub.f32 %v911, %v1115
          %v1132 = vsub.f32 %v914, %v1116
          %v1133 = vsub.f32 %v917, %v1117
          %v1134 = vsub.f32 %v920, %v1118
          %v1135 = vsub.f32 %v923, %v1119
          %v1136 = vsub.f32 %v926, %v1120
          %v1137 = vsub.f32 %v929, %v1121
          %v1138 = vsub.f32 %v932, %v1122
          %v1139 = vsub.f32 %v935, %v1123
          %v1140 = vsub.f32 %v938, %v1124
          %v1141 = vsub.f32 %v941, %v1125
          %v1142 = vsub.f32 %v944, %v1126
          %v1143 = vsub.f32 %v947, %v1127
          %v1144 = vsel %vm951, %v1128, 0.0
          %v1145 = vsel %vm951, %v1129, 0.0
          %v1146 = vsel %vm951, %v1130, 0.0
          %v1147 = vsel %vm951, %v1131, 0.0
          %v1148 = vsel %vm951, %v1132, 0.0
          %v1149 = vsel %vm951, %v1133, 0.0
          %v1150 = vsel %vm951, %v1134, 0.0
          %v1151 = vsel %vm951, %v1135, 0.0
          %v1152 = vsel %vm951, %v1136, 0.0
          %v1153 = vsel %vm951, %v1137, 0.0
          %v1154 = vsel %vm951, %v1138, 0.0
          %v1155 = vsel %vm951, %v1139, 0.0
          %v1156 = vsel %vm951, %v1140, 0.0
          %v1157 = vsel %vm951, %v1141, 0.0
          %v1158 = vsel %vm951, %v1142, 0.0
          %v1159 = vsel %vm951, %v1143, 0.0
          %1160 = vst [vmem:[%s443] sm:$0xff] %v1144
          %1161 = vst [vmem:[%s443 + $0x8] sm:$0xff] %v1145
          %1162 = vst [vmem:[%s443 + $0x10] sm:$0xff] %v1146
          %1163 = vst [vmem:[%s443 + $0x18] sm:$0xff] %v1147
          %1164 = vst [vmem:[%s443 + $0x20] sm:$0xff] %v1148
          %1165 = vst [vmem:[%s443 + $0x28] sm:$0xff] %v1149
          %1166 = vst [vmem:[%s443 + $0x30] sm:$0xff] %v1150
          %1167 = vst [vmem:[%s443 + $0x38] sm:$0xff] %v1151
          %1168 = vst [vmem:[%s443 + $0x40] sm:$0xff] %v1152
          %1169 = vst [vmem:[%s443 + $0x48] sm:$0xff] %v1153
          %1170 = vst [vmem:[%s443 + $0x50] sm:$0xff] %v1154
          %1171 = vst [vmem:[%s443 + $0x58] sm:$0xff] %v1155
          %1172 = vst [vmem:[%s443 + $0x60] sm:$0xff] %v1156
          %1173 = vst [vmem:[%s443 + $0x68] sm:$0xff] %v1157
          %1174 = vst [vmem:[%s443 + $0x70] sm:$0xff] %v1158
          %1175 = vst [vmem:[%s443 + $0x78] sm:$0xff] %v1159
        $region97: #{net_forward.7} parent=84 // pred_fallthru
          _
        %s1176 = smul.u32 16, %s22
        %p1177 = scmp.lt.s32.totalorder %s1176, 31
        %s1178 = scalar_select %p1177, %s1176, 31
        %s1179 = smul.addr %s1178, 8
        %s1180 = scalar_lea.vmem %s7, %s1179
        // Predicated region
        $region98: #{net_forward.7} parent=84 // pred_check
          %p1181 = pneg %p212
        $region99: #{net_forward.7} parent=84 // pred_check_branch
          %1183 = sbr.rel (%p1181) target = $region101
        $region100: #{net_forward.7} parent=84 // pred_region
          %s1184 = smul.u32 16, %s22
        $region101: #{net_forward.7} parent=84 // pred_fallthru
          _
      $region85: #{net_forward.7} parent=5 // pred_fallthru
        _
      %p1185 = scmp.le.s32.totalorder 2, %s13
      // Predicated region
      $region102: #{net_forward.7} parent=5 // pred_check
        %p1186 = pneg %p1185
      $region103: #{net_forward.7} parent=5 // pred_check_branch
        %1188 = sbr.rel (%p1186) target = $region105
      $region104: #{net_forward.7} parent=5 // pred_region
        %s1189 = ssub.s32 %s13, 2
        // Predicated region
        $region106: #{net_forward.7} parent=104 // pred_check
          %p1190 = pneg %p218
        $region107: #{net_forward.7} parent=104 // pred_check_branch
          %1192 = sbr.rel (%p1190) target = $region109
        $region108: #{net_forward.7} parent=104 // pred_region
          %s1193 = smul.u32 16, %s24
          %p1194 = scmp.lt.s32.totalorder %s1193, 31
          %s1195 = scalar_select %p1194, %s1193, 31
          %s1196 = smul.addr %s1195, 8
          %s1197 = scalar_lea.vmem %s7, %s1196
        $region109: #{net_forward.7} parent=104 // pred_fallthru
          _
      $region105: #{net_forward.7} parent=5 // pred_fallthru
        _
    $region6: #{net_forward.7} parent=1 // loop_footer
      %s17 = sadd.s32 1, %s13
    $region7: #{net_forward.7} parent=1 // loop_footer_branch
      %12 = sbr.rel target = $region3
    $region8: #{net_forward.7} parent=1 // loop_exit
      _

</llo_original>
